<compile_context>
chip_gen: v5e
topology: v5e:2x2
jax: 0.10.0
libtpu: 0.0.40
codegen_flags: <defaults>
</compile_context>

<pallas_src>
import math

import jax
import jax.numpy as jnp
from jax import lax
from jax.experimental import pallas as pl
from jax.experimental.pallas import tpu as pltpu


# ----------------------------- Pallas kernel -----------------------------
def down_double_conv_kernel(x_ref, w1_ref, b1_ref, w2_ref, b2_ref, o_ref,
                            xpad_ref, ypad_ref):
    # x_ref   : (1, 2, H, Wo, Cin_p) bf16  -- pool W-pair on a leading dim
    # w1_ref  : (9, Cin_p, Cout_p)   bf16  -- tap-major (dy*3+dx) layout
    # b1_ref  : (1, Cout_p)          f32
    # w2_ref  : (9, Cout_p, Cout_p)  bf16
    # b2_ref  : (1, Cout_p)          f32
    # o_ref   : (1, Ho*Wo, Cout_p)   bf16  -- lane-dense (Cout_p % 128 == 0)
    # xpad_ref: (Ho+2, Wo+2, Cin_p)  bf16 scratch (zero-halo'd pooled input)
    # ypad_ref: (Ho+2, Wo+2, Cout_p) bf16 scratch (zero-halo'd conv1 output)
    ho = xpad_ref.shape[0] - 2
    wo = xpad_ref.shape[1] - 2
    hwo = ho * wo
    cin = xpad_ref.shape[2]
    cout = o_ref.shape[2]

    # Zero the halo scratch ONCE: the interior is fully rewritten every grid
    # step and only the 1-pixel border must stay zero, so no per-step
    # full-buffer store pass through the (narrow) vector-store slot.
    @pl.when(pl.program_id(0) == 0)
    def _init():
        xpad_ref[...] = jnp.zeros_like(xpad_ref)
        ypad_ref[...] = jnp.zeros_like(ypad_ref)

    # Fused MaxPool2d(2), all in bf16 (max is exact): max over the W-pair
    # (leading dim), then over the H-pair via a leading-dim reshape.
    wmax = jnp.maximum(x_ref[0, 0], x_ref[0, 1])                # (H, Wo, Cin)
    pooled = jnp.max(wmax.reshape(ho, 2, wo, cin), axis=1)      # (Ho, Wo, Cin)
    xpad_ref[1:ho + 1, 1:wo + 1, :] = pooled

    def conv3x3(pad_ref, w_ref, b_ref, c_in):
        # Implicit im2col: 9 accumulating MXU matmuls (K = c_in per tap); no
        # materialized (Ho*Wo, 9*C) col buffer, no 9x activation replication.
        acc = jnp.zeros((hwo, cout), jnp.float32)
        for t in range(9):
            dy, dx = divmod(t, 3)
            patch = pad_ref[dy:dy + ho, dx:dx + wo, :].reshape(hwo, c_in)
            acc = acc + jnp.dot(patch, w_ref[t],
                                preferred_element_type=jnp.float32)
        return jnp.maximum(acc + b_ref[...], 0.0)               # bias + ReLU (f32)

    # conv1 -> ReLU; intermediate stays in VMEM (bf16), no HBM round trip.
    y1 = conv3x3(xpad_ref, w1_ref, b1_ref, cin)
    ypad_ref[1:ho + 1, 1:wo + 1, :] = (
        y1.reshape(ho, wo, cout).astype(ypad_ref.dtype))

    # conv2 -> ReLU; lane-dense bf16 store (halves HBM writeback vs f32).
    y2 = conv3x3(ypad_ref, w2_ref, b2_ref, cout)
    o_ref[0] = y2.astype(o_ref.dtype)


# ------------------------------- wrapper ----------------------------------
def _round_up(x, m):
    return ((x + m - 1) // m) * m


def _nbytes(shape, dtype):
    return math.prod(shape) * jnp.dtype(dtype).itemsize


def down_forward(params, x_nchw, *, lane=128):
    """Forward of `Down`: MaxPool2d(2) -> Conv3x3+ReLU -> Conv3x3+ReLU. NCHW in/out."""
    n, cin, h, w = x_nchw.shape
    assert h % 2 == 0 and w % 2 == 0, "MaxPool2d(2) needs even spatial dims"
    cout = params["w1"].shape[-1]
    ho, wo = h // 2, w // 2
    cin_p = _round_up(cin, lane)
    cout_p = _round_up(cout, lane)

    # Layout plumbing (cheap XLA glue): bf16 activations, channels zero-padded
    # to a full 128-lane width, and the 2x2-pool W-pair hoisted to a LEADING
    # dim so the kernel's input block keeps (Wo, Cin_p) as its (sublane, lane)
    # dims (a size-2 sublane extent would inflate every bf16 slab to a full
    # (16,128) tile).
    x = x_nchw.astype(jnp.bfloat16).reshape(n, cin, h, wo, 2)
    x = jnp.transpose(x, (0, 4, 2, 3, 1))                       # (N, 2, H, Wo, Cin)
    x = jnp.pad(x, ((0, 0), (0, 0), (0, 0), (0, 0), (0, cin_p - cin)))

    def prep_w(wgt, ci, ci_p):
        wgt = jnp.pad(wgt.astype(jnp.bfloat16),
                      ((0, 0), (0, 0), (0, ci_p - ci), (0, cout_p - cout)))
        return wgt.reshape(9, ci_p, cout_p)                     # tap-major (dy, dx)

    w1 = prep_w(params["w1"], cin, cin_p)
    w2 = prep_w(params["w2"], cout, cout_p)
    b1 = jnp.pad(params["b1"].astype(jnp.float32), (0, cout_p - cout)).reshape(1, cout_p)
    b2 = jnp.pad(params["b2"].astype(jnp.float32), (0, cout_p - cout)).reshape(1, cout_p)

    in_blocks = [
        ((1, 2, h, wo, cin_p), jnp.bfloat16),
        ((9, cin_p, cout_p), jnp.bfloat16),
        ((1, cout_p), jnp.float32),
        ((9, cout_p, cout_p), jnp.bfloat16),
        ((1, cout_p), jnp.float32),
    ]
    out_block = ((1, ho * wo, cout_p), jnp.bfloat16)
    scratch = [((ho + 2, wo + 2, cin_p), jnp.bfloat16),
               ((ho + 2, wo + 2, cout_p), jnp.bfloat16)]
    # Explicit scoped-VMEM budget (v5e defaults to just 16 MiB): double-buffered
    # pipelined blocks + scratch, with generous headroom for relayout copies.
    need = (sum(2 * _nbytes(s, d) for s, d in in_blocks + [out_block])
            + sum(_nbytes(s, d) for s, d in scratch))
    vmem_limit = int(min(64 << 20, max(16 << 20, 4 * need)))

    out = pl.pallas_call(
        down_double_conv_kernel,
        out_shape=jax.ShapeDtypeStruct((n, ho * wo, cout_p), jnp.bfloat16),
        grid=(n,),
        in_specs=[
            pl.BlockSpec((1, 2, h, wo, cin_p), lambda i: (i, 0, 0, 0, 0)),
            # TODO(synk): single-buffer the grid-invariant weight/bias blocks
            # (pipeline_mode=pl.Buffered(1)) to free VMEM at real channel counts.
            pl.BlockSpec((9, cin_p, cout_p), lambda i: (0, 0, 0)),
            pl.BlockSpec((1, cout_p), lambda i: (0, 0)),
            pl.BlockSpec((9, cout_p, cout_p), lambda i: (0, 0, 0)),
            pl.BlockSpec((1, cout_p), lambda i: (0, 0)),
        ],
        out_specs=pl.BlockSpec((1, ho * wo, cout_p), lambda i: (i, 0, 0)),
        scratch_shapes=[pltpu.VMEM(s, d) for s, d in scratch],
        compiler_params=pltpu.CompilerParams(
            dimension_semantics=("parallel",),
            vmem_limit_bytes=vmem_limit),
    )(x, w1, b1, w2, b2)

    # Undo lane-dense channel padding, back to NCHW (N, Cout, Ho, Wo).
    out = out[:, :, :cout].reshape(n, ho, wo, cout)
    return jnp.transpose(out, (0, 3, 1, 2)).astype(jnp.float32)


# --------------------------- pure-JAX reference ----------------------------
def down_ref(params, x_nchw):
    """Reference with matching numerics (bf16 inputs/weights, f32 accumulation)."""
    x = jnp.transpose(x_nchw, (0, 2, 3, 1)).astype(jnp.bfloat16)
    n, h, w, c = x.shape
    x = x.reshape(n, h // 2, 2, w // 2, 2, c).max(axis=(2, 4))   # MaxPool2d(2)

    def conv3x3_relu(t, wgt, b):
        y = lax.conv_general_dilated(
            t, wgt.astype(jnp.bfloat16), (1, 1), "SAME",
            dimension_numbers=("NHWC", "HWIO", "NHWC"),
            preferred_element_type=jnp.float32)
        return jnp.maximum(y + b.reshape(1, 1, 1, -1).astype(jnp.float32), 0.0)

    y = conv3x3_relu(x, params["w1"], params["b1"])
    y = conv3x3_relu(y.astype(jnp.bfloat16), params["w2"], params["b2"])
    return jnp.transpose(y, (0, 3, 1, 2))


# --------------------------------- main ------------------------------------
if __name__ == "__main__":
    in_channels, out_channels = 4, 8
    N, H, W = 2, 16, 16

    key = jax.random.PRNGKey(0)
    k1, k2, k3, k4, k5 = jax.random.split(key, 5)

    # Synthetic deterministic parameters (HWIO layout).
    params = {
        "w1": jax.random.normal(k1, (3, 3, in_channels, out_channels), jnp.float32) * 0.1,
        "b1": jax.random.normal(k2, (out_channels,), jnp.float32) * 0.1,
        "w2": jax.random.normal(k3, (3, 3, out_channels, out_channels), jnp.float32) * 0.1,
        "b2": jax.random.normal(k4, (out_channels,), jnp.float32) * 0.1,
    }
    x = jax.random.normal(k5, (N, in_channels, H, W), jnp.float32)

    down = jax.jit(down_forward)
    out = jax.block_until_ready(down(params, x))
    assert out.shape == (N, out_channels, H // 2, W // 2), out.shape

    ref = down_ref(params, x)
    # bf16 intermediate + bf16 output writeback -> a few bf16 ULPs of slack.
    max_err = float(jnp.max(jnp.abs(out - ref)))
    assert jnp.allclose(out, ref, atol=2e-2, rtol=2e-2), max_err

    print("KERNEL_OK")
</pallas_src>

<mosaic_0001>
module attributes {stable_mosaic.version = 11 : i64} {
  func.func @down_double_conv_kernel(%arg0: i32, %arg1: memref<1x2x16x8x128xbf16, #tpu.memory_space<vmem>>, %arg2: memref<9x128x128xbf16, #tpu.memory_space<vmem>>, %arg3: memref<1x128xf32, #tpu.memory_space<vmem>>, %arg4: memref<9x128x128xbf16, #tpu.memory_space<vmem>>, %arg5: memref<1x128xf32, #tpu.memory_space<vmem>>, %arg6: memref<1x64x128xbf16, #tpu.memory_space<vmem>>, %arg7: memref<10x10x128xbf16, #tpu.memory_space<vmem>>, %arg8: memref<10x10x128xbf16, #tpu.memory_space<vmem>>) attributes {dimension_semantics = [#tpu.dimension_semantics<parallel>], iteration_bounds = array<i64: 2>, scalar_prefetch = 0 : i64, scratch_operands = 2 : i64, tpu.core_type = #tpu.core_type<tc>, window_params = [{transform_indices = @transform_0, window_bounds = array<i64: 1, 2, 16, 8, 128>}, {pipeline_mode = #tpu.pipeline_mode<synchronous>, transform_indices = @transform_1, window_bounds = array<i64: 9, 128, 128>}, {pipeline_mode = #tpu.pipeline_mode<synchronous>, transform_indices = @transform_2, window_bounds = array<i64: 1, 128>}, {pipeline_mode = #tpu.pipeline_mode<synchronous>, transform_indices = @transform_3, window_bounds = array<i64: 9, 128, 128>}, {pipeline_mode = #tpu.pipeline_mode<synchronous>, transform_indices = @transform_4, window_bounds = array<i64: 1, 128>}, {transform_indices = @transform_5, window_bounds = array<i64: 1, 64, 128>}]} {
    %c0_i32 = arith.constant 0 : i32
    %0 = arith.cmpi eq, %arg0, %c0_i32 : i32
    %1 = arith.extui %0 : i1 to i32
    %c0_i32_0 = arith.constant 0 : i32
    %2 = arith.cmpi ne, %1, %c0_i32_0 : i32
    scf.if %2 {
      %cst_145 = arith.constant 0.000000e+00 : bf16
      %138 = vector.broadcast %cst_145 : bf16 to vector<10x10x128xbf16>
      %c0_146 = arith.constant 0 : index
      %c0_147 = arith.constant 0 : index
      %c0_148 = arith.constant 0 : index
      %139 = vector.load %arg7[%c0_146, %c0_147, %c0_148] : memref<10x10x128xbf16, #tpu.memory_space<vmem>>, vector<10x10x128xbf16>
      tpu.vector_store %arg7[%c0_146, %c0_147, %c0_148], %138 {strides = array<i32>} : memref<10x10x128xbf16, #tpu.memory_space<vmem>>, vector<10x10x128xbf16>,
      %cst_149 = arith.constant 0.000000e+00 : bf16
      %140 = vector.broadcast %cst_149 : bf16 to vector<10x10x128xbf16>
      %c0_150 = arith.constant 0 : index
      %c0_151 = arith.constant 0 : index
      %c0_152 = arith.constant 0 : index
      %141 = vector.load %arg8[%c0_150, %c0_151, %c0_152] : memref<10x10x128xbf16, #tpu.memory_space<vmem>>, vector<10x10x128xbf16>
      tpu.vector_store %arg8[%c0_150, %c0_151, %c0_152], %140 {strides = array<i32>} : memref<10x10x128xbf16, #tpu.memory_space<vmem>>, vector<10x10x128xbf16>,
    } else {
    }
    %c0 = arith.constant 0 : index
    %c0_1 = arith.constant 0 : index
    %c0_2 = arith.constant 0 : index
    %c0_3 = arith.constant 0 : index
    %c0_4 = arith.constant 0 : index
    %3 = vector.load %arg1[%c0, %c0_1, %c0_2, %c0_3, %c0_4] : memref<1x2x16x8x128xbf16, #tpu.memory_space<vmem>>, vector<1x1x16x8x128xbf16>
    %4 = vector.shape_cast %3 : vector<1x1x16x8x128xbf16> to vector<16x8x128xbf16>
    %c0_5 = arith.constant 0 : index
    %c1 = arith.constant 1 : index
    %c0_6 = arith.constant 0 : index
    %c0_7 = arith.constant 0 : index
    %c0_8 = arith.constant 0 : index
    %5 = vector.load %arg1[%c0_5, %c1, %c0_6, %c0_7, %c0_8] : memref<1x2x16x8x128xbf16, #tpu.memory_space<vmem>>, vector<1x1x16x8x128xbf16>
    %6 = vector.shape_cast %5 : vector<1x1x16x8x128xbf16> to vector<16x8x128xbf16>
    %7 = arith.maximumf %4, %6 : vector<16x8x128xbf16>
    %8 = vector.shape_cast %7 : vector<16x8x128xbf16> to vector<8x2x8x128xbf16>
    %cst = arith.constant dense<0xFF80> : vector<8x8x128xbf16>
    %9 = vector.multi_reduction <maximumf>, %8, %cst [1] : vector<8x2x8x128xbf16> to vector<8x8x128xbf16>
    %c1_9 = arith.constant 1 : index
    %c1_10 = arith.constant 1 : index
    %c0_11 = arith.constant 0 : index
    %10 = vector.load %arg7[%c1_9, %c1_10, %c0_11] : memref<10x10x128xbf16, #tpu.memory_space<vmem>>, vector<8x8x128xbf16>
    tpu.vector_store %arg7[%c1_9, %c1_10, %c0_11], %9 {strides = array<i32>} : memref<10x10x128xbf16, #tpu.memory_space<vmem>>, vector<8x8x128xbf16>,
    %cst_12 = arith.constant 0.000000e+00 : f32
    %11 = vector.broadcast %cst_12 : f32 to vector<64x128xf32>
    %c0_13 = arith.constant 0 : index
    %c0_14 = arith.constant 0 : index
    %c0_15 = arith.constant 0 : index
    %12 = vector.load %arg7[%c0_13, %c0_14, %c0_15] : memref<10x10x128xbf16, #tpu.memory_space<vmem>>, vector<8x8x128xbf16>
    %13 = vector.shape_cast %12 : vector<8x8x128xbf16> to vector<64x128xbf16>
    %c0_16 = arith.constant 0 : index
    %c0_17 = arith.constant 0 : index
    %c0_18 = arith.constant 0 : index
    %14 = vector.load %arg2[%c0_16, %c0_17, %c0_18] : memref<9x128x128xbf16, #tpu.memory_space<vmem>>, vector<1x128x128xbf16>
    %15 = vector.shape_cast %14 : vector<1x128x128xbf16> to vector<128x128xbf16>
    %cst_19 = arith.constant dense<0.000000e+00> : vector<64x128xf32>
    %16 = tpu.matmul %13, %15, %cst_19 {dimension_numbers = #tpu.dot_dimension_numbers<[1], [0], [0], [1], [0, 0, 1, 1], [], []>} : vector<64x128xbf16>, vector<128x128xbf16>, vector<64x128xf32> -> vector<64x128xf32>
    %17 = arith.addf %11, %16 : vector<64x128xf32>
    %c0_20 = arith.constant 0 : index
    %c1_21 = arith.constant 1 : index
    %c0_22 = arith.constant 0 : index
    %18 = vector.load %arg7[%c0_20, %c1_21, %c0_22] : memref<10x10x128xbf16, #tpu.memory_space<vmem>>, vector<8x8x128xbf16>
    %19 = vector.shape_cast %18 : vector<8x8x128xbf16> to vector<64x128xbf16>
    %c1_23 = arith.constant 1 : index
    %c0_24 = arith.constant 0 : index
    %c0_25 = arith.constant 0 : index
    %20 = vector.load %arg2[%c1_23, %c0_24, %c0_25] : memref<9x128x128xbf16, #tpu.memory_space<vmem>>, vector<1x128x128xbf16>
    %21 = vector.shape_cast %20 : vector<1x128x128xbf16> to vector<128x128xbf16>
    %cst_26 = arith.constant dense<0.000000e+00> : vector<64x128xf32>
    %22 = tpu.matmul %19, %21, %cst_26 {dimension_numbers = #tpu.dot_dimension_numbers<[1], [0], [0], [1], [0, 0, 1, 1], [], []>} : vector<64x128xbf16>, vector<128x128xbf16>, vector<64x128xf32> -> vector<64x128xf32>
    %23 = arith.addf %17, %22 : vector<64x128xf32>
    %c0_27 = arith.constant 0 : index
    %c2 = arith.constant 2 : index
    %c0_28 = arith.constant 0 : index
    %24 = vector.load %arg7[%c0_27, %c2, %c0_28] : memref<10x10x128xbf16, #tpu.memory_space<vmem>>, vector<8x8x128xbf16>
    %25 = vector.shape_cast %24 : vector<8x8x128xbf16> to vector<64x128xbf16>
    %c2_29 = arith.constant 2 : index
    %c0_30 = arith.constant 0 : index
    %c0_31 = arith.constant 0 : index
    %26 = vector.load %arg2[%c2_29, %c0_30, %c0_31] : memref<9x128x128xbf16, #tpu.memory_space<vmem>>, vector<1x128x128xbf16>
    %27 = vector.shape_cast %26 : vector<1x128x128xbf16> to vector<128x128xbf16>
    %cst_32 = arith.constant dense<0.000000e+00> : vector<64x128xf32>
    %28 = tpu.matmul %25, %27, %cst_32 {dimension_numbers = #tpu.dot_dimension_numbers<[1], [0], [0], [1], [0, 0, 1, 1], [], []>} : vector<64x128xbf16>, vector<128x128xbf16>, vector<64x128xf32> -> vector<64x128xf32>
    %29 = arith.addf %23, %28 : vector<64x128xf32>
    %c1_33 = arith.constant 1 : index
    %c0_34 = arith.constant 0 : index
    %c0_35 = arith.constant 0 : index
    %30 = vector.load %arg7[%c1_33, %c0_34, %c0_35] : memref<10x10x128xbf16, #tpu.memory_space<vmem>>, vector<8x8x128xbf16>
    %31 = vector.shape_cast %30 : vector<8x8x128xbf16> to vector<64x128xbf16>
    %c3 = arith.constant 3 : index
    %c0_36 = arith.constant 0 : index
    %c0_37 = arith.constant 0 : index
    %32 = vector.load %arg2[%c3, %c0_36, %c0_37] : memref<9x128x128xbf16, #tpu.memory_space<vmem>>, vector<1x128x128xbf16>
    %33 = vector.shape_cast %32 : vector<1x128x128xbf16> to vector<128x128xbf16>
    %cst_38 = arith.constant dense<0.000000e+00> : vector<64x128xf32>
    %34 = tpu.matmul %31, %33, %cst_38 {dimension_numbers = #tpu.dot_dimension_numbers<[1], [0], [0], [1], [0, 0, 1, 1], [], []>} : vector<64x128xbf16>, vector<128x128xbf16>, vector<64x128xf32> -> vector<64x128xf32>
    %35 = arith.addf %29, %34 : vector<64x128xf32>
    %c1_39 = arith.constant 1 : index
    %c1_40 = arith.constant 1 : index
    %c0_41 = arith.constant 0 : index
    %36 = vector.load %arg7[%c1_39, %c1_40, %c0_41] : memref<10x10x128xbf16, #tpu.memory_space<vmem>>, vector<8x8x128xbf16>
    %37 = vector.shape_cast %36 : vector<8x8x128xbf16> to vector<64x128xbf16>
    %c4 = arith.constant 4 : index
    %c0_42 = arith.constant 0 : index
    %c0_43 = arith.constant 0 : index
    %38 = vector.load %arg2[%c4, %c0_42, %c0_43] : memref<9x128x128xbf16, #tpu.memory_space<vmem>>, vector<1x128x128xbf16>
    %39 = vector.shape_cast %38 : vector<1x128x128xbf16> to vector<128x128xbf16>
    %cst_44 = arith.constant dense<0.000000e+00> : vector<64x128xf32>
    %40 = tpu.matmul %37, %39, %cst_44 {dimension_numbers = #tpu.dot_dimension_numbers<[1], [0], [0], [1], [0, 0, 1, 1], [], []>} : vector<64x128xbf16>, vector<128x128xbf16>, vector<64x128xf32> -> vector<64x128xf32>
    %41 = arith.addf %35, %40 : vector<64x128xf32>
    %c1_45 = arith.constant 1 : index
    %c2_46 = arith.constant 2 : index
    %c0_47 = arith.constant 0 : index
    %42 = vector.load %arg7[%c1_45, %c2_46, %c0_47] : memref<10x10x128xbf16, #tpu.memory_space<vmem>>, vector<8x8x128xbf16>
    %43 = vector.shape_cast %42 : vector<8x8x128xbf16> to vector<64x128xbf16>
    %c5 = arith.constant 5 : index
    %c0_48 = arith.constant 0 : index
    %c0_49 = arith.constant 0 : index
    %44 = vector.load %arg2[%c5, %c0_48, %c0_49] : memref<9x128x128xbf16, #tpu.memory_space<vmem>>, vector<1x128x128xbf16>
    %45 = vector.shape_cast %44 : vector<1x128x128xbf16> to vector<128x128xbf16>
    %cst_50 = arith.constant dense<0.000000e+00> : vector<64x128xf32>
    %46 = tpu.matmul %43, %45, %cst_50 {dimension_numbers = #tpu.dot_dimension_numbers<[1], [0], [0], [1], [0, 0, 1, 1], [], []>} : vector<64x128xbf16>, vector<128x128xbf16>, vector<64x128xf32> -> vector<64x128xf32>
    %47 = arith.addf %41, %46 : vector<64x128xf32>
    %c2_51 = arith.constant 2 : index
    %c0_52 = arith.constant 0 : index
    %c0_53 = arith.constant 0 : index
    %48 = vector.load %arg7[%c2_51, %c0_52, %c0_53] : memref<10x10x128xbf16, #tpu.memory_space<vmem>>, vector<8x8x128xbf16>
    %49 = vector.shape_cast %48 : vector<8x8x128xbf16> to vector<64x128xbf16>
    %c6 = arith.constant 6 : index
    %c0_54 = arith.constant 0 : index
    %c0_55 = arith.constant 0 : index
    %50 = vector.load %arg2[%c6, %c0_54, %c0_55] : memref<9x128x128xbf16, #tpu.memory_space<vmem>>, vector<1x128x128xbf16>
    %51 = vector.shape_cast %50 : vector<1x128x128xbf16> to vector<128x128xbf16>
    %cst_56 = arith.constant dense<0.000000e+00> : vector<64x128xf32>
    %52 = tpu.matmul %49, %51, %cst_56 {dimension_numbers = #tpu.dot_dimension_numbers<[1], [0], [0], [1], [0, 0, 1, 1], [], []>} : vector<64x128xbf16>, vector<128x128xbf16>, vector<64x128xf32> -> vector<64x128xf32>
    %53 = arith.addf %47, %52 : vector<64x128xf32>
    %c2_57 = arith.constant 2 : index
    %c1_58 = arith.constant 1 : index
    %c0_59 = arith.constant 0 : index
    %54 = vector.load %arg7[%c2_57, %c1_58, %c0_59] : memref<10x10x128xbf16, #tpu.memory_space<vmem>>, vector<8x8x128xbf16>
    %55 = vector.shape_cast %54 : vector<8x8x128xbf16> to vector<64x128xbf16>
    %c7 = arith.constant 7 : index
    %c0_60 = arith.constant 0 : index
    %c0_61 = arith.constant 0 : index
    %56 = vector.load %arg2[%c7, %c0_60, %c0_61] : memref<9x128x128xbf16, #tpu.memory_space<vmem>>, vector<1x128x128xbf16>
    %57 = vector.shape_cast %56 : vector<1x128x128xbf16> to vector<128x128xbf16>
    %cst_62 = arith.constant dense<0.000000e+00> : vector<64x128xf32>
    %58 = tpu.matmul %55, %57, %cst_62 {dimension_numbers = #tpu.dot_dimension_numbers<[1], [0], [0], [1], [0, 0, 1, 1], [], []>} : vector<64x128xbf16>, vector<128x128xbf16>, vector<64x128xf32> -> vector<64x128xf32>
    %59 = arith.addf %53, %58 : vector<64x128xf32>
    %c2_63 = arith.constant 2 : index
    %c2_64 = arith.constant 2 : index
    %c0_65 = arith.constant 0 : index
    %60 = vector.load %arg7[%c2_63, %c2_64, %c0_65] : memref<10x10x128xbf16, #tpu.memory_space<vmem>>, vector<8x8x128xbf16>
    %61 = vector.shape_cast %60 : vector<8x8x128xbf16> to vector<64x128xbf16>
    %c8 = arith.constant 8 : index
    %c0_66 = arith.constant 0 : index
    %c0_67 = arith.constant 0 : index
    %62 = vector.load %arg2[%c8, %c0_66, %c0_67] : memref<9x128x128xbf16, #tpu.memory_space<vmem>>, vector<1x128x128xbf16>
    %63 = vector.shape_cast %62 : vector<1x128x128xbf16> to vector<128x128xbf16>
    %cst_68 = arith.constant dense<0.000000e+00> : vector<64x128xf32>
    %64 = tpu.matmul %61, %63, %cst_68 {dimension_numbers = #tpu.dot_dimension_numbers<[1], [0], [0], [1], [0, 0, 1, 1], [], []>} : vector<64x128xbf16>, vector<128x128xbf16>, vector<64x128xf32> -> vector<64x128xf32>
    %65 = arith.addf %59, %64 : vector<64x128xf32>
    %c0_69 = arith.constant 0 : index
    %c0_70 = arith.constant 0 : index
    %66 = vector.load %arg3[%c0_69, %c0_70] : memref<1x128xf32, #tpu.memory_space<vmem>>, vector<1x128xf32>
    %67 = vector.broadcast %66 : vector<1x128xf32> to vector<64x128xf32>
    %68 = arith.addf %65, %67 : vector<64x128xf32>
    %cst_71 = arith.constant 0.000000e+00 : f32
    %69 = vector.broadcast %cst_71 : f32 to vector<64x128xf32>
    %70 = arith.maximumf %68, %69 : vector<64x128xf32>
    %71 = vector.shape_cast %70 : vector<64x128xf32> to vector<8x8x128xf32>
    %72 = arith.truncf %71 : vector<8x8x128xf32> to vector<8x8x128xbf16>
    %c1_72 = arith.constant 1 : index
    %c1_73 = arith.constant 1 : index
    %c0_74 = arith.constant 0 : index
    %73 = vector.load %arg8[%c1_72, %c1_73, %c0_74] : memref<10x10x128xbf16, #tpu.memory_space<vmem>>, vector<8x8x128xbf16>
    tpu.vector_store %arg8[%c1_72, %c1_73, %c0_74], %72 {strides = array<i32>} : memref<10x10x128xbf16, #tpu.memory_space<vmem>>, vector<8x8x128xbf16>,
    %cst_75 = arith.constant 0.000000e+00 : f32
    %74 = vector.broadcast %cst_75 : f32 to vector<64x128xf32>
    %c0_76 = arith.constant 0 : index
    %c0_77 = arith.constant 0 : index
    %c0_78 = arith.constant 0 : index
    %75 = vector.load %arg8[%c0_76, %c0_77, %c0_78] : memref<10x10x128xbf16, #tpu.memory_space<vmem>>, vector<8x8x128xbf16>
    %76 = vector.shape_cast %75 : vector<8x8x128xbf16> to vector<64x128xbf16>
    %c0_79 = arith.constant 0 : index
    %c0_80 = arith.constant 0 : index
    %c0_81 = arith.constant 0 : index
    %77 = vector.load %arg4[%c0_79, %c0_80, %c0_81] : memref<9x128x128xbf16, #tpu.memory_space<vmem>>, vector<1x128x128xbf16>
    %78 = vector.shape_cast %77 : vector<1x128x128xbf16> to vector<128x128xbf16>
    %cst_82 = arith.constant dense<0.000000e+00> : vector<64x128xf32>
    %79 = tpu.matmul %76, %78, %cst_82 {dimension_numbers = #tpu.dot_dimension_numbers<[1], [0], [0], [1], [0, 0, 1, 1], [], []>} : vector<64x128xbf16>, vector<128x128xbf16>, vector<64x128xf32> -> vector<64x128xf32>
    %80 = arith.addf %74, %79 : vector<64x128xf32>
    %c0_83 = arith.constant 0 : index
    %c1_84 = arith.constant 1 : index
    %c0_85 = arith.constant 0 : index
    %81 = vector.load %arg8[%c0_83, %c1_84, %c0_85] : memref<10x10x128xbf16, #tpu.memory_space<vmem>>, vector<8x8x128xbf16>
    %82 = vector.shape_cast %81 : vector<8x8x128xbf16> to vector<64x128xbf16>
    %c1_86 = arith.constant 1 : index
    %c0_87 = arith.constant 0 : index
    %c0_88 = arith.constant 0 : index
    %83 = vector.load %arg4[%c1_86, %c0_87, %c0_88] : memref<9x128x128xbf16, #tpu.memory_space<vmem>>, vector<1x128x128xbf16>
    %84 = vector.shape_cast %83 : vector<1x128x128xbf16> to vector<128x128xbf16>
    %cst_89 = arith.constant dense<0.000000e+00> : vector<64x128xf32>
    %85 = tpu.matmul %82, %84, %cst_89 {dimension_numbers = #tpu.dot_dimension_numbers<[1], [0], [0], [1], [0, 0, 1, 1], [], []>} : vector<64x128xbf16>, vector<128x128xbf16>, vector<64x128xf32> -> vector<64x128xf32>
    %86 = arith.addf %80, %85 : vector<64x128xf32>
    %c0_90 = arith.constant 0 : index
    %c2_91 = arith.constant 2 : index
    %c0_92 = arith.constant 0 : index
    %87 = vector.load %arg8[%c0_90, %c2_91, %c0_92] : memref<10x10x128xbf16, #tpu.memory_space<vmem>>, vector<8x8x128xbf16>
    %88 = vector.shape_cast %87 : vector<8x8x128xbf16> to vector<64x128xbf16>
    %c2_93 = arith.constant 2 : index
    %c0_94 = arith.constant 0 : index
    %c0_95 = arith.constant 0 : index
    %89 = vector.load %arg4[%c2_93, %c0_94, %c0_95] : memref<9x128x128xbf16, #tpu.memory_space<vmem>>, vector<1x128x128xbf16>
    %90 = vector.shape_cast %89 : vector<1x128x128xbf16> to vector<128x128xbf16>
    %cst_96 = arith.constant dense<0.000000e+00> : vector<64x128xf32>
    %91 = tpu.matmul %88, %90, %cst_96 {dimension_numbers = #tpu.dot_dimension_numbers<[1], [0], [0], [1], [0, 0, 1, 1], [], []>} : vector<64x128xbf16>, vector<128x128xbf16>, vector<64x128xf32> -> vector<64x128xf32>
    %92 = arith.addf %86, %91 : vector<64x128xf32>
    %c1_97 = arith.constant 1 : index
    %c0_98 = arith.constant 0 : index
    %c0_99 = arith.constant 0 : index
    %93 = vector.load %arg8[%c1_97, %c0_98, %c0_99] : memref<10x10x128xbf16, #tpu.memory_space<vmem>>, vector<8x8x128xbf16>
    %94 = vector.shape_cast %93 : vector<8x8x128xbf16> to vector<64x128xbf16>
    %c3_100 = arith.constant 3 : index
    %c0_101 = arith.constant 0 : index
    %c0_102 = arith.constant 0 : index
    %95 = vector.load %arg4[%c3_100, %c0_101, %c0_102] : memref<9x128x128xbf16, #tpu.memory_space<vmem>>, vector<1x128x128xbf16>
    %96 = vector.shape_cast %95 : vector<1x128x128xbf16> to vector<128x128xbf16>
    %cst_103 = arith.constant dense<0.000000e+00> : vector<64x128xf32>
    %97 = tpu.matmul %94, %96, %cst_103 {dimension_numbers = #tpu.dot_dimension_numbers<[1], [0], [0], [1], [0, 0, 1, 1], [], []>} : vector<64x128xbf16>, vector<128x128xbf16>, vector<64x128xf32> -> vector<64x128xf32>
    %98 = arith.addf %92, %97 : vector<64x128xf32>
    %c1_104 = arith.constant 1 : index
    %c1_105 = arith.constant 1 : index
    %c0_106 = arith.constant 0 : index
    %99 = vector.load %arg8[%c1_104, %c1_105, %c0_106] : memref<10x10x128xbf16, #tpu.memory_space<vmem>>, vector<8x8x128xbf16>
    %100 = vector.shape_cast %99 : vector<8x8x128xbf16> to vector<64x128xbf16>
    %c4_107 = arith.constant 4 : index
    %c0_108 = arith.constant 0 : index
    %c0_109 = arith.constant 0 : index
    %101 = vector.load %arg4[%c4_107, %c0_108, %c0_109] : memref<9x128x128xbf16, #tpu.memory_space<vmem>>, vector<1x128x128xbf16>
    %102 = vector.shape_cast %101 : vector<1x128x128xbf16> to vector<128x128xbf16>
    %cst_110 = arith.constant dense<0.000000e+00> : vector<64x128xf32>
    %103 = tpu.matmul %100, %102, %cst_110 {dimension_numbers = #tpu.dot_dimension_numbers<[1], [0], [0], [1], [0, 0, 1, 1], [], []>} : vector<64x128xbf16>, vector<128x128xbf16>, vector<64x128xf32> -> vector<64x128xf32>
    %104 = arith.addf %98, %103 : vector<64x128xf32>
    %c1_111 = arith.constant 1 : index
    %c2_112 = arith.constant 2 : index
    %c0_113 = arith.constant 0 : index
    %105 = vector.load %arg8[%c1_111, %c2_112, %c0_113] : memref<10x10x128xbf16, #tpu.memory_space<vmem>>, vector<8x8x128xbf16>
    %106 = vector.shape_cast %105 : vector<8x8x128xbf16> to vector<64x128xbf16>
    %c5_114 = arith.constant 5 : index
    %c0_115 = arith.constant 0 : index
    %c0_116 = arith.constant 0 : index
    %107 = vector.load %arg4[%c5_114, %c0_115, %c0_116] : memref<9x128x128xbf16, #tpu.memory_space<vmem>>, vector<1x128x128xbf16>
    %108 = vector.shape_cast %107 : vector<1x128x128xbf16> to vector<128x128xbf16>
    %cst_117 = arith.constant dense<0.000000e+00> : vector<64x128xf32>
    %109 = tpu.matmul %106, %108, %cst_117 {dimension_numbers = #tpu.dot_dimension_numbers<[1], [0], [0], [1], [0, 0, 1, 1], [], []>} : vector<64x128xbf16>, vector<128x128xbf16>, vector<64x128xf32> -> vector<64x128xf32>
    %110 = arith.addf %104, %109 : vector<64x128xf32>
    %c2_118 = arith.constant 2 : index
    %c0_119 = arith.constant 0 : index
    %c0_120 = arith.constant 0 : index
    %111 = vector.load %arg8[%c2_118, %c0_119, %c0_120] : memref<10x10x128xbf16, #tpu.memory_space<vmem>>, vector<8x8x128xbf16>
    %112 = vector.shape_cast %111 : vector<8x8x128xbf16> to vector<64x128xbf16>
    %c6_121 = arith.constant 6 : index
    %c0_122 = arith.constant 0 : index
    %c0_123 = arith.constant 0 : index
    %113 = vector.load %arg4[%c6_121, %c0_122, %c0_123] : memref<9x128x128xbf16, #tpu.memory_space<vmem>>, vector<1x128x128xbf16>
    %114 = vector.shape_cast %113 : vector<1x128x128xbf16> to vector<128x128xbf16>
    %cst_124 = arith.constant dense<0.000000e+00> : vector<64x128xf32>
    %115 = tpu.matmul %112, %114, %cst_124 {dimension_numbers = #tpu.dot_dimension_numbers<[1], [0], [0], [1], [0, 0, 1, 1], [], []>} : vector<64x128xbf16>, vector<128x128xbf16>, vector<64x128xf32> -> vector<64x128xf32>
    %116 = arith.addf %110, %115 : vector<64x128xf32>
    %c2_125 = arith.constant 2 : index
    %c1_126 = arith.constant 1 : index
    %c0_127 = arith.constant 0 : index
    %117 = vector.load %arg8[%c2_125, %c1_126, %c0_127] : memref<10x10x128xbf16, #tpu.memory_space<vmem>>, vector<8x8x128xbf16>
    %118 = vector.shape_cast %117 : vector<8x8x128xbf16> to vector<64x128xbf16>
    %c7_128 = arith.constant 7 : index
    %c0_129 = arith.constant 0 : index
    %c0_130 = arith.constant 0 : index
    %119 = vector.load %arg4[%c7_128, %c0_129, %c0_130] : memref<9x128x128xbf16, #tpu.memory_space<vmem>>, vector<1x128x128xbf16>
    %120 = vector.shape_cast %119 : vector<1x128x128xbf16> to vector<128x128xbf16>
    %cst_131 = arith.constant dense<0.000000e+00> : vector<64x128xf32>
    %121 = tpu.matmul %118, %120, %cst_131 {dimension_numbers = #tpu.dot_dimension_numbers<[1], [0], [0], [1], [0, 0, 1, 1], [], []>} : vector<64x128xbf16>, vector<128x128xbf16>, vector<64x128xf32> -> vector<64x128xf32>
    %122 = arith.addf %116, %121 : vector<64x128xf32>
    %c2_132 = arith.constant 2 : index
    %c2_133 = arith.constant 2 : index
    %c0_134 = arith.constant 0 : index
    %123 = vector.load %arg8[%c2_132, %c2_133, %c0_134] : memref<10x10x128xbf16, #tpu.memory_space<vmem>>, vector<8x8x128xbf16>
    %124 = vector.shape_cast %123 : vector<8x8x128xbf16> to vector<64x128xbf16>
    %c8_135 = arith.constant 8 : index
    %c0_136 = arith.constant 0 : index
    %c0_137 = arith.constant 0 : index
    %125 = vector.load %arg4[%c8_135, %c0_136, %c0_137] : memref<9x128x128xbf16, #tpu.memory_space<vmem>>, vector<1x128x128xbf16>
    %126 = vector.shape_cast %125 : vector<1x128x128xbf16> to vector<128x128xbf16>
    %cst_138 = arith.constant dense<0.000000e+00> : vector<64x128xf32>
    %127 = tpu.matmul %124, %126, %cst_138 {dimension_numbers = #tpu.dot_dimension_numbers<[1], [0], [0], [1], [0, 0, 1, 1], [], []>} : vector<64x128xbf16>, vector<128x128xbf16>, vector<64x128xf32> -> vector<64x128xf32>
    %128 = arith.addf %122, %127 : vector<64x128xf32>
    %c0_139 = arith.constant 0 : index
    %c0_140 = arith.constant 0 : index
    %129 = vector.load %arg5[%c0_139, %c0_140] : memref<1x128xf32, #tpu.memory_space<vmem>>, vector<1x128xf32>
    %130 = vector.broadcast %129 : vector<1x128xf32> to vector<64x128xf32>
    %131 = arith.addf %128, %130 : vector<64x128xf32>
    %cst_141 = arith.constant 0.000000e+00 : f32
    %132 = vector.broadcast %cst_141 : f32 to vector<64x128xf32>
    %133 = arith.maximumf %131, %132 : vector<64x128xf32>
    %134 = arith.truncf %133 : vector<64x128xf32> to vector<64x128xbf16>
    %c0_142 = arith.constant 0 : index
    %c0_143 = arith.constant 0 : index
    %c0_144 = arith.constant 0 : index
    %135 = vector.load %arg6[%c0_142, %c0_143, %c0_144] : memref<1x64x128xbf16, #tpu.memory_space<vmem>>, vector<1x64x128xbf16>
    %136 = vector.shape_cast %135 : vector<1x64x128xbf16> to vector<64x128xbf16>
    %137 = vector.shape_cast %134 : vector<64x128xbf16> to vector<1x64x128xbf16>
    tpu.vector_store %arg6[%c0_142, %c0_143, %c0_144], %137 {strides = array<i32>} : memref<1x64x128xbf16, #tpu.memory_space<vmem>>, vector<1x64x128xbf16>,
    return
  }
  func.func @transform_0(%arg0: i32) -> (i32, i32, i32, i32, i32) {
    %c0_i32 = arith.constant 0 : i32
    %c0_i32_0 = arith.constant 0 : i32
    %c0_i32_1 = arith.constant 0 : i32
    %c0_i32_2 = arith.constant 0 : i32
    %c0_i32_3 = arith.constant 0 : i32
    return %arg0, %c0_i32, %c0_i32_0, %c0_i32_1, %c0_i32_2 : i32, i32, i32, i32, i32
  }
  func.func @transform_1(%arg0: i32) -> (i32, i32, i32) {
    %c0_i32 = arith.constant 0 : i32
    %c0_i32_0 = arith.constant 0 : i32
    %c0_i32_1 = arith.constant 0 : i32
    %c0_i32_2 = arith.constant 0 : i32
    return %c0_i32, %c0_i32_0, %c0_i32_1 : i32, i32, i32
  }
  func.func @transform_2(%arg0: i32) -> (i32, i32) {
    %c0_i32 = arith.constant 0 : i32
    %c0_i32_0 = arith.constant 0 : i32
    %c0_i32_1 = arith.constant 0 : i32
    return %c0_i32, %c0_i32_0 : i32, i32
  }
  func.func @transform_3(%arg0: i32) -> (i32, i32, i32) {
    %c0_i32 = arith.constant 0 : i32
    %c0_i32_0 = arith.constant 0 : i32
    %c0_i32_1 = arith.constant 0 : i32
    %c0_i32_2 = arith.constant 0 : i32
    return %c0_i32, %c0_i32_0, %c0_i32_1 : i32, i32, i32
  }
  func.func @transform_4(%arg0: i32) -> (i32, i32) {
    %c0_i32 = arith.constant 0 : i32
    %c0_i32_0 = arith.constant 0 : i32
    %c0_i32_1 = arith.constant 0 : i32
    return %c0_i32, %c0_i32_0 : i32, i32
  }
  func.func @transform_5(%arg0: i32) -> (i32, i32, i32) {
    %c0_i32 = arith.constant 0 : i32
    %c0_i32_0 = arith.constant 0 : i32
    %c0_i32_1 = arith.constant 0 : i32
    return %arg0, %c0_i32, %c0_i32_0 : i32, i32, i32
  }
}

</mosaic_0001>

<llo_original>
// kernel: down_forward.1
$region0: #{down_forward.1}
  #allocation0 [shape = 'u32[]', space=smem, size = 0x4, offset = 0x4, fixed_abs, tag = 'smem constant byte address 0x4 - core index']
  #allocation1 [shape = 'u32[72,128]{1,0:T(1,128)}', space=vmem, size = 0x9000, scoped, tag = 'internal scratch']
  #allocation2 [shape = 'bf16[10,10,128]{2,1,0:T(8,128)(2,1)}', space=vmem, size = 0xa000, scoped, tag = 'scratch operand']
  #allocation3 [shape = 'bf16[10,10,128]{2,1,0:T(8,128)(2,1)}', space=vmem, size = 0xa000, scoped, tag = 'scratch operand']
  %s0 = inlined_call_operand.vmem [shape: bf16[2,2,16,8,128], index: 0, kind: input, shape index: {}]
  %s1 = inlined_call_operand.vmem [shape: bf16[9,128,128], index: 1, kind: input, shape index: {}]
  %s2 = inlined_call_operand.vmem [shape: f32[1,128], index: 2, kind: input, shape index: {}]
  %s3 = inlined_call_operand.vmem [shape: bf16[9,128,128], index: 3, kind: input, shape index: {}]
  %s4 = inlined_call_operand.vmem [shape: f32[1,128], index: 4, kind: input, shape index: {}]
  %s5 = inlined_call_operand.vmem [shape: bf16[2,64,128], index: 5, kind: output, shape index: {}]
  %s6 = sld [smem:[#allocation0]]
  $region57: #{down_forward.1} parent=0
    _
  %s8 = ssub.s32 1, %s6
  %s9 = scalar_select 0, %s8, %s6
  loop: start=0, step=1, limit=4
  $region2: #{down_forward.1} parent=0 // loop_pre_header
    _
  $region3: #{down_forward.1} parent=0 // loop_header
    %s11 = sphi 0, %s15
    %p12 = scmp.ge.s32.totalorder %s11, 4
    %s21 = sphi 0, %s23
    %s24 = sphi 0, %s21
    %s25 = sphi 0, %s24
    %s41 = sphi 0, %s25
    %s45 = sphi 0, %s45
    %s47 = sphi 0, %s45
    %s48 = sphi 0, %s47
    %s62 = sphi 0, %s48
    %s66 = sphi 0, %s66
    %s68 = sphi 0, %s66
    %s69 = sphi 0, %s68
    %s83 = sphi 0, %s69
    %s87 = sphi 0, %s87
    %s89 = sphi 0, %s87
    %s90 = sphi 0, %s89
    %s104 = sphi 0, %s90
    %s108 = sphi 0, %s108
    %s110 = sphi 0, %s108
    %s111 = sphi 0, %s110
    %s125 = sphi 0, %s111
    %s131 = sphi 0, %s133
    %s134 = sphi 0, %s131
    %s135 = sphi 0, %s134
    %s151 = sphi 0, %s135
  $region4: #{down_forward.1} parent=0 // loop_header_branch
    %14 = sbr.rel (%p12) target = $region8
  $region5: #{down_forward.1} parent=0 // loop_body
    %s16 = ssub.s32 %s11, 1
    %s17 = ssub.s32 %s11, 2
    %s18 = sadd.s32 %s11, 1
    %s19 = ssub.s32 %s11, %s18
    %p20 = scmp.eq.s32.totalorder %s19, 0
    %s22 = sadd.s32 %s21, 1
    %s23 = scalar_select %p20, %s21, %s22
    %p26 = pneg %p20
    %p27 = scmp.eq.s32.totalorder %s11, 1
    %p28 = por %p26, %p27
    %p29 = scmp.ne.s32.totalorder %s21, %s24
    %p30 = scmp.eq.s32.totalorder %s11, 0
    %p31 = por %p29, %p30
    %p32 = scmp.ne.s32.totalorder %s21, %s24
    %p33 = scmp.eq.s32.totalorder %s16, 1
    %p34 = por %p32, %p33
    %p35 = scmp.ne.s32.totalorder %s24, %s25
    %p36 = scmp.eq.s32.totalorder %s16, 0
    %p37 = por %p35, %p36
    %p38 = scmp.ne.s32.totalorder %s24, %s25
    %p39 = scmp.eq.s32.totalorder %s17, 1
    %p40 = por %p38, %p39
    %p42 = scmp.ne.s32.totalorder %s25, %s41
    %p43 = scmp.eq.s32.totalorder %s17, 0
    %p44 = por %p42, %p43
    %s46 = sadd.s32 %s45, 1
    %p49 = scmp.eq.s32.totalorder %s11, 1
    %p50 = scmp.ne.s32.totalorder %s45, %s47
    %p51 = scmp.eq.s32.totalorder %s11, 0
    %p52 = por %p50, %p51
    %p53 = scmp.ne.s32.totalorder %s45, %s47
    %p54 = scmp.eq.s32.totalorder %s16, 1
    %p55 = por %p53, %p54
    %p56 = scmp.ne.s32.totalorder %s47, %s48
    %p57 = scmp.eq.s32.totalorder %s16, 0
    %p58 = por %p56, %p57
    %p59 = scmp.ne.s32.totalorder %s47, %s48
    %p60 = scmp.eq.s32.totalorder %s17, 1
    %p61 = por %p59, %p60
    %p63 = scmp.ne.s32.totalorder %s48, %s62
    %p64 = scmp.eq.s32.totalorder %s17, 0
    %p65 = por %p63, %p64
    %s67 = sadd.s32 %s66, 1
    %p70 = scmp.eq.s32.totalorder %s11, 1
    %p71 = scmp.ne.s32.totalorder %s66, %s68
    %p72 = scmp.eq.s32.totalorder %s11, 0
    %p73 = por %p71, %p72
    %p74 = scmp.ne.s32.totalorder %s66, %s68
    %p75 = scmp.eq.s32.totalorder %s16, 1
    %p76 = por %p74, %p75
    %p77 = scmp.ne.s32.totalorder %s68, %s69
    %p78 = scmp.eq.s32.totalorder %s16, 0
    %p79 = por %p77, %p78
    %p80 = scmp.ne.s32.totalorder %s68, %s69
    %p81 = scmp.eq.s32.totalorder %s17, 1
    %p82 = por %p80, %p81
    %p84 = scmp.ne.s32.totalorder %s69, %s83
    %p85 = scmp.eq.s32.totalorder %s17, 0
    %p86 = por %p84, %p85
    %s88 = sadd.s32 %s87, 1
    %p91 = scmp.eq.s32.totalorder %s11, 1
    %p92 = scmp.ne.s32.totalorder %s87, %s89
    %p93 = scmp.eq.s32.totalorder %s11, 0
    %p94 = por %p92, %p93
    %p95 = scmp.ne.s32.totalorder %s87, %s89
    %p96 = scmp.eq.s32.totalorder %s16, 1
    %p97 = por %p95, %p96
    %p98 = scmp.ne.s32.totalorder %s89, %s90
    %p99 = scmp.eq.s32.totalorder %s16, 0
    %p100 = por %p98, %p99
    %p101 = scmp.ne.s32.totalorder %s89, %s90
    %p102 = scmp.eq.s32.totalorder %s17, 1
    %p103 = por %p101, %p102
    %p105 = scmp.ne.s32.totalorder %s90, %s104
    %p106 = scmp.eq.s32.totalorder %s17, 0
    %p107 = por %p105, %p106
    %s109 = sadd.s32 %s108, 1
    %p112 = scmp.eq.s32.totalorder %s11, 1
    %p113 = scmp.ne.s32.totalorder %s108, %s110
    %p114 = scmp.eq.s32.totalorder %s11, 0
    %p115 = por %p113, %p114
    %p116 = scmp.ne.s32.totalorder %s108, %s110
    %p117 = scmp.eq.s32.totalorder %s16, 1
    %p118 = por %p116, %p117
    %p119 = scmp.ne.s32.totalorder %s110, %s111
    %p120 = scmp.eq.s32.totalorder %s16, 0
    %p121 = por %p119, %p120
    %p122 = scmp.ne.s32.totalorder %s110, %s111
    %p123 = scmp.eq.s32.totalorder %s17, 1
    %p124 = por %p122, %p123
    %p126 = scmp.ne.s32.totalorder %s111, %s125
    %p127 = scmp.eq.s32.totalorder %s17, 0
    %p128 = por %p126, %p127
    %s129 = ssub.s32 %s11, %s18
    %p130 = scmp.eq.s32.totalorder %s129, 0
    %s132 = sadd.s32 %s131, 1
    %s133 = scalar_select %p130, %s131, %s132
    %p136 = pneg %p130
    %p137 = scmp.eq.s32.totalorder %s11, 1
    %p138 = por %p136, %p137
    %p139 = scmp.ne.s32.totalorder %s131, %s134
    %p140 = scmp.eq.s32.totalorder %s11, 0
    %p141 = por %p139, %p140
    %p142 = scmp.ne.s32.totalorder %s131, %s134
    %p143 = scmp.eq.s32.totalorder %s16, 1
    %p144 = por %p142, %p143
    %p145 = scmp.ne.s32.totalorder %s134, %s135
    %p146 = scmp.eq.s32.totalorder %s16, 0
    %p147 = por %p145, %p146
    %p148 = scmp.ne.s32.totalorder %s134, %s135
    %p149 = scmp.eq.s32.totalorder %s17, 1
    %p150 = por %p148, %p149
    %p152 = scmp.ne.s32.totalorder %s135, %s151
    %p153 = scmp.eq.s32.totalorder %s17, 0
    %p154 = por %p152, %p153
    %p155 = scmp.le.s32.totalorder 1, %s11
    %p156 = scmp.lt.s32.totalorder %s11, 3
    %p157 = pnand %p155, %p156
    %p158 = pneg %p157
    // Predicated region
    $region9: #{down_forward.1} parent=5 // pred_check
      _
    $region10: #{down_forward.1} parent=5 // pred_check_branch
      %160 = sbr.rel (%p157) target = $region12
    $region11: #{down_forward.1} parent=5 // pred_region
      %s161 = ssub.s32 %s11, 1
      // Predicated region
      $region13: #{down_forward.1} parent=11 // pred_check
        %p162 = pneg %p58
      $region14: #{down_forward.1} parent=11 // pred_check_branch
        %164 = sbr.rel (%p162) target = $region16
      $region15: #{down_forward.1} parent=11 // pred_region
        _
      $region16: #{down_forward.1} parent=11 // pred_fallthru
        _
      // Predicated region
      $region17: #{down_forward.1} parent=11 // pred_check
        %p165 = pneg %p79
      $region18: #{down_forward.1} parent=11 // pred_check_branch
        %167 = sbr.rel (%p165) target = $region20
      $region19: #{down_forward.1} parent=11 // pred_region
        _
      $region20: #{down_forward.1} parent=11 // pred_fallthru
        _
      // Predicated region
      $region21: #{down_forward.1} parent=11 // pred_check
        %p168 = pneg %p100
      $region22: #{down_forward.1} parent=11 // pred_check_branch
        %170 = sbr.rel (%p168) target = $region24
      $region23: #{down_forward.1} parent=11 // pred_region
        _
      $region24: #{down_forward.1} parent=11 // pred_fallthru
        _
      // Predicated region
      $region25: #{down_forward.1} parent=11 // pred_check
        %p171 = pneg %p121
      $region26: #{down_forward.1} parent=11 // pred_check_branch
        %173 = sbr.rel (%p171) target = $region28
      $region27: #{down_forward.1} parent=11 // pred_region
        _
      $region28: #{down_forward.1} parent=11 // pred_fallthru
        _
    $region12: #{down_forward.1} parent=5 // pred_fallthru
      _
    %p174 = scmp.lt.s32.totalorder %s11, 2
    // Predicated region
    $region29: #{down_forward.1} parent=5 // pred_check
      %p175 = pneg %p174
    $region30: #{down_forward.1} parent=5 // pred_check_branch
      %177 = sbr.rel (%p175) target = $region32
    $region31: #{down_forward.1} parent=5 // pred_region
      // Predicated region
      $region33: #{down_forward.1} parent=31 // pred_check
        %p178 = pneg %p31
      $region34: #{down_forward.1} parent=31 // pred_check_branch
        %180 = sbr.rel (%p178) target = $region36
      $region35: #{down_forward.1} parent=31 // pred_region
        %p181 = scmp.lt.s32.totalorder %s11, 1
        %s182 = scalar_select %p181, %s11, 1
        %s183 = smul.addr %s182, 32
        %s184 = smul.addr %s183, 4
        %s185 = scalar_lea.vmem %s0, %s184
      $region36: #{down_forward.1} parent=31 // pred_fallthru
        _
    $region32: #{down_forward.1} parent=5 // pred_fallthru
      _
    %p186 = scmp.le.s32.totalorder 1, %s11
    %p187 = scmp.lt.s32.totalorder %s11, 3
    %p188 = pnand %p186, %p187
    %p189 = pneg %p188
    // Predicated region
    $region37: #{down_forward.1} parent=5 // pred_check
      _
    $region38: #{down_forward.1} parent=5 // pred_check_branch
      %191 = sbr.rel (%p188) target = $region40
    $region39: #{down_forward.1} parent=5 // pred_region
      %s192 = ssub.s32 %s11, 1
      %p193 = scmp.lt.s32.totalorder %s16, 1
      %s194 = scalar_select %p193, %s16, 1
      %s195 = smul.addr %s194, 32
      %s196 = smul.addr %s195, 4
      %s197 = scalar_lea.vmem %s0, %s196
      %p198 = pneg %p37
      %p199 = pneg %p34
      %p200 = pneg %p58
      %p201 = pneg %p55
      %p202 = pneg %p79
      %p203 = pneg %p76
      %p204 = pneg %p100
      %p205 = pneg %p97
      %p206 = pneg %p121
      %p207 = pneg %p118
      %p208 = pneg %p147
      %p209 = pneg %p144
      %p210 = scmp.lt.s32.totalorder %s16, 1
      %s211 = scalar_select %p210, %s16, 1
      %s212 = smul.addr %s211, 8
      %s213 = smul.addr %s212, 4
      %s214 = scalar_lea.vmem %s5, %s213
      %p215 = scmp.lt.s32.totalorder %s16, 1
      %s216 = scalar_select %p215, %s16, 1
      %s217 = smul.addr %s216, 32
      %s218 = smul.addr %s217, 4
      %s219 = scalar_lea.vmem %s0, %s218
      %p220 = scmp.lt.s32.totalorder %s16, 1
      %s221 = scalar_select %p220, %s16, 1
      %s222 = smul.addr %s221, 8
      %s223 = smul.addr %s222, 4
      %s224 = scalar_lea.vmem %s5, %s223
      %p226 = scmp.eq.s32.totalorder %s16, 0
      // Predicated region
      $region41: #{down_forward.1} parent=39 // pred_check
        %p227 = pneg %p226
      $region42: #{down_forward.1} parent=39 // pred_check_branch
        %229 = sbr.rel (%p227) target = $region44
      $region43: #{down_forward.1} parent=39 // pred_region
        %230 = vst [vmem:[#allocation2] sm:$0xf] 0
        %231 = vst [vmem:[#allocation2 + $0x4] sm:$0x1] 0
        %232 = vst [vmem:[#allocation2 + $0x8] sm:$0xf] 0
        %233 = vst [vmem:[#allocation2 + $0xc] sm:$0x1] 0
        %234 = vst [vmem:[#allocation2 + $0x10] sm:$0xf] 0
        %235 = vst [vmem:[#allocation2 + $0x14] sm:$0x1] 0
        %236 = vst [vmem:[#allocation2 + $0x18] sm:$0xf] 0
        %237 = vst [vmem:[#allocation2 + $0x1c] sm:$0x1] 0
        %238 = vst [vmem:[#allocation2 + $0x20] sm:$0xf] 0
        %239 = vst [vmem:[#allocation2 + $0x24] sm:$0x1] 0
        %240 = vst [vmem:[#allocation2 + $0x28] sm:$0xf] 0
        %241 = vst [vmem:[#allocation2 + $0x2c] sm:$0x1] 0
        %242 = vst [vmem:[#allocation2 + $0x30] sm:$0xf] 0
        %243 = vst [vmem:[#allocation2 + $0x34] sm:$0x1] 0
        %244 = vst [vmem:[#allocation2 + $0x38] sm:$0xf] 0
        %245 = vst [vmem:[#allocation2 + $0x3c] sm:$0x1] 0
        %246 = vst [vmem:[#allocation2 + $0x40] sm:$0xf] 0
        %247 = vst [vmem:[#allocation2 + $0x44] sm:$0x1] 0
        %248 = vst [vmem:[#allocation2 + $0x48] sm:$0xf] 0
        %249 = vst [vmem:[#allocation2 + $0x4c] sm:$0x1] 0
        %250 = vst [vmem:[#allocation3] sm:$0xf] 0
        %251 = vst [vmem:[#allocation3 + $0x4] sm:$0x1] 0
        %252 = vst [vmem:[#allocation3 + $0x8] sm:$0xf] 0
        %253 = vst [vmem:[#allocation3 + $0xc] sm:$0x1] 0
        %254 = vst [vmem:[#allocation3 + $0x10] sm:$0xf] 0
        %255 = vst [vmem:[#allocation3 + $0x14] sm:$0x1] 0
        %256 = vst [vmem:[#allocation3 + $0x18] sm:$0xf] 0
        %257 = vst [vmem:[#allocation3 + $0x1c] sm:$0x1] 0
        %258 = vst [vmem:[#allocation3 + $0x20] sm:$0xf] 0
        %259 = vst [vmem:[#allocation3 + $0x24] sm:$0x1] 0
        %260 = vst [vmem:[#allocation3 + $0x28] sm:$0xf] 0
        %261 = vst [vmem:[#allocation3 + $0x2c] sm:$0x1] 0
        %262 = vst [vmem:[#allocation3 + $0x30] sm:$0xf] 0
        %263 = vst [vmem:[#allocation3 + $0x34] sm:$0x1] 0
        %264 = vst [vmem:[#allocation3 + $0x38] sm:$0xf] 0
        %265 = vst [vmem:[#allocation3 + $0x3c] sm:$0x1] 0
        %266 = vst [vmem:[#allocation3 + $0x40] sm:$0xf] 0
        %267 = vst [vmem:[#allocation3 + $0x44] sm:$0x1] 0
        %268 = vst [vmem:[#allocation3 + $0x48] sm:$0xf] 0
        %269 = vst [vmem:[#allocation3 + $0x4c] sm:$0x1] 0
      $region44: #{down_forward.1} parent=39 // pred_fallthru
        _
      %v270 = vld [vmem:[%s219] sm:$0xf]
      %v271 = vld [vmem:[%s219 + $0x4] sm:$0xf]
      %v272 = vld [vmem:[%s219 + $0x8] sm:$0xf]
      %v273 = vld [vmem:[%s219 + $0xc] sm:$0xf]
      %v274 = vld [vmem:[%s219 + $0x10] sm:$0xf]
      %v275 = vld [vmem:[%s219 + $0x14] sm:$0xf]
      %v276 = vld [vmem:[%s219 + $0x18] sm:$0xf]
      %v277 = vld [vmem:[%s219 + $0x1c] sm:$0xf]
      %v278 = vld [vmem:[%s219 + $0x20] sm:$0xf]
      %v279 = vld [vmem:[%s219 + $0x24] sm:$0xf]
      %v280 = vld [vmem:[%s219 + $0x28] sm:$0xf]
      %v281 = vld [vmem:[%s219 + $0x2c] sm:$0xf]
      %v282 = vld [vmem:[%s219 + $0x30] sm:$0xf]
      %v283 = vld [vmem:[%s219 + $0x34] sm:$0xf]
      %v284 = vld [vmem:[%s219 + $0x38] sm:$0xf]
      %v285 = vld [vmem:[%s219 + $0x3c] sm:$0xf]
      %s286 = scalar_lea.vmem %s219, 64
      %v287 = vld [vmem:[%s286] sm:$0xf]
      %v288 = vld [vmem:[%s286 + $0x4] sm:$0xf]
      %v289 = vld [vmem:[%s286 + $0x8] sm:$0xf]
      %v290 = vld [vmem:[%s286 + $0xc] sm:$0xf]
      %v291 = vld [vmem:[%s286 + $0x10] sm:$0xf]
      %v292 = vld [vmem:[%s286 + $0x14] sm:$0xf]
      %v293 = vld [vmem:[%s286 + $0x18] sm:$0xf]
      %v294 = vld [vmem:[%s286 + $0x1c] sm:$0xf]
      %v295 = vld [vmem:[%s286 + $0x20] sm:$0xf]
      %v296 = vld [vmem:[%s286 + $0x24] sm:$0xf]
      %v297 = vld [vmem:[%s286 + $0x28] sm:$0xf]
      %v298 = vld [vmem:[%s286 + $0x2c] sm:$0xf]
      %v299 = vld [vmem:[%s286 + $0x30] sm:$0xf]
      %v300 = vld [vmem:[%s286 + $0x34] sm:$0xf]
      %v301 = vld [vmem:[%s286 + $0x38] sm:$0xf]
      %v302 = vld [vmem:[%s286 + $0x3c] sm:$0xf]
      %v303 = vunpack.c.l.bf16 %v270
      %v304 = vunpack.c.l.bf16 %v271
      %v305 = vunpack.c.l.bf16 %v272
      %v306 = vunpack.c.l.bf16 %v273
      %v307 = vunpack.c.l.bf16 %v274
      %v308 = vunpack.c.l.bf16 %v275
      %v309 = vunpack.c.l.bf16 %v276
      %v310 = vunpack.c.l.bf16 %v277
      %v311 = vunpack.c.l.bf16 %v278
      %v312 = vunpack.c.l.bf16 %v279
      %v313 = vunpack.c.l.bf16 %v280
      %v314 = vunpack.c.l.bf16 %v281
      %v315 = vunpack.c.l.bf16 %v282
      %v316 = vunpack.c.l.bf16 %v283
      %v317 = vunpack.c.l.bf16 %v284
      %v318 = vunpack.c.l.bf16 %v285
      %v319 = vunpack.c.l.bf16 %v287
      %v320 = vunpack.c.l.bf16 %v288
      %v321 = vunpack.c.l.bf16 %v289
      %v322 = vunpack.c.l.bf16 %v290
      %v323 = vunpack.c.l.bf16 %v291
      %v324 = vunpack.c.l.bf16 %v292
      %v325 = vunpack.c.l.bf16 %v293
      %v326 = vunpack.c.l.bf16 %v294
      %v327 = vunpack.c.l.bf16 %v295
      %v328 = vunpack.c.l.bf16 %v296
      %v329 = vunpack.c.l.bf16 %v297
      %v330 = vunpack.c.l.bf16 %v298
      %v331 = vunpack.c.l.bf16 %v299
      %v332 = vunpack.c.l.bf16 %v300
      %v333 = vunpack.c.l.bf16 %v301
      %v334 = vunpack.c.l.bf16 %v302
      %v335 = vmax.f32 %v303, %v319
      %v336 = vmax.f32 %v304, %v320
      %v337 = vmax.f32 %v305, %v321
      %v338 = vmax.f32 %v306, %v322
      %v339 = vmax.f32 %v307, %v323
      %v340 = vmax.f32 %v308, %v324
      %v341 = vmax.f32 %v309, %v325
      %v342 = vmax.f32 %v310, %v326
      %v343 = vmax.f32 %v311, %v327
      %v344 = vmax.f32 %v312, %v328
      %v345 = vmax.f32 %v313, %v329
      %v346 = vmax.f32 %v314, %v330
      %v347 = vmax.f32 %v315, %v331
      %v348 = vmax.f32 %v316, %v332
      %v349 = vmax.f32 %v317, %v333
      %v350 = vmax.f32 %v318, %v334
      %v351 = vpack.c.bf16 %v335, %v335
      %v352 = vpack.c.bf16 %v336, %v336
      %v353 = vpack.c.bf16 %v337, %v337
      %v354 = vpack.c.bf16 %v338, %v338
      %v355 = vpack.c.bf16 %v339, %v339
      %v356 = vpack.c.bf16 %v340, %v340
      %v357 = vpack.c.bf16 %v341, %v341
      %v358 = vpack.c.bf16 %v342, %v342
      %v359 = vpack.c.bf16 %v343, %v343
      %v360 = vpack.c.bf16 %v344, %v344
      %v361 = vpack.c.bf16 %v345, %v345
      %v362 = vpack.c.bf16 %v346, %v346
      %v363 = vpack.c.bf16 %v347, %v347
      %v364 = vpack.c.bf16 %v348, %v348
      %v365 = vpack.c.bf16 %v349, %v349
      %v366 = vpack.c.bf16 %v350, %v350
      %v367 = vunpack.c.l.bf16 %v351
      %v368 = vunpack.c.l.bf16 %v352
      %v369 = vunpack.c.l.bf16 %v353
      %v370 = vunpack.c.l.bf16 %v354
      %v371 = vunpack.c.l.bf16 %v355
      %v372 = vunpack.c.l.bf16 %v356
      %v373 = vunpack.c.l.bf16 %v357
      %v374 = vunpack.c.l.bf16 %v358
      %v375 = vunpack.c.l.bf16 %v359
      %v376 = vunpack.c.l.bf16 %v360
      %v377 = vunpack.c.l.bf16 %v361
      %v378 = vunpack.c.l.bf16 %v362
      %v379 = vunpack.c.l.bf16 %v363
      %v380 = vunpack.c.l.bf16 %v364
      %v381 = vunpack.c.l.bf16 %v365
      %v382 = vunpack.c.l.bf16 %v366
      %v383 = vmax.f32 %v367, %v368
      %v384 = vmax.f32 %v369, %v370
      %v385 = vmax.f32 %v371, %v372
      %v386 = vmax.f32 %v373, %v374
      %v387 = vmax.f32 %v375, %v376
      %v388 = vmax.f32 %v377, %v378
      %v389 = vmax.f32 %v379, %v380
      %v390 = vmax.f32 %v381, %v382
      %v391 = vpack.c.bf16 %v383, %v383
      %v392 = vpack.c.bf16 %v384, %v384
      %v393 = vpack.c.bf16 %v385, %v385
      %v394 = vpack.c.bf16 %v386, %v386
      %v395 = vpack.c.bf16 %v387, %v387
      %v396 = vpack.c.bf16 %v388, %v388
      %v397 = vpack.c.bf16 %v389, %v389
      %v398 = vpack.c.bf16 %v390, %v390
      %v400 = vshrl.u32 %v391, 16
      %v402 = vrot.slane %v400, 7
      %v403 = vshll.u32 %v391, 16
      %v405 = vor.u32 %v402, %v403
      %v406 = vrot.slane %v402, 4
      %v408 = vshrl.u32 %v392, 16
      %v410 = vrot.slane %v408, 7
      %v411 = vshll.u32 %v392, 16
      %v413 = vor.u32 %v410, %v411
      %v414 = vrot.slane %v410, 4
      %v416 = vshrl.u32 %v393, 16
      %v418 = vrot.slane %v416, 7
      %v419 = vshll.u32 %v393, 16
      %v421 = vor.u32 %v418, %v419
      %v422 = vrot.slane %v418, 4
      %v424 = vshrl.u32 %v394, 16
      %v426 = vrot.slane %v424, 7
      %v427 = vshll.u32 %v394, 16
      %v429 = vor.u32 %v426, %v427
      %v430 = vrot.slane %v426, 4
      %v432 = vshrl.u32 %v395, 16
      %v434 = vrot.slane %v432, 7
      %v435 = vshll.u32 %v395, 16
      %v437 = vor.u32 %v434, %v435
      %v438 = vrot.slane %v434, 4
      %v440 = vshrl.u32 %v396, 16
      %v442 = vrot.slane %v440, 7
      %v443 = vshll.u32 %v396, 16
      %v445 = vor.u32 %v442, %v443
      %v446 = vrot.slane %v442, 4
      %v448 = vshrl.u32 %v397, 16
      %v450 = vrot.slane %v448, 7
      %v451 = vshll.u32 %v397, 16
      %v453 = vor.u32 %v450, %v451
      %v454 = vrot.slane %v450, 4
      %v456 = vshrl.u32 %v398, 16
      %v458 = vrot.slane %v456, 7
      %v459 = vshll.u32 %v398, 16
      %v461 = vor.u32 %v458, %v459
      %v462 = vrot.slane %v458, 4
      %s479 = scalar_lea.vmem [#allocation2], 8
      %vm480 = vcmask 1043456
      %vm481 = vsmask.f32 7938
      %vm482 = vmand %vm480, %vm481
      %v483 = vld [vmem:[%s479] sm:$0xf]
      %v484 = vsel %vm482, %v405, %v483
      %485 = vst [vmem:[%s479] sm:$0xf] %v484
      %vm486 = vcmask 1040384
      %vm487 = vsmask.f32 256
      %vm488 = vmand %vm486, %vm487
      %v489 = vld [vmem:[%s479 + $0x4] sm:$0x1]
      %v490 = vsel %vm488, %v406, %v489
      %491 = vst [vmem:[%s479 + $0x4] sm:$0x1] %v490
      %v492 = vld [vmem:[%s479 + $0x8] sm:$0xf]
      %v493 = vsel %vm482, %v413, %v492
      %494 = vst [vmem:[%s479 + $0x8] sm:$0xf] %v493
      %v495 = vld [vmem:[%s479 + $0xc] sm:$0x1]
      %v496 = vsel %vm488, %v414, %v495
      %497 = vst [vmem:[%s479 + $0xc] sm:$0x1] %v496
      %v498 = vld [vmem:[%s479 + $0x10] sm:$0xf]
      %v499 = vsel %vm482, %v421, %v498
      %500 = vst [vmem:[%s479 + $0x10] sm:$0xf] %v499
      %v501 = vld [vmem:[%s479 + $0x14] sm:$0x1]
      %v502 = vsel %vm488, %v422, %v501
      %503 = vst [vmem:[%s479 + $0x14] sm:$0x1] %v502
      %v504 = vld [vmem:[%s479 + $0x18] sm:$0xf]
      %v505 = vsel %vm482, %v429, %v504
      %506 = vst [vmem:[%s479 + $0x18] sm:$0xf] %v505
      %v507 = vld [vmem:[%s479 + $0x1c] sm:$0x1]
      %v508 = vsel %vm488, %v430, %v507
      %509 = vst [vmem:[%s479 + $0x1c] sm:$0x1] %v508
      %v510 = vld [vmem:[%s479 + $0x20] sm:$0xf]
      %v511 = vsel %vm482, %v437, %v510
      %512 = vst [vmem:[%s479 + $0x20] sm:$0xf] %v511
      %v513 = vld [vmem:[%s479 + $0x24] sm:$0x1]
      %v514 = vsel %vm488, %v438, %v513
      %515 = vst [vmem:[%s479 + $0x24] sm:$0x1] %v514
      %v516 = vld [vmem:[%s479 + $0x28] sm:$0xf]
      %v517 = vsel %vm482, %v445, %v516
      %518 = vst [vmem:[%s479 + $0x28] sm:$0xf] %v517
      %v519 = vld [vmem:[%s479 + $0x2c] sm:$0x1]
      %v520 = vsel %vm488, %v446, %v519
      %521 = vst [vmem:[%s479 + $0x2c] sm:$0x1] %v520
      %v522 = vld [vmem:[%s479 + $0x30] sm:$0xf]
      %v523 = vsel %vm482, %v453, %v522
      %524 = vst [vmem:[%s479 + $0x30] sm:$0xf] %v523
      %v525 = vld [vmem:[%s479 + $0x34] sm:$0x1]
      %v526 = vsel %vm488, %v454, %v525
      %527 = vst [vmem:[%s479 + $0x34] sm:$0x1] %v526
      %v528 = vld [vmem:[%s479 + $0x38] sm:$0xf]
      %v529 = vsel %vm482, %v461, %v528
      %530 = vst [vmem:[%s479 + $0x38] sm:$0xf] %v529
      %v531 = vld [vmem:[%s479 + $0x3c] sm:$0x1]
      %v532 = vsel %vm488, %v462, %v531
      %533 = vst [vmem:[%s479 + $0x3c] sm:$0x1] %v532
      %v534 = vld [vmem:[#allocation2] sm:$0xf]
      %v535 = vld [vmem:[#allocation2 + $0x8] sm:$0xf]
      %v536 = vld [vmem:[#allocation2 + $0x10] sm:$0xf]
      %v537 = vld [vmem:[#allocation2 + $0x18] sm:$0xf]
      %v538 = vld [vmem:[#allocation2 + $0x20] sm:$0xf]
      %v539 = vld [vmem:[#allocation2 + $0x28] sm:$0xf]
      %v540 = vld [vmem:[#allocation2 + $0x30] sm:$0xf]
      %v541 = vld [vmem:[#allocation2 + $0x38] sm:$0xf]
      %v542 = vld [vmem:[%s1] sm:$0xf]
      %v543 = vld [vmem:[%s1 + $0x4] sm:$0xf]
      %v544 = vld [vmem:[%s1 + $0x8] sm:$0xf]
      %v545 = vld [vmem:[%s1 + $0xc] sm:$0xf]
      %v546 = vld [vmem:[%s1 + $0x10] sm:$0xf]
      %v547 = vld [vmem:[%s1 + $0x14] sm:$0xf]
      %v548 = vld [vmem:[%s1 + $0x18] sm:$0xf]
      %v549 = vld [vmem:[%s1 + $0x1c] sm:$0xf]
      %v550 = vld [vmem:[%s1 + $0x20] sm:$0xf]
      %v551 = vld [vmem:[%s1 + $0x24] sm:$0xf]
      %v552 = vld [vmem:[%s1 + $0x28] sm:$0xf]
      %v553 = vld [vmem:[%s1 + $0x2c] sm:$0xf]
      %v554 = vld [vmem:[%s1 + $0x30] sm:$0xf]
      %v555 = vld [vmem:[%s1 + $0x34] sm:$0xf]
      %v556 = vld [vmem:[%s1 + $0x38] sm:$0xf]
      %v557 = vld [vmem:[%s1 + $0x3c] sm:$0xf]
      %v558 = vld [vmem:[#allocation2 + $0x4] sm:$0x1]
      %v559 = vld [vmem:[#allocation2 + $0xc] sm:$0x1]
      %v560 = vld [vmem:[#allocation2 + $0x14] sm:$0x1]
      %v561 = vld [vmem:[#allocation2 + $0x1c] sm:$0x1]
      %v562 = vld [vmem:[#allocation2 + $0x24] sm:$0x1]
      %v563 = vld [vmem:[#allocation2 + $0x2c] sm:$0x1]
      %v564 = vld [vmem:[#allocation2 + $0x34] sm:$0x1]
      %v565 = vld [vmem:[#allocation2 + $0x3c] sm:$0x1]
      %vm566 = vsmask.f32 3328
      %vm567 = vsmask.f32 7440
      %vm568 = vmor %vm566, %vm567
      %v570 = vshrl.u32 %v534, 16
      %v572 = vrot.slane %v570, 4
      %v573 = vshll.u32 %v534, 16
      %v575 = vrot.slane %v573, 5
      %v576 = vor.u32 %v572, %v575
      %v577 = vrot.slane %v576, 4
      %v579 = vshll.u32 %v558, 16
      %v581 = vrot.slane %v579, 5
      %v582 = vsel %vm568, %v577, %v581
      %v584 = vshrl.u32 %v535, 16
      %v586 = vrot.slane %v584, 4
      %v587 = vshll.u32 %v535, 16
      %v589 = vrot.slane %v587, 5
      %v590 = vor.u32 %v586, %v589
      %v591 = vrot.slane %v590, 4
      %v593 = vshll.u32 %v559, 16
      %v595 = vrot.slane %v593, 5
      %v596 = vsel %vm568, %v591, %v595
      %v598 = vshrl.u32 %v536, 16
      %v600 = vrot.slane %v598, 4
      %v601 = vshll.u32 %v536, 16
      %v603 = vrot.slane %v601, 5
      %v604 = vor.u32 %v600, %v603
      %v605 = vrot.slane %v604, 4
      %v607 = vshll.u32 %v560, 16
      %v609 = vrot.slane %v607, 5
      %v610 = vsel %vm568, %v605, %v609
      %v612 = vshrl.u32 %v537, 16
      %v614 = vrot.slane %v612, 4
      %v615 = vshll.u32 %v537, 16
      %v617 = vrot.slane %v615, 5
      %v618 = vor.u32 %v614, %v617
      %v619 = vrot.slane %v618, 4
      %v621 = vshll.u32 %v561, 16
      %v623 = vrot.slane %v621, 5
      %v624 = vsel %vm568, %v619, %v623
      %v626 = vshrl.u32 %v538, 16
      %v628 = vrot.slane %v626, 4
      %v629 = vshll.u32 %v538, 16
      %v631 = vrot.slane %v629, 5
      %v632 = vor.u32 %v628, %v631
      %v633 = vrot.slane %v632, 4
      %v635 = vshll.u32 %v562, 16
      %v637 = vrot.slane %v635, 5
      %v638 = vsel %vm568, %v633, %v637
      %v640 = vshrl.u32 %v539, 16
      %v642 = vrot.slane %v640, 4
      %v643 = vshll.u32 %v539, 16
      %v645 = vrot.slane %v643, 5
      %v646 = vor.u32 %v642, %v645
      %v647 = vrot.slane %v646, 4
      %v649 = vshll.u32 %v563, 16
      %v651 = vrot.slane %v649, 5
      %v652 = vsel %vm568, %v647, %v651
      %v654 = vshrl.u32 %v540, 16
      %v656 = vrot.slane %v654, 4
      %v657 = vshll.u32 %v540, 16
      %v659 = vrot.slane %v657, 5
      %v660 = vor.u32 %v656, %v659
      %v661 = vrot.slane %v660, 4
      %v663 = vshll.u32 %v564, 16
      %v665 = vrot.slane %v663, 5
      %v666 = vsel %vm568, %v661, %v665
      %v668 = vshrl.u32 %v541, 16
      %v670 = vrot.slane %v668, 4
      %v671 = vshll.u32 %v541, 16
      %v673 = vrot.slane %v671, 5
      %v674 = vor.u32 %v670, %v673
      %v675 = vrot.slane %v674, 4
      %v677 = vshll.u32 %v565, 16
      %v679 = vrot.slane %v677, 5
      %v680 = vsel %vm568, %v675, %v679
      %s681 = scalar_lea.vmem %s1, 64
      %v682 = vld [vmem:[%s681] sm:$0xf]
      %v683 = vld [vmem:[%s681 + $0x4] sm:$0xf]
      %v684 = vld [vmem:[%s681 + $0x8] sm:$0xf]
      %v685 = vld [vmem:[%s681 + $0xc] sm:$0xf]
      %v686 = vld [vmem:[%s681 + $0x10] sm:$0xf]
      %v687 = vld [vmem:[%s681 + $0x14] sm:$0xf]
      %v688 = vld [vmem:[%s681 + $0x18] sm:$0xf]
      %v689 = vld [vmem:[%s681 + $0x1c] sm:$0xf]
      %v690 = vld [vmem:[%s681 + $0x20] sm:$0xf]
      %v691 = vld [vmem:[%s681 + $0x24] sm:$0xf]
      %v692 = vld [vmem:[%s681 + $0x28] sm:$0xf]
      %v693 = vld [vmem:[%s681 + $0x2c] sm:$0xf]
      %v694 = vld [vmem:[%s681 + $0x30] sm:$0xf]
      %v695 = vld [vmem:[%s681 + $0x34] sm:$0xf]
      %v696 = vld [vmem:[%s681 + $0x38] sm:$0xf]
      %v697 = vld [vmem:[%s681 + $0x3c] sm:$0xf]
      %v698 = vunpack.c.l.b16 %v582
      %v699 = vunpack.c.l.b16 %v596
      %v700 = vunpack.c.l.b16 %v610
      %v701 = vunpack.c.l.b16 %v624
      %v702 = vunpack.c.l.b16 %v638
      %v703 = vunpack.c.l.b16 %v652
      %v704 = vunpack.c.l.b16 %v666
      %v705 = vunpack.c.l.b16 %v680
      %v706 = vpack.c.b16 %v699, %v698
      %v707 = vpack.c.b16 %v701, %v700
      %v708 = vpack.c.b16 %v703, %v702
      %v709 = vpack.c.b16 %v705, %v704
      %v730 = vunpack.c.l.b16 %v682
      %v731 = vunpack.c.l.b16 %v683
      %v732 = vunpack.c.l.b16 %v684
      %v733 = vunpack.c.l.b16 %v685
      %v734 = vunpack.c.l.b16 %v686
      %v735 = vunpack.c.l.b16 %v687
      %v736 = vunpack.c.l.b16 %v688
      %v737 = vunpack.c.l.b16 %v689
      %v738 = vunpack.c.l.b16 %v690
      %v739 = vunpack.c.l.b16 %v691
      %v740 = vunpack.c.l.b16 %v692
      %v741 = vunpack.c.l.b16 %v693
      %v742 = vunpack.c.l.b16 %v694
      %v743 = vunpack.c.l.b16 %v695
      %v744 = vunpack.c.l.b16 %v696
      %v745 = vunpack.c.l.b16 %v697
      %v746 = vpack.c.b16 %v731, %v730
      %v747 = vpack.c.b16 %v733, %v732
      %v748 = vpack.c.b16 %v735, %v734
      %v749 = vpack.c.b16 %v737, %v736
      %v750 = vpack.c.b16 %v739, %v738
      %v751 = vpack.c.b16 %v741, %v740
      %v752 = vpack.c.b16 %v743, %v742
      %v753 = vpack.c.b16 %v745, %v744
      %762 = vmatpush.bf16.msra.mxu0 %v753
      %763 = vmatpush.bf16.msra.mxu0 %v752
      %764 = vmatpush.bf16.msra.mxu0 %v751
      %765 = vmatpush.bf16.msra.mxu0 %v750
      %766 = vmatpush.bf16.msra.mxu0 %v749
      %767 = vmatpush.bf16.msra.mxu0 %v748
      %768 = vmatpush.bf16.msra.mxu0 %v747
      %769 = vmatpush.bf16.msra.mxu0 %v746
      %770 = vmatmul.bf16.gmra.mxu0 %v706
      %v771 = vpop.f32.mrf.mxu0
      %v772 = vadd.f32 0.0, %v771
      %v773 = vpop.f32.mrf.mxu0
      %v774 = vadd.f32 0.0, %v773
      %775 = vmatmul.bf16.gmra.mxu0 %v707
      %v776 = vpop.f32.mrf.mxu0
      %v777 = vadd.f32 0.0, %v776
      %v778 = vpop.f32.mrf.mxu0
      %v779 = vadd.f32 0.0, %v778
      %780 = vmatmul.bf16.gmra.mxu0 %v708
      %v781 = vpop.f32.mrf.mxu0
      %v782 = vadd.f32 0.0, %v781
      %v783 = vpop.f32.mrf.mxu0
      %v784 = vadd.f32 0.0, %v783
      %785 = vmatmul.bf16.gmra.mxu0 %v709
      %v786 = vpop.f32.mrf.mxu0
      %v787 = vadd.f32 0.0, %v786
      %v788 = vpop.f32.mrf.mxu0
      %v789 = vadd.f32 0.0, %v788
      %790 = vdwg.mxu0
      %v799 = vunpack.c.l.b16 %v534
      %v800 = vunpack.c.l.b16 %v535
      %v801 = vunpack.c.l.b16 %v536
      %v802 = vunpack.c.l.b16 %v537
      %v803 = vunpack.c.l.b16 %v538
      %v804 = vunpack.c.l.b16 %v539
      %v805 = vunpack.c.l.b16 %v540
      %v806 = vunpack.c.l.b16 %v541
      %v807 = vpack.c.b16 %v800, %v799
      %v808 = vpack.c.b16 %v802, %v801
      %v809 = vpack.c.b16 %v804, %v803
      %v810 = vpack.c.b16 %v806, %v805
      %v831 = vunpack.c.l.b16 %v542
      %v832 = vunpack.c.l.b16 %v543
      %v833 = vunpack.c.l.b16 %v544
      %v834 = vunpack.c.l.b16 %v545
      %v835 = vunpack.c.l.b16 %v546
      %v836 = vunpack.c.l.b16 %v547
      %v837 = vunpack.c.l.b16 %v548
      %v838 = vunpack.c.l.b16 %v549
      %v839 = vunpack.c.l.b16 %v550
      %v840 = vunpack.c.l.b16 %v551
      %v841 = vunpack.c.l.b16 %v552
      %v842 = vunpack.c.l.b16 %v553
      %v843 = vunpack.c.l.b16 %v554
      %v844 = vunpack.c.l.b16 %v555
      %v845 = vunpack.c.l.b16 %v556
      %v846 = vunpack.c.l.b16 %v557
      %v847 = vpack.c.b16 %v832, %v831
      %v848 = vpack.c.b16 %v834, %v833
      %v849 = vpack.c.b16 %v836, %v835
      %v850 = vpack.c.b16 %v838, %v837
      %v851 = vpack.c.b16 %v840, %v839
      %v852 = vpack.c.b16 %v842, %v841
      %v853 = vpack.c.b16 %v844, %v843
      %v854 = vpack.c.b16 %v846, %v845
      %863 = vmatpush.bf16.msra.mxu0 %v854
      %864 = vmatpush.bf16.msra.mxu0 %v853
      %865 = vmatpush.bf16.msra.mxu0 %v852
      %866 = vmatpush.bf16.msra.mxu0 %v851
      %867 = vmatpush.bf16.msra.mxu0 %v850
      %868 = vmatpush.bf16.msra.mxu0 %v849
      %869 = vmatpush.bf16.msra.mxu0 %v848
      %870 = vmatpush.bf16.msra.mxu0 %v847
      %871 = vmatmul.bf16.gmra.mxu0 %v807
      %v872 = vpop.f32.mrf.mxu0
      %v873 = vadd.f32 %v772, %v872
      %v874 = vpop.f32.mrf.mxu0
      %v875 = vadd.f32 %v774, %v874
      %876 = vmatmul.bf16.gmra.mxu0 %v808
      %v877 = vpop.f32.mrf.mxu0
      %v878 = vadd.f32 %v777, %v877
      %v879 = vpop.f32.mrf.mxu0
      %v880 = vadd.f32 %v779, %v879
      %881 = vmatmul.bf16.gmra.mxu0 %v809
      %v882 = vpop.f32.mrf.mxu0
      %v883 = vadd.f32 %v782, %v882
      %v884 = vpop.f32.mrf.mxu0
      %v885 = vadd.f32 %v784, %v884
      %886 = vmatmul.bf16.gmra.mxu0 %v810
      %v887 = vpop.f32.mrf.mxu0
      %v888 = vadd.f32 %v787, %v887
      %v889 = vpop.f32.mrf.mxu0
      %v890 = vadd.f32 %v789, %v889
      %891 = vdwg.mxu0
      %v892 = vld [vmem:[#allocation2] sm:$0xe]
      %v893 = vld [vmem:[#allocation2 + $0x8] sm:$0xe]
      %v894 = vld [vmem:[#allocation2 + $0x10] sm:$0xe]
      %v895 = vld [vmem:[#allocation2 + $0x18] sm:$0xe]
      %v896 = vld [vmem:[#allocation2 + $0x20] sm:$0xe]
      %v897 = vld [vmem:[#allocation2 + $0x28] sm:$0xe]
      %v898 = vld [vmem:[#allocation2 + $0x30] sm:$0xe]
      %v899 = vld [vmem:[#allocation2 + $0x38] sm:$0xe]
      %vm916 = vcmask 1042432
      %vm917 = vcmask 1046532
      %vm918 = vmor %vm916, %vm917
      %v919 = vrot.slane %v892, 5
      %v920 = vrot.slane %v919, 4
      %v921 = vrot.slane %v558, 5
      %v922 = vsel %vm918, %v920, %v921
      %v923 = vrot.slane %v893, 5
      %v924 = vrot.slane %v923, 4
      %v925 = vrot.slane %v559, 5
      %v926 = vsel %vm918, %v924, %v925
      %v927 = vrot.slane %v894, 5
      %v928 = vrot.slane %v927, 4
      %v929 = vrot.slane %v560, 5
      %v930 = vsel %vm918, %v928, %v929
      %v931 = vrot.slane %v895, 5
      %v932 = vrot.slane %v931, 4
      %v933 = vrot.slane %v561, 5
      %v934 = vsel %vm918, %v932, %v933
      %v935 = vrot.slane %v896, 5
      %v936 = vrot.slane %v935, 4
      %v937 = vrot.slane %v562, 5
      %v938 = vsel %vm918, %v936, %v937
      %v939 = vrot.slane %v897, 5
      %v940 = vrot.slane %v939, 4
      %v941 = vrot.slane %v563, 5
      %v942 = vsel %vm918, %v940, %v941
      %v943 = vrot.slane %v898, 5
      %v944 = vrot.slane %v943, 4
      %v945 = vrot.slane %v564, 5
      %v946 = vsel %vm918, %v944, %v945
      %v947 = vrot.slane %v899, 5
      %v948 = vrot.slane %v947, 4
      %v949 = vrot.slane %v565, 5
      %v950 = vsel %vm918, %v948, %v949
      %s951 = scalar_lea.vmem %s1, 128
      %v952 = vld [vmem:[%s951] sm:$0xf]
      %v953 = vld [vmem:[%s951 + $0x4] sm:$0xf]
      %v954 = vld [vmem:[%s951 + $0x8] sm:$0xf]
      %v955 = vld [vmem:[%s951 + $0xc] sm:$0xf]
      %v956 = vld [vmem:[%s951 + $0x10] sm:$0xf]
      %v957 = vld [vmem:[%s951 + $0x14] sm:$0xf]
      %v958 = vld [vmem:[%s951 + $0x18] sm:$0xf]
      %v959 = vld [vmem:[%s951 + $0x1c] sm:$0xf]
      %v960 = vld [vmem:[%s951 + $0x20] sm:$0xf]
      %v961 = vld [vmem:[%s951 + $0x24] sm:$0xf]
      %v962 = vld [vmem:[%s951 + $0x28] sm:$0xf]
      %v963 = vld [vmem:[%s951 + $0x2c] sm:$0xf]
      %v964 = vld [vmem:[%s951 + $0x30] sm:$0xf]
      %v965 = vld [vmem:[%s951 + $0x34] sm:$0xf]
      %v966 = vld [vmem:[%s951 + $0x38] sm:$0xf]
      %v967 = vld [vmem:[%s951 + $0x3c] sm:$0xf]
      %v968 = vunpack.c.l.b16 %v922
      %v969 = vunpack.c.l.b16 %v926
      %v970 = vunpack.c.l.b16 %v930
      %v971 = vunpack.c.l.b16 %v934
      %v972 = vunpack.c.l.b16 %v938
      %v973 = vunpack.c.l.b16 %v942
      %v974 = vunpack.c.l.b16 %v946
      %v975 = vunpack.c.l.b16 %v950
      %v976 = vpack.c.b16 %v969, %v968
      %v977 = vpack.c.b16 %v971, %v970
      %v978 = vpack.c.b16 %v973, %v972
      %v979 = vpack.c.b16 %v975, %v974
      %v1000 = vunpack.c.l.b16 %v952
      %v1001 = vunpack.c.l.b16 %v953
      %v1002 = vunpack.c.l.b16 %v954
      %v1003 = vunpack.c.l.b16 %v955
      %v1004 = vunpack.c.l.b16 %v956
      %v1005 = vunpack.c.l.b16 %v957
      %v1006 = vunpack.c.l.b16 %v958
      %v1007 = vunpack.c.l.b16 %v959
      %v1008 = vunpack.c.l.b16 %v960
      %v1009 = vunpack.c.l.b16 %v961
      %v1010 = vunpack.c.l.b16 %v962
      %v1011 = vunpack.c.l.b16 %v963
      %v1012 = vunpack.c.l.b16 %v964
      %v1013 = vunpack.c.l.b16 %v965
      %v1014 = vunpack.c.l.b16 %v966
      %v1015 = vunpack.c.l.b16 %v967
      %v1016 = vpack.c.b16 %v1001, %v1000
      %v1017 = vpack.c.b16 %v1003, %v1002
      %v1018 = vpack.c.b16 %v1005, %v1004
      %v1019 = vpack.c.b16 %v1007, %v1006
      %v1020 = vpack.c.b16 %v1009, %v1008
      %v1021 = vpack.c.b16 %v1011, %v1010
      %v1022 = vpack.c.b16 %v1013, %v1012
      %v1023 = vpack.c.b16 %v1015, %v1014
      %1032 = vmatpush.bf16.msra.mxu0 %v1023
      %1033 = vmatpush.bf16.msra.mxu0 %v1022
      %1034 = vmatpush.bf16.msra.mxu0 %v1021
      %1035 = vmatpush.bf16.msra.mxu0 %v1020
      %1036 = vmatpush.bf16.msra.mxu0 %v1019
      %1037 = vmatpush.bf16.msra.mxu0 %v1018
      %1038 = vmatpush.bf16.msra.mxu0 %v1017
      %1039 = vmatpush.bf16.msra.mxu0 %v1016
      %1040 = vmatmul.bf16.gmra.mxu0 %v976
      %v1041 = vpop.f32.mrf.mxu0
      %v1042 = vadd.f32 0.0, %v1041
      %v1043 = vpop.f32.mrf.mxu0
      %v1044 = vadd.f32 0.0, %v1043
      %1045 = vmatmul.bf16.gmra.mxu0 %v977
      %v1046 = vpop.f32.mrf.mxu0
      %v1047 = vadd.f32 0.0, %v1046
      %v1048 = vpop.f32.mrf.mxu0
      %v1049 = vadd.f32 0.0, %v1048
      %1050 = vmatmul.bf16.gmra.mxu0 %v978
      %v1051 = vpop.f32.mrf.mxu0
      %v1052 = vadd.f32 0.0, %v1051
      %v1053 = vpop.f32.mrf.mxu0
      %v1054 = vadd.f32 0.0, %v1053
      %1055 = vmatmul.bf16.gmra.mxu0 %v979
      %v1056 = vpop.f32.mrf.mxu0
      %v1057 = vadd.f32 0.0, %v1056
      %v1058 = vpop.f32.mrf.mxu0
      %v1059 = vadd.f32 0.0, %v1058
      %1060 = vdwg.mxu0
      %v1061 = vadd.f32 %v873, %v1042
      %v1062 = vadd.f32 %v875, %v1044
      %v1063 = vadd.f32 %v878, %v1047
      %v1064 = vadd.f32 %v880, %v1049
      %v1065 = vadd.f32 %v883, %v1052
      %v1066 = vadd.f32 %v885, %v1054
      %v1067 = vadd.f32 %v888, %v1057
      %v1068 = vadd.f32 %v890, %v1059
      %v1069 = vld [vmem:[%s479] sm:$0xf]
      %v1070 = vld [vmem:[%s479 + $0x8] sm:$0xf]
      %v1071 = vld [vmem:[%s479 + $0x10] sm:$0xf]
      %v1072 = vld [vmem:[%s479 + $0x18] sm:$0xf]
      %v1073 = vld [vmem:[%s479 + $0x20] sm:$0xf]
      %v1074 = vld [vmem:[%s479 + $0x28] sm:$0xf]
      %v1075 = vld [vmem:[%s479 + $0x30] sm:$0xf]
      %v1076 = vld [vmem:[%s479 + $0x38] sm:$0xf]
      %s1077 = scalar_lea.vmem %s1, 192
      %v1078 = vld [vmem:[%s1077] sm:$0xf]
      %v1079 = vld [vmem:[%s1077 + $0x4] sm:$0xf]
      %v1080 = vld [vmem:[%s1077 + $0x8] sm:$0xf]
      %v1081 = vld [vmem:[%s1077 + $0xc] sm:$0xf]
      %v1082 = vld [vmem:[%s1077 + $0x10] sm:$0xf]
      %v1083 = vld [vmem:[%s1077 + $0x14] sm:$0xf]
      %v1084 = vld [vmem:[%s1077 + $0x18] sm:$0xf]
      %v1085 = vld [vmem:[%s1077 + $0x1c] sm:$0xf]
      %v1086 = vld [vmem:[%s1077 + $0x20] sm:$0xf]
      %v1087 = vld [vmem:[%s1077 + $0x24] sm:$0xf]
      %v1088 = vld [vmem:[%s1077 + $0x28] sm:$0xf]
      %v1089 = vld [vmem:[%s1077 + $0x2c] sm:$0xf]
      %v1090 = vld [vmem:[%s1077 + $0x30] sm:$0xf]
      %v1091 = vld [vmem:[%s1077 + $0x34] sm:$0xf]
      %v1092 = vld [vmem:[%s1077 + $0x38] sm:$0xf]
      %v1093 = vld [vmem:[%s1077 + $0x3c] sm:$0xf]
      %v1102 = vunpack.c.l.b16 %v1069
      %v1103 = vunpack.c.l.b16 %v1070
      %v1104 = vunpack.c.l.b16 %v1071
      %v1105 = vunpack.c.l.b16 %v1072
      %v1106 = vunpack.c.l.b16 %v1073
      %v1107 = vunpack.c.l.b16 %v1074
      %v1108 = vunpack.c.l.b16 %v1075
      %v1109 = vunpack.c.l.b16 %v1076
      %v1110 = vpack.c.b16 %v1103, %v1102
      %v1111 = vpack.c.b16 %v1105, %v1104
      %v1112 = vpack.c.b16 %v1107, %v1106
      %v1113 = vpack.c.b16 %v1109, %v1108
      %v1134 = vunpack.c.l.b16 %v1078
      %v1135 = vunpack.c.l.b16 %v1079
      %v1136 = vunpack.c.l.b16 %v1080
      %v1137 = vunpack.c.l.b16 %v1081
      %v1138 = vunpack.c.l.b16 %v1082
      %v1139 = vunpack.c.l.b16 %v1083
      %v1140 = vunpack.c.l.b16 %v1084
      %v1141 = vunpack.c.l.b16 %v1085
      %v1142 = vunpack.c.l.b16 %v1086
      %v1143 = vunpack.c.l.b16 %v1087
      %v1144 = vunpack.c.l.b16 %v1088
      %v1145 = vunpack.c.l.b16 %v1089
      %v1146 = vunpack.c.l.b16 %v1090
      %v1147 = vunpack.c.l.b16 %v1091
      %v1148 = vunpack.c.l.b16 %v1092
      %v1149 = vunpack.c.l.b16 %v1093
      %v1150 = vpack.c.b16 %v1135, %v1134
      %v1151 = vpack.c.b16 %v1137, %v1136
      %v1152 = vpack.c.b16 %v1139, %v1138
      %v1153 = vpack.c.b16 %v1141, %v1140
      %v1154 = vpack.c.b16 %v1143, %v1142
      %v1155 = vpack.c.b16 %v1145, %v1144
      %v1156 = vpack.c.b16 %v1147, %v1146
      %v1157 = vpack.c.b16 %v1149, %v1148
      %1166 = vmatpush.bf16.msra.mxu0 %v1157
      %1167 = vmatpush.bf16.msra.mxu0 %v1156
      %1168 = vmatpush.bf16.msra.mxu0 %v1155
      %1169 = vmatpush.bf16.msra.mxu0 %v1154
      %1170 = vmatpush.bf16.msra.mxu0 %v1153
      %1171 = vmatpush.bf16.msra.mxu0 %v1152
      %1172 = vmatpush.bf16.msra.mxu0 %v1151
      %1173 = vmatpush.bf16.msra.mxu0 %v1150
      %1174 = vmatmul.bf16.gmra.mxu0 %v1110
      %v1175 = vpop.f32.mrf.mxu0
      %v1176 = vadd.f32 0.0, %v1175
      %v1177 = vpop.f32.mrf.mxu0
      %v1178 = vadd.f32 0.0, %v1177
      %1179 = vmatmul.bf16.gmra.mxu0 %v1111
      %v1180 = vpop.f32.mrf.mxu0
      %v1181 = vadd.f32 0.0, %v1180
      %v1182 = vpop.f32.mrf.mxu0
      %v1183 = vadd.f32 0.0, %v1182
      %1184 = vmatmul.bf16.gmra.mxu0 %v1112
      %v1185 = vpop.f32.mrf.mxu0
      %v1186 = vadd.f32 0.0, %v1185
      %v1187 = vpop.f32.mrf.mxu0
      %v1188 = vadd.f32 0.0, %v1187
      %1189 = vmatmul.bf16.gmra.mxu0 %v1113
      %v1190 = vpop.f32.mrf.mxu0
      %v1191 = vadd.f32 0.0, %v1190
      %v1192 = vpop.f32.mrf.mxu0
      %v1193 = vadd.f32 0.0, %v1192
      %1194 = vdwg.mxu0
      %v1195 = vadd.f32 %v1061, %v1176
      %v1196 = vadd.f32 %v1062, %v1178
      %v1197 = vadd.f32 %v1063, %v1181
      %v1198 = vadd.f32 %v1064, %v1183
      %v1199 = vadd.f32 %v1065, %v1186
      %v1200 = vadd.f32 %v1066, %v1188
      %v1201 = vadd.f32 %v1067, %v1191
      %v1202 = vadd.f32 %v1068, %v1193
      %v1203 = vld [vmem:[%s479] sm:$0xf]
      %v1204 = vld [vmem:[%s479 + $0x4] sm:$0x1]
      %v1205 = vld [vmem:[%s479 + $0x8] sm:$0xf]
      %v1206 = vld [vmem:[%s479 + $0xc] sm:$0x1]
      %v1207 = vld [vmem:[%s479 + $0x10] sm:$0xf]
      %v1208 = vld [vmem:[%s479 + $0x14] sm:$0x1]
      %v1209 = vld [vmem:[%s479 + $0x18] sm:$0xf]
      %v1210 = vld [vmem:[%s479 + $0x1c] sm:$0x1]
      %v1211 = vld [vmem:[%s479 + $0x20] sm:$0xf]
      %v1212 = vld [vmem:[%s479 + $0x24] sm:$0x1]
      %v1213 = vld [vmem:[%s479 + $0x28] sm:$0xf]
      %v1214 = vld [vmem:[%s479 + $0x2c] sm:$0x1]
      %v1215 = vld [vmem:[%s479 + $0x30] sm:$0xf]
      %v1216 = vld [vmem:[%s479 + $0x34] sm:$0x1]
      %v1217 = vld [vmem:[%s479 + $0x38] sm:$0xf]
      %v1218 = vld [vmem:[%s479 + $0x3c] sm:$0x1]
      %v1220 = vshrl.u32 %v1203, 16
      %v1222 = vrot.slane %v1220, 4
      %v1223 = vshll.u32 %v1203, 16
      %v1225 = vrot.slane %v1223, 5
      %v1226 = vor.u32 %v1222, %v1225
      %v1227 = vrot.slane %v1226, 4
      %v1229 = vshll.u32 %v1204, 16
      %v1231 = vrot.slane %v1229, 5
      %v1232 = vsel %vm568, %v1227, %v1231
      %v1234 = vshrl.u32 %v1205, 16
      %v1236 = vrot.slane %v1234, 4
      %v1237 = vshll.u32 %v1205, 16
      %v1239 = vrot.slane %v1237, 5
      %v1240 = vor.u32 %v1236, %v1239
      %v1241 = vrot.slane %v1240, 4
      %v1243 = vshll.u32 %v1206, 16
      %v1245 = vrot.slane %v1243, 5
      %v1246 = vsel %vm568, %v1241, %v1245
      %v1248 = vshrl.u32 %v1207, 16
      %v1250 = vrot.slane %v1248, 4
      %v1251 = vshll.u32 %v1207, 16
      %v1253 = vrot.slane %v1251, 5
      %v1254 = vor.u32 %v1250, %v1253
      %v1255 = vrot.slane %v1254, 4
      %v1257 = vshll.u32 %v1208, 16
      %v1259 = vrot.slane %v1257, 5
      %v1260 = vsel %vm568, %v1255, %v1259
      %v1262 = vshrl.u32 %v1209, 16
      %v1264 = vrot.slane %v1262, 4
      %v1265 = vshll.u32 %v1209, 16
      %v1267 = vrot.slane %v1265, 5
      %v1268 = vor.u32 %v1264, %v1267
      %v1269 = vrot.slane %v1268, 4
      %v1271 = vshll.u32 %v1210, 16
      %v1273 = vrot.slane %v1271, 5
      %v1274 = vsel %vm568, %v1269, %v1273
      %v1276 = vshrl.u32 %v1211, 16
      %v1278 = vrot.slane %v1276, 4
      %v1279 = vshll.u32 %v1211, 16
      %v1281 = vrot.slane %v1279, 5
      %v1282 = vor.u32 %v1278, %v1281
      %v1283 = vrot.slane %v1282, 4
      %v1285 = vshll.u32 %v1212, 16
      %v1287 = vrot.slane %v1285, 5
      %v1288 = vsel %vm568, %v1283, %v1287
      %v1290 = vshrl.u32 %v1213, 16
      %v1292 = vrot.slane %v1290, 4
      %v1293 = vshll.u32 %v1213, 16
      %v1295 = vrot.slane %v1293, 5
      %v1296 = vor.u32 %v1292, %v1295
      %v1297 = vrot.slane %v1296, 4
      %v1299 = vshll.u32 %v1214, 16
      %v1301 = vrot.slane %v1299, 5
      %v1302 = vsel %vm568, %v1297, %v1301
      %v1304 = vshrl.u32 %v1215, 16
      %v1306 = vrot.slane %v1304, 4
      %v1307 = vshll.u32 %v1215, 16
      %v1309 = vrot.slane %v1307, 5
      %v1310 = vor.u32 %v1306, %v1309
      %v1311 = vrot.slane %v1310, 4
      %v1313 = vshll.u32 %v1216, 16
      %v1315 = vrot.slane %v1313, 5
      %v1316 = vsel %vm568, %v1311, %v1315
      %v1318 = vshrl.u32 %v1217, 16
      %v1320 = vrot.slane %v1318, 4
      %v1321 = vshll.u32 %v1217, 16
      %v1323 = vrot.slane %v1321, 5
      %v1324 = vor.u32 %v1320, %v1323
      %v1325 = vrot.slane %v1324, 4
      %v1327 = vshll.u32 %v1218, 16
      %v1329 = vrot.slane %v1327, 5
      %v1330 = vsel %vm568, %v1325, %v1329
      %s1331 = scalar_lea.vmem %s1, 256
      %v1332 = vld [vmem:[%s1331] sm:$0xf]
      %v1333 = vld [vmem:[%s1331 + $0x4] sm:$0xf]
      %v1334 = vld [vmem:[%s1331 + $0x8] sm:$0xf]
      %v1335 = vld [vmem:[%s1331 + $0xc] sm:$0xf]
      %v1336 = vld [vmem:[%s1331 + $0x10] sm:$0xf]
      %v1337 = vld [vmem:[%s1331 + $0x14] sm:$0xf]
      %v1338 = vld [vmem:[%s1331 + $0x18] sm:$0xf]
      %v1339 = vld [vmem:[%s1331 + $0x1c] sm:$0xf]
      %v1340 = vld [vmem:[%s1331 + $0x20] sm:$0xf]
      %v1341 = vld [vmem:[%s1331 + $0x24] sm:$0xf]
      %v1342 = vld [vmem:[%s1331 + $0x28] sm:$0xf]
      %v1343 = vld [vmem:[%s1331 + $0x2c] sm:$0xf]
      %v1344 = vld [vmem:[%s1331 + $0x30] sm:$0xf]
      %v1345 = vld [vmem:[%s1331 + $0x34] sm:$0xf]
      %v1346 = vld [vmem:[%s1331 + $0x38] sm:$0xf]
      %v1347 = vld [vmem:[%s1331 + $0x3c] sm:$0xf]
      %v1348 = vunpack.c.l.b16 %v1232
      %v1349 = vunpack.c.l.b16 %v1246
      %v1350 = vunpack.c.l.b16 %v1260
      %v1351 = vunpack.c.l.b16 %v1274
      %v1352 = vunpack.c.l.b16 %v1288
      %v1353 = vunpack.c.l.b16 %v1302
      %v1354 = vunpack.c.l.b16 %v1316
      %v1355 = vunpack.c.l.b16 %v1330
      %v1356 = vpack.c.b16 %v1349, %v1348
      %v1357 = vpack.c.b16 %v1351, %v1350
      %v1358 = vpack.c.b16 %v1353, %v1352
      %v1359 = vpack.c.b16 %v1355, %v1354
      %v1380 = vunpack.c.l.b16 %v1332
      %v1381 = vunpack.c.l.b16 %v1333
      %v1382 = vunpack.c.l.b16 %v1334
      %v1383 = vunpack.c.l.b16 %v1335
      %v1384 = vunpack.c.l.b16 %v1336
      %v1385 = vunpack.c.l.b16 %v1337
      %v1386 = vunpack.c.l.b16 %v1338
      %v1387 = vunpack.c.l.b16 %v1339
      %v1388 = vunpack.c.l.b16 %v1340
      %v1389 = vunpack.c.l.b16 %v1341
      %v1390 = vunpack.c.l.b16 %v1342
      %v1391 = vunpack.c.l.b16 %v1343
      %v1392 = vunpack.c.l.b16 %v1344
      %v1393 = vunpack.c.l.b16 %v1345
      %v1394 = vunpack.c.l.b16 %v1346
      %v1395 = vunpack.c.l.b16 %v1347
      %v1396 = vpack.c.b16 %v1381, %v1380
      %v1397 = vpack.c.b16 %v1383, %v1382
      %v1398 = vpack.c.b16 %v1385, %v1384
      %v1399 = vpack.c.b16 %v1387, %v1386
      %v1400 = vpack.c.b16 %v1389, %v1388
      %v1401 = vpack.c.b16 %v1391, %v1390
      %v1402 = vpack.c.b16 %v1393, %v1392
      %v1403 = vpack.c.b16 %v1395, %v1394
      %1412 = vmatpush.bf16.msra.mxu0 %v1403
      %1413 = vmatpush.bf16.msra.mxu0 %v1402
      %1414 = vmatpush.bf16.msra.mxu0 %v1401
      %1415 = vmatpush.bf16.msra.mxu0 %v1400
      %1416 = vmatpush.bf16.msra.mxu0 %v1399
      %1417 = vmatpush.bf16.msra.mxu0 %v1398
      %1418 = vmatpush.bf16.msra.mxu0 %v1397
      %1419 = vmatpush.bf16.msra.mxu0 %v1396
      %1420 = vmatmul.bf16.gmra.mxu0 %v1356
      %v1421 = vpop.f32.mrf.mxu0
      %v1422 = vadd.f32 0.0, %v1421
      %v1423 = vpop.f32.mrf.mxu0
      %v1424 = vadd.f32 0.0, %v1423
      %1425 = vmatmul.bf16.gmra.mxu0 %v1357
      %v1426 = vpop.f32.mrf.mxu0
      %v1427 = vadd.f32 0.0, %v1426
      %v1428 = vpop.f32.mrf.mxu0
      %v1429 = vadd.f32 0.0, %v1428
      %1430 = vmatmul.bf16.gmra.mxu0 %v1358
      %v1431 = vpop.f32.mrf.mxu0
      %v1432 = vadd.f32 0.0, %v1431
      %v1433 = vpop.f32.mrf.mxu0
      %v1434 = vadd.f32 0.0, %v1433
      %1435 = vmatmul.bf16.gmra.mxu0 %v1359
      %v1436 = vpop.f32.mrf.mxu0
      %v1437 = vadd.f32 0.0, %v1436
      %v1438 = vpop.f32.mrf.mxu0
      %v1439 = vadd.f32 0.0, %v1438
      %1440 = vdwg.mxu0
      %v1441 = vadd.f32 %v1195, %v1422
      %v1442 = vadd.f32 %v1196, %v1424
      %v1443 = vadd.f32 %v1197, %v1427
      %v1444 = vadd.f32 %v1198, %v1429
      %v1445 = vadd.f32 %v1199, %v1432
      %v1446 = vadd.f32 %v1200, %v1434
      %v1447 = vadd.f32 %v1201, %v1437
      %v1448 = vadd.f32 %v1202, %v1439
      %v1449 = vld [vmem:[%s479] sm:$0xe]
      %v1450 = vld [vmem:[%s479 + $0x8] sm:$0xe]
      %v1451 = vld [vmem:[%s479 + $0x10] sm:$0xe]
      %v1452 = vld [vmem:[%s479 + $0x18] sm:$0xe]
      %v1453 = vld [vmem:[%s479 + $0x20] sm:$0xe]
      %v1454 = vld [vmem:[%s479 + $0x28] sm:$0xe]
      %v1455 = vld [vmem:[%s479 + $0x30] sm:$0xe]
      %v1456 = vld [vmem:[%s479 + $0x38] sm:$0xe]
      %v1473 = vrot.slane %v1449, 5
      %v1474 = vrot.slane %v1473, 4
      %v1475 = vrot.slane %v1204, 5
      %v1476 = vsel %vm918, %v1474, %v1475
      %v1477 = vrot.slane %v1450, 5
      %v1478 = vrot.slane %v1477, 4
      %v1479 = vrot.slane %v1206, 5
      %v1480 = vsel %vm918, %v1478, %v1479
      %v1481 = vrot.slane %v1451, 5
      %v1482 = vrot.slane %v1481, 4
      %v1483 = vrot.slane %v1208, 5
      %v1484 = vsel %vm918, %v1482, %v1483
      %v1485 = vrot.slane %v1452, 5
      %v1486 = vrot.slane %v1485, 4
      %v1487 = vrot.slane %v1210, 5
      %v1488 = vsel %vm918, %v1486, %v1487
      %v1489 = vrot.slane %v1453, 5
      %v1490 = vrot.slane %v1489, 4
      %v1491 = vrot.slane %v1212, 5
      %v1492 = vsel %vm918, %v1490, %v1491
      %v1493 = vrot.slane %v1454, 5
      %v1494 = vrot.slane %v1493, 4
      %v1495 = vrot.slane %v1214, 5
      %v1496 = vsel %vm918, %v1494, %v1495
      %v1497 = vrot.slane %v1455, 5
      %v1498 = vrot.slane %v1497, 4
      %v1499 = vrot.slane %v1216, 5
      %v1500 = vsel %vm918, %v1498, %v1499
      %v1501 = vrot.slane %v1456, 5
      %v1502 = vrot.slane %v1501, 4
      %v1503 = vrot.slane %v1218, 5
      %v1504 = vsel %vm918, %v1502, %v1503
      %s1505 = scalar_lea.vmem %s1, 320
      %v1506 = vld [vmem:[%s1505] sm:$0xf]
      %v1507 = vld [vmem:[%s1505 + $0x4] sm:$0xf]
      %v1508 = vld [vmem:[%s1505 + $0x8] sm:$0xf]
      %v1509 = vld [vmem:[%s1505 + $0xc] sm:$0xf]
      %v1510 = vld [vmem:[%s1505 + $0x10] sm:$0xf]
      %v1511 = vld [vmem:[%s1505 + $0x14] sm:$0xf]
      %v1512 = vld [vmem:[%s1505 + $0x18] sm:$0xf]
      %v1513 = vld [vmem:[%s1505 + $0x1c] sm:$0xf]
      %v1514 = vld [vmem:[%s1505 + $0x20] sm:$0xf]
      %v1515 = vld [vmem:[%s1505 + $0x24] sm:$0xf]
      %v1516 = vld [vmem:[%s1505 + $0x28] sm:$0xf]
      %v1517 = vld [vmem:[%s1505 + $0x2c] sm:$0xf]
      %v1518 = vld [vmem:[%s1505 + $0x30] sm:$0xf]
      %v1519 = vld [vmem:[%s1505 + $0x34] sm:$0xf]
      %v1520 = vld [vmem:[%s1505 + $0x38] sm:$0xf]
      %v1521 = vld [vmem:[%s1505 + $0x3c] sm:$0xf]
      %v1522 = vunpack.c.l.b16 %v1476
      %v1523 = vunpack.c.l.b16 %v1480
      %v1524 = vunpack.c.l.b16 %v1484
      %v1525 = vunpack.c.l.b16 %v1488
      %v1526 = vunpack.c.l.b16 %v1492
      %v1527 = vunpack.c.l.b16 %v1496
      %v1528 = vunpack.c.l.b16 %v1500
      %v1529 = vunpack.c.l.b16 %v1504
      %v1530 = vpack.c.b16 %v1523, %v1522
      %v1531 = vpack.c.b16 %v1525, %v1524
      %v1532 = vpack.c.b16 %v1527, %v1526
      %v1533 = vpack.c.b16 %v1529, %v1528
      %v1554 = vunpack.c.l.b16 %v1506
      %v1555 = vunpack.c.l.b16 %v1507
      %v1556 = vunpack.c.l.b16 %v1508
      %v1557 = vunpack.c.l.b16 %v1509
      %v1558 = vunpack.c.l.b16 %v1510
      %v1559 = vunpack.c.l.b16 %v1511
      %v1560 = vunpack.c.l.b16 %v1512
      %v1561 = vunpack.c.l.b16 %v1513
      %v1562 = vunpack.c.l.b16 %v1514
      %v1563 = vunpack.c.l.b16 %v1515
      %v1564 = vunpack.c.l.b16 %v1516
      %v1565 = vunpack.c.l.b16 %v1517
      %v1566 = vunpack.c.l.b16 %v1518
      %v1567 = vunpack.c.l.b16 %v1519
      %v1568 = vunpack.c.l.b16 %v1520
      %v1569 = vunpack.c.l.b16 %v1521
      %v1570 = vpack.c.b16 %v1555, %v1554
      %v1571 = vpack.c.b16 %v1557, %v1556
      %v1572 = vpack.c.b16 %v1559, %v1558
      %v1573 = vpack.c.b16 %v1561, %v1560
      %v1574 = vpack.c.b16 %v1563, %v1562
      %v1575 = vpack.c.b16 %v1565, %v1564
      %v1576 = vpack.c.b16 %v1567, %v1566
      %v1577 = vpack.c.b16 %v1569, %v1568
      %1586 = vmatpush.bf16.msra.mxu0 %v1577
      %1587 = vmatpush.bf16.msra.mxu0 %v1576
      %1588 = vmatpush.bf16.msra.mxu0 %v1575
      %1589 = vmatpush.bf16.msra.mxu0 %v1574
      %1590 = vmatpush.bf16.msra.mxu0 %v1573
      %1591 = vmatpush.bf16.msra.mxu0 %v1572
      %1592 = vmatpush.bf16.msra.mxu0 %v1571
      %1593 = vmatpush.bf16.msra.mxu0 %v1570
      %1594 = vmatmul.bf16.gmra.mxu0 %v1530
      %v1595 = vpop.f32.mrf.mxu0
      %v1596 = vadd.f32 0.0, %v1595
      %v1597 = vpop.f32.mrf.mxu0
      %v1598 = vadd.f32 0.0, %v1597
      %1599 = vmatmul.bf16.gmra.mxu0 %v1531
      %v1600 = vpop.f32.mrf.mxu0
      %v1601 = vadd.f32 0.0, %v1600
      %v1602 = vpop.f32.mrf.mxu0
      %v1603 = vadd.f32 0.0, %v1602
      %1604 = vmatmul.bf16.gmra.mxu0 %v1532
      %v1605 = vpop.f32.mrf.mxu0
      %v1606 = vadd.f32 0.0, %v1605
      %v1607 = vpop.f32.mrf.mxu0
      %v1608 = vadd.f32 0.0, %v1607
      %1609 = vmatmul.bf16.gmra.mxu0 %v1533
      %v1610 = vpop.f32.mrf.mxu0
      %v1611 = vadd.f32 0.0, %v1610
      %v1612 = vpop.f32.mrf.mxu0
      %v1613 = vadd.f32 0.0, %v1612
      %1614 = vdwg.mxu0
      %v1615 = vadd.f32 %v1441, %v1596
      %v1616 = vadd.f32 %v1442, %v1598
      %v1617 = vadd.f32 %v1443, %v1601
      %v1618 = vadd.f32 %v1444, %v1603
      %v1619 = vadd.f32 %v1445, %v1606
      %v1620 = vadd.f32 %v1446, %v1608
      %v1621 = vadd.f32 %v1447, %v1611
      %v1622 = vadd.f32 %v1448, %v1613
      %s1623 = scalar_lea.vmem [#allocation2], 16
      %v1624 = vld [vmem:[%s1623] sm:$0xf]
      %v1625 = vld [vmem:[%s1623 + $0x8] sm:$0xf]
      %v1626 = vld [vmem:[%s1623 + $0x10] sm:$0xf]
      %v1627 = vld [vmem:[%s1623 + $0x18] sm:$0xf]
      %v1628 = vld [vmem:[%s1623 + $0x20] sm:$0xf]
      %v1629 = vld [vmem:[%s1623 + $0x28] sm:$0xf]
      %v1630 = vld [vmem:[%s1623 + $0x30] sm:$0xf]
      %v1631 = vld [vmem:[%s1623 + $0x38] sm:$0xf]
      %s1632 = scalar_lea.vmem %s1, 384
      %v1633 = vld [vmem:[%s1632] sm:$0xf]
      %v1634 = vld [vmem:[%s1632 + $0x4] sm:$0xf]
      %v1635 = vld [vmem:[%s1632 + $0x8] sm:$0xf]
      %v1636 = vld [vmem:[%s1632 + $0xc] sm:$0xf]
      %v1637 = vld [vmem:[%s1632 + $0x10] sm:$0xf]
      %v1638 = vld [vmem:[%s1632 + $0x14] sm:$0xf]
      %v1639 = vld [vmem:[%s1632 + $0x18] sm:$0xf]
      %v1640 = vld [vmem:[%s1632 + $0x1c] sm:$0xf]
      %v1641 = vld [vmem:[%s1632 + $0x20] sm:$0xf]
      %v1642 = vld [vmem:[%s1632 + $0x24] sm:$0xf]
      %v1643 = vld [vmem:[%s1632 + $0x28] sm:$0xf]
      %v1644 = vld [vmem:[%s1632 + $0x2c] sm:$0xf]
      %v1645 = vld [vmem:[%s1632 + $0x30] sm:$0xf]
      %v1646 = vld [vmem:[%s1632 + $0x34] sm:$0xf]
      %v1647 = vld [vmem:[%s1632 + $0x38] sm:$0xf]
      %v1648 = vld [vmem:[%s1632 + $0x3c] sm:$0xf]
      %v1657 = vunpack.c.l.b16 %v1624
      %v1658 = vunpack.c.l.b16 %v1625
      %v1659 = vunpack.c.l.b16 %v1626
      %v1660 = vunpack.c.l.b16 %v1627
      %v1661 = vunpack.c.l.b16 %v1628
      %v1662 = vunpack.c.l.b16 %v1629
      %v1663 = vunpack.c.l.b16 %v1630
      %v1664 = vunpack.c.l.b16 %v1631
      %v1665 = vpack.c.b16 %v1658, %v1657
      %v1666 = vpack.c.b16 %v1660, %v1659
      %v1667 = vpack.c.b16 %v1662, %v1661
      %v1668 = vpack.c.b16 %v1664, %v1663
      %v1689 = vunpack.c.l.b16 %v1633
      %v1690 = vunpack.c.l.b16 %v1634
      %v1691 = vunpack.c.l.b16 %v1635
      %v1692 = vunpack.c.l.b16 %v1636
      %v1693 = vunpack.c.l.b16 %v1637
      %v1694 = vunpack.c.l.b16 %v1638
      %v1695 = vunpack.c.l.b16 %v1639
      %v1696 = vunpack.c.l.b16 %v1640
      %v1697 = vunpack.c.l.b16 %v1641
      %v1698 = vunpack.c.l.b16 %v1642
      %v1699 = vunpack.c.l.b16 %v1643
      %v1700 = vunpack.c.l.b16 %v1644
      %v1701 = vunpack.c.l.b16 %v1645
      %v1702 = vunpack.c.l.b16 %v1646
      %v1703 = vunpack.c.l.b16 %v1647
      %v1704 = vunpack.c.l.b16 %v1648
      %v1705 = vpack.c.b16 %v1690, %v1689
      %v1706 = vpack.c.b16 %v1692, %v1691
      %v1707 = vpack.c.b16 %v1694, %v1693
      %v1708 = vpack.c.b16 %v1696, %v1695
      %v1709 = vpack.c.b16 %v1698, %v1697
      %v1710 = vpack.c.b16 %v1700, %v1699
      %v1711 = vpack.c.b16 %v1702, %v1701
      %v1712 = vpack.c.b16 %v1704, %v1703
      %1721 = vmatpush.bf16.msra.mxu0 %v1712
      %1722 = vmatpush.bf16.msra.mxu0 %v1711
      %1723 = vmatpush.bf16.msra.mxu0 %v1710
      %1724 = vmatpush.bf16.msra.mxu0 %v1709
      %1725 = vmatpush.bf16.msra.mxu0 %v1708
      %1726 = vmatpush.bf16.msra.mxu0 %v1707
      %1727 = vmatpush.bf16.msra.mxu0 %v1706
      %1728 = vmatpush.bf16.msra.mxu0 %v1705
      %1729 = vmatmul.bf16.gmra.mxu0 %v1665
      %v1730 = vpop.f32.mrf.mxu0
      %v1731 = vadd.f32 0.0, %v1730
      %v1732 = vpop.f32.mrf.mxu0
      %v1733 = vadd.f32 0.0, %v1732
      %1734 = vmatmul.bf16.gmra.mxu0 %v1666
      %v1735 = vpop.f32.mrf.mxu0
      %v1736 = vadd.f32 0.0, %v1735
      %v1737 = vpop.f32.mrf.mxu0
      %v1738 = vadd.f32 0.0, %v1737
      %1739 = vmatmul.bf16.gmra.mxu0 %v1667
      %v1740 = vpop.f32.mrf.mxu0
      %v1741 = vadd.f32 0.0, %v1740
      %v1742 = vpop.f32.mrf.mxu0
      %v1743 = vadd.f32 0.0, %v1742
      %1744 = vmatmul.bf16.gmra.mxu0 %v1668
      %v1745 = vpop.f32.mrf.mxu0
      %v1746 = vadd.f32 0.0, %v1745
      %v1747 = vpop.f32.mrf.mxu0
      %v1748 = vadd.f32 0.0, %v1747
      %1749 = vdwg.mxu0
      %v1750 = vadd.f32 %v1615, %v1731
      %v1751 = vadd.f32 %v1616, %v1733
      %v1752 = vadd.f32 %v1617, %v1736
      %v1753 = vadd.f32 %v1618, %v1738
      %v1754 = vadd.f32 %v1619, %v1741
      %v1755 = vadd.f32 %v1620, %v1743
      %v1756 = vadd.f32 %v1621, %v1746
      %v1757 = vadd.f32 %v1622, %v1748
      %v1758 = vld [vmem:[%s1623] sm:$0xf]
      %v1759 = vld [vmem:[%s1623 + $0x4] sm:$0x1]
      %v1760 = vld [vmem:[%s1623 + $0x8] sm:$0xf]
      %v1761 = vld [vmem:[%s1623 + $0xc] sm:$0x1]
      %v1762 = vld [vmem:[%s1623 + $0x10] sm:$0xf]
      %v1763 = vld [vmem:[%s1623 + $0x14] sm:$0x1]
      %v1764 = vld [vmem:[%s1623 + $0x18] sm:$0xf]
      %v1765 = vld [vmem:[%s1623 + $0x1c] sm:$0x1]
      %v1766 = vld [vmem:[%s1623 + $0x20] sm:$0xf]
      %v1767 = vld [vmem:[%s1623 + $0x24] sm:$0x1]
      %v1768 = vld [vmem:[%s1623 + $0x28] sm:$0xf]
      %v1769 = vld [vmem:[%s1623 + $0x2c] sm:$0x1]
      %v1770 = vld [vmem:[%s1623 + $0x30] sm:$0xf]
      %v1771 = vld [vmem:[%s1623 + $0x34] sm:$0x1]
      %v1772 = vld [vmem:[%s1623 + $0x38] sm:$0xf]
      %v1773 = vld [vmem:[%s1623 + $0x3c] sm:$0x1]
      %v1775 = vshrl.u32 %v1758, 16
      %v1777 = vrot.slane %v1775, 4
      %v1778 = vshll.u32 %v1758, 16
      %v1780 = vrot.slane %v1778, 5
      %v1781 = vor.u32 %v1777, %v1780
      %v1782 = vrot.slane %v1781, 4
      %v1784 = vshll.u32 %v1759, 16
      %v1786 = vrot.slane %v1784, 5
      %v1787 = vsel %vm568, %v1782, %v1786
      %v1789 = vshrl.u32 %v1760, 16
      %v1791 = vrot.slane %v1789, 4
      %v1792 = vshll.u32 %v1760, 16
      %v1794 = vrot.slane %v1792, 5
      %v1795 = vor.u32 %v1791, %v1794
      %v1796 = vrot.slane %v1795, 4
      %v1798 = vshll.u32 %v1761, 16
      %v1800 = vrot.slane %v1798, 5
      %v1801 = vsel %vm568, %v1796, %v1800
      %v1803 = vshrl.u32 %v1762, 16
      %v1805 = vrot.slane %v1803, 4
      %v1806 = vshll.u32 %v1762, 16
      %v1808 = vrot.slane %v1806, 5
      %v1809 = vor.u32 %v1805, %v1808
      %v1810 = vrot.slane %v1809, 4
      %v1812 = vshll.u32 %v1763, 16
      %v1814 = vrot.slane %v1812, 5
      %v1815 = vsel %vm568, %v1810, %v1814
      %v1817 = vshrl.u32 %v1764, 16
      %v1819 = vrot.slane %v1817, 4
      %v1820 = vshll.u32 %v1764, 16
      %v1822 = vrot.slane %v1820, 5
      %v1823 = vor.u32 %v1819, %v1822
      %v1824 = vrot.slane %v1823, 4
      %v1826 = vshll.u32 %v1765, 16
      %v1828 = vrot.slane %v1826, 5
      %v1829 = vsel %vm568, %v1824, %v1828
      %v1831 = vshrl.u32 %v1766, 16
      %v1833 = vrot.slane %v1831, 4
      %v1834 = vshll.u32 %v1766, 16
      %v1836 = vrot.slane %v1834, 5
      %v1837 = vor.u32 %v1833, %v1836
      %v1838 = vrot.slane %v1837, 4
      %v1840 = vshll.u32 %v1767, 16
      %v1842 = vrot.slane %v1840, 5
      %v1843 = vsel %vm568, %v1838, %v1842
      %v1845 = vshrl.u32 %v1768, 16
      %v1847 = vrot.slane %v1845, 4
      %v1848 = vshll.u32 %v1768, 16
      %v1850 = vrot.slane %v1848, 5
      %v1851 = vor.u32 %v1847, %v1850
      %v1852 = vrot.slane %v1851, 4
      %v1854 = vshll.u32 %v1769, 16
      %v1856 = vrot.slane %v1854, 5
      %v1857 = vsel %vm568, %v1852, %v1856
      %v1859 = vshrl.u32 %v1770, 16
      %v1861 = vrot.slane %v1859, 4
      %v1862 = vshll.u32 %v1770, 16
      %v1864 = vrot.slane %v1862, 5
      %v1865 = vor.u32 %v1861, %v1864
      %v1866 = vrot.slane %v1865, 4
      %v1868 = vshll.u32 %v1771, 16
      %v1870 = vrot.slane %v1868, 5
      %v1871 = vsel %vm568, %v1866, %v1870
      %v1873 = vshrl.u32 %v1772, 16
      %v1875 = vrot.slane %v1873, 4
      %v1876 = vshll.u32 %v1772, 16
      %v1878 = vrot.slane %v1876, 5
      %v1879 = vor.u32 %v1875, %v1878
      %v1880 = vrot.slane %v1879, 4
      %v1882 = vshll.u32 %v1773, 16
      %v1884 = vrot.slane %v1882, 5
      %v1885 = vsel %vm568, %v1880, %v1884
      %s1886 = scalar_lea.vmem %s1, 448
      %v1887 = vld [vmem:[%s1886] sm:$0xf]
      %v1888 = vld [vmem:[%s1886 + $0x4] sm:$0xf]
      %v1889 = vld [vmem:[%s1886 + $0x8] sm:$0xf]
      %v1890 = vld [vmem:[%s1886 + $0xc] sm:$0xf]
      %v1891 = vld [vmem:[%s1886 + $0x10] sm:$0xf]
      %v1892 = vld [vmem:[%s1886 + $0x14] sm:$0xf]
      %v1893 = vld [vmem:[%s1886 + $0x18] sm:$0xf]
      %v1894 = vld [vmem:[%s1886 + $0x1c] sm:$0xf]
      %v1895 = vld [vmem:[%s1886 + $0x20] sm:$0xf]
      %v1896 = vld [vmem:[%s1886 + $0x24] sm:$0xf]
      %v1897 = vld [vmem:[%s1886 + $0x28] sm:$0xf]
      %v1898 = vld [vmem:[%s1886 + $0x2c] sm:$0xf]
      %v1899 = vld [vmem:[%s1886 + $0x30] sm:$0xf]
      %v1900 = vld [vmem:[%s1886 + $0x34] sm:$0xf]
      %v1901 = vld [vmem:[%s1886 + $0x38] sm:$0xf]
      %v1902 = vld [vmem:[%s1886 + $0x3c] sm:$0xf]
      %v1903 = vunpack.c.l.b16 %v1787
      %v1904 = vunpack.c.l.b16 %v1801
      %v1905 = vunpack.c.l.b16 %v1815
      %v1906 = vunpack.c.l.b16 %v1829
      %v1907 = vunpack.c.l.b16 %v1843
      %v1908 = vunpack.c.l.b16 %v1857
      %v1909 = vunpack.c.l.b16 %v1871
      %v1910 = vunpack.c.l.b16 %v1885
      %v1911 = vpack.c.b16 %v1904, %v1903
      %v1912 = vpack.c.b16 %v1906, %v1905
      %v1913 = vpack.c.b16 %v1908, %v1907
      %v1914 = vpack.c.b16 %v1910, %v1909
      %v1935 = vunpack.c.l.b16 %v1887
      %v1936 = vunpack.c.l.b16 %v1888
      %v1937 = vunpack.c.l.b16 %v1889
      %v1938 = vunpack.c.l.b16 %v1890
      %v1939 = vunpack.c.l.b16 %v1891
      %v1940 = vunpack.c.l.b16 %v1892
      %v1941 = vunpack.c.l.b16 %v1893
      %v1942 = vunpack.c.l.b16 %v1894
      %v1943 = vunpack.c.l.b16 %v1895
      %v1944 = vunpack.c.l.b16 %v1896
      %v1945 = vunpack.c.l.b16 %v1897
      %v1946 = vunpack.c.l.b16 %v1898
      %v1947 = vunpack.c.l.b16 %v1899
      %v1948 = vunpack.c.l.b16 %v1900
      %v1949 = vunpack.c.l.b16 %v1901
      %v1950 = vunpack.c.l.b16 %v1902
      %v1951 = vpack.c.b16 %v1936, %v1935
      %v1952 = vpack.c.b16 %v1938, %v1937
      %v1953 = vpack.c.b16 %v1940, %v1939
      %v1954 = vpack.c.b16 %v1942, %v1941
      %v1955 = vpack.c.b16 %v1944, %v1943
      %v1956 = vpack.c.b16 %v1946, %v1945
      %v1957 = vpack.c.b16 %v1948, %v1947
      %v1958 = vpack.c.b16 %v1950, %v1949
      %1967 = vmatpush.bf16.msra.mxu0 %v1958
      %1968 = vmatpush.bf16.msra.mxu0 %v1957
      %1969 = vmatpush.bf16.msra.mxu0 %v1956
      %1970 = vmatpush.bf16.msra.mxu0 %v1955
      %1971 = vmatpush.bf16.msra.mxu0 %v1954
      %1972 = vmatpush.bf16.msra.mxu0 %v1953
      %1973 = vmatpush.bf16.msra.mxu0 %v1952
      %1974 = vmatpush.bf16.msra.mxu0 %v1951
      %1975 = vmatmul.bf16.gmra.mxu0 %v1911
      %v1976 = vpop.f32.mrf.mxu0
      %v1977 = vadd.f32 0.0, %v1976
      %v1978 = vpop.f32.mrf.mxu0
      %v1979 = vadd.f32 0.0, %v1978
      %1980 = vmatmul.bf16.gmra.mxu0 %v1912
      %v1981 = vpop.f32.mrf.mxu0
      %v1982 = vadd.f32 0.0, %v1981
      %v1983 = vpop.f32.mrf.mxu0
      %v1984 = vadd.f32 0.0, %v1983
      %1985 = vmatmul.bf16.gmra.mxu0 %v1913
      %v1986 = vpop.f32.mrf.mxu0
      %v1987 = vadd.f32 0.0, %v1986
      %v1988 = vpop.f32.mrf.mxu0
      %v1989 = vadd.f32 0.0, %v1988
      %1990 = vmatmul.bf16.gmra.mxu0 %v1914
      %v1991 = vpop.f32.mrf.mxu0
      %v1992 = vadd.f32 0.0, %v1991
      %v1993 = vpop.f32.mrf.mxu0
      %v1994 = vadd.f32 0.0, %v1993
      %1995 = vdwg.mxu0
      %v1996 = vadd.f32 %v1750, %v1977
      %v1997 = vadd.f32 %v1751, %v1979
      %v1998 = vadd.f32 %v1752, %v1982
      %v1999 = vadd.f32 %v1753, %v1984
      %v2000 = vadd.f32 %v1754, %v1987
      %v2001 = vadd.f32 %v1755, %v1989
      %v2002 = vadd.f32 %v1756, %v1992
      %v2003 = vadd.f32 %v1757, %v1994
      %v2004 = vld [vmem:[%s1623] sm:$0xe]
      %v2005 = vld [vmem:[%s1623 + $0x8] sm:$0xe]
      %v2006 = vld [vmem:[%s1623 + $0x10] sm:$0xe]
      %v2007 = vld [vmem:[%s1623 + $0x18] sm:$0xe]
      %v2008 = vld [vmem:[%s1623 + $0x20] sm:$0xe]
      %v2009 = vld [vmem:[%s1623 + $0x28] sm:$0xe]
      %v2010 = vld [vmem:[%s1623 + $0x30] sm:$0xe]
      %v2011 = vld [vmem:[%s1623 + $0x38] sm:$0xe]
      %v2028 = vrot.slane %v2004, 5
      %v2029 = vrot.slane %v2028, 4
      %v2030 = vrot.slane %v1759, 5
      %v2031 = vsel %vm918, %v2029, %v2030
      %v2032 = vrot.slane %v2005, 5
      %v2033 = vrot.slane %v2032, 4
      %v2034 = vrot.slane %v1761, 5
      %v2035 = vsel %vm918, %v2033, %v2034
      %v2036 = vrot.slane %v2006, 5
      %v2037 = vrot.slane %v2036, 4
      %v2038 = vrot.slane %v1763, 5
      %v2039 = vsel %vm918, %v2037, %v2038
      %v2040 = vrot.slane %v2007, 5
      %v2041 = vrot.slane %v2040, 4
      %v2042 = vrot.slane %v1765, 5
      %v2043 = vsel %vm918, %v2041, %v2042
      %v2044 = vrot.slane %v2008, 5
      %v2045 = vrot.slane %v2044, 4
      %v2046 = vrot.slane %v1767, 5
      %v2047 = vsel %vm918, %v2045, %v2046
      %v2048 = vrot.slane %v2009, 5
      %v2049 = vrot.slane %v2048, 4
      %v2050 = vrot.slane %v1769, 5
      %v2051 = vsel %vm918, %v2049, %v2050
      %v2052 = vrot.slane %v2010, 5
      %v2053 = vrot.slane %v2052, 4
      %v2054 = vrot.slane %v1771, 5
      %v2055 = vsel %vm918, %v2053, %v2054
      %v2056 = vrot.slane %v2011, 5
      %v2057 = vrot.slane %v2056, 4
      %v2058 = vrot.slane %v1773, 5
      %v2059 = vsel %vm918, %v2057, %v2058
      %s2060 = scalar_lea.vmem %s1, 512
      %v2061 = vld [vmem:[%s2060] sm:$0xf]
      %v2062 = vld [vmem:[%s2060 + $0x4] sm:$0xf]
      %v2063 = vld [vmem:[%s2060 + $0x8] sm:$0xf]
      %v2064 = vld [vmem:[%s2060 + $0xc] sm:$0xf]
      %v2065 = vld [vmem:[%s2060 + $0x10] sm:$0xf]
      %v2066 = vld [vmem:[%s2060 + $0x14] sm:$0xf]
      %v2067 = vld [vmem:[%s2060 + $0x18] sm:$0xf]
      %v2068 = vld [vmem:[%s2060 + $0x1c] sm:$0xf]
      %v2069 = vld [vmem:[%s2060 + $0x20] sm:$0xf]
      %v2070 = vld [vmem:[%s2060 + $0x24] sm:$0xf]
      %v2071 = vld [vmem:[%s2060 + $0x28] sm:$0xf]
      %v2072 = vld [vmem:[%s2060 + $0x2c] sm:$0xf]
      %v2073 = vld [vmem:[%s2060 + $0x30] sm:$0xf]
      %v2074 = vld [vmem:[%s2060 + $0x34] sm:$0xf]
      %v2075 = vld [vmem:[%s2060 + $0x38] sm:$0xf]
      %v2076 = vld [vmem:[%s2060 + $0x3c] sm:$0xf]
      %v2077 = vunpack.c.l.b16 %v2031
      %v2078 = vunpack.c.l.b16 %v2035
      %v2079 = vunpack.c.l.b16 %v2039
      %v2080 = vunpack.c.l.b16 %v2043
      %v2081 = vunpack.c.l.b16 %v2047
      %v2082 = vunpack.c.l.b16 %v2051
      %v2083 = vunpack.c.l.b16 %v2055
      %v2084 = vunpack.c.l.b16 %v2059
      %v2085 = vpack.c.b16 %v2078, %v2077
      %v2086 = vpack.c.b16 %v2080, %v2079
      %v2087 = vpack.c.b16 %v2082, %v2081
      %v2088 = vpack.c.b16 %v2084, %v2083
      %v2109 = vunpack.c.l.b16 %v2061
      %v2110 = vunpack.c.l.b16 %v2062
      %v2111 = vunpack.c.l.b16 %v2063
      %v2112 = vunpack.c.l.b16 %v2064
      %v2113 = vunpack.c.l.b16 %v2065
      %v2114 = vunpack.c.l.b16 %v2066
      %v2115 = vunpack.c.l.b16 %v2067
      %v2116 = vunpack.c.l.b16 %v2068
      %v2117 = vunpack.c.l.b16 %v2069
      %v2118 = vunpack.c.l.b16 %v2070
      %v2119 = vunpack.c.l.b16 %v2071
      %v2120 = vunpack.c.l.b16 %v2072
      %v2121 = vunpack.c.l.b16 %v2073
      %v2122 = vunpack.c.l.b16 %v2074
      %v2123 = vunpack.c.l.b16 %v2075
      %v2124 = vunpack.c.l.b16 %v2076
      %v2125 = vpack.c.b16 %v2110, %v2109
      %v2126 = vpack.c.b16 %v2112, %v2111
      %v2127 = vpack.c.b16 %v2114, %v2113
      %v2128 = vpack.c.b16 %v2116, %v2115
      %v2129 = vpack.c.b16 %v2118, %v2117
      %v2130 = vpack.c.b16 %v2120, %v2119
      %v2131 = vpack.c.b16 %v2122, %v2121
      %v2132 = vpack.c.b16 %v2124, %v2123
      %2141 = vmatpush.bf16.msra.mxu0 %v2132
      %2142 = vmatpush.bf16.msra.mxu0 %v2131
      %2143 = vmatpush.bf16.msra.mxu0 %v2130
      %2144 = vmatpush.bf16.msra.mxu0 %v2129
      %2145 = vmatpush.bf16.msra.mxu0 %v2128
      %2146 = vmatpush.bf16.msra.mxu0 %v2127
      %2147 = vmatpush.bf16.msra.mxu0 %v2126
      %2148 = vmatpush.bf16.msra.mxu0 %v2125
      %2149 = vmatmul.bf16.gmra.mxu0 %v2085
      %v2150 = vpop.f32.mrf.mxu0
      %v2151 = vadd.f32 0.0, %v2150
      %v2152 = vpop.f32.mrf.mxu0
      %v2153 = vadd.f32 0.0, %v2152
      %2154 = vmatmul.bf16.gmra.mxu0 %v2086
      %v2155 = vpop.f32.mrf.mxu0
      %v2156 = vadd.f32 0.0, %v2155
      %v2157 = vpop.f32.mrf.mxu0
      %v2158 = vadd.f32 0.0, %v2157
      %2159 = vmatmul.bf16.gmra.mxu0 %v2087
      %v2160 = vpop.f32.mrf.mxu0
      %v2161 = vadd.f32 0.0, %v2160
      %v2162 = vpop.f32.mrf.mxu0
      %v2163 = vadd.f32 0.0, %v2162
      %2164 = vmatmul.bf16.gmra.mxu0 %v2088
      %v2165 = vpop.f32.mrf.mxu0
      %v2166 = vadd.f32 0.0, %v2165
      %v2167 = vpop.f32.mrf.mxu0
      %v2168 = vadd.f32 0.0, %v2167
      %2169 = vdwg.mxu0
      %v2170 = vadd.f32 %v1996, %v2151
      %v2171 = vadd.f32 %v1997, %v2153
      %v2172 = vadd.f32 %v1998, %v2156
      %v2173 = vadd.f32 %v1999, %v2158
      %v2174 = vadd.f32 %v2000, %v2161
      %v2175 = vadd.f32 %v2001, %v2163
      %v2176 = vadd.f32 %v2002, %v2166
      %v2177 = vadd.f32 %v2003, %v2168
      %v2178 = vld [vmem:[%s2] sm:$0x1]
      %v2180 = vperm.slane %v2178, 0
      %v2182 = vadd.f32 %v2170, %v2180
      %v2183 = vadd.f32 %v2171, %v2180
      %v2184 = vadd.f32 %v2172, %v2180
      %v2185 = vadd.f32 %v2173, %v2180
      %v2186 = vadd.f32 %v2174, %v2180
      %v2187 = vadd.f32 %v2175, %v2180
      %v2188 = vadd.f32 %v2176, %v2180
      %v2189 = vadd.f32 %v2177, %v2180
      %v2190 = vmax.f32 %v2182, 0.0
      %v2191 = vmax.f32 %v2183, 0.0
      %v2192 = vmax.f32 %v2184, 0.0
      %v2193 = vmax.f32 %v2185, 0.0
      %v2194 = vmax.f32 %v2186, 0.0
      %v2195 = vmax.f32 %v2187, 0.0
      %v2196 = vmax.f32 %v2188, 0.0
      %v2197 = vmax.f32 %v2189, 0.0
      %v2198 = vpack.c.bf16 %v2190, %v2190
      %v2199 = vpack.c.bf16 %v2191, %v2191
      %v2200 = vpack.c.bf16 %v2192, %v2192
      %v2201 = vpack.c.bf16 %v2193, %v2193
      %v2202 = vpack.c.bf16 %v2194, %v2194
      %v2203 = vpack.c.bf16 %v2195, %v2195
      %v2204 = vpack.c.bf16 %v2196, %v2196
      %v2205 = vpack.c.bf16 %v2197, %v2197
      %v2207 = vshrl.u32 %v2198, 16
      %v2209 = vrot.slane %v2207, 7
      %v2210 = vshll.u32 %v2198, 16
      %v2212 = vor.u32 %v2209, %v2210
      %v2213 = vrot.slane %v2209, 4
      %v2215 = vshrl.u32 %v2199, 16
      %v2217 = vrot.slane %v2215, 7
      %v2218 = vshll.u32 %v2199, 16
      %v2220 = vor.u32 %v2217, %v2218
      %v2221 = vrot.slane %v2217, 4
      %v2223 = vshrl.u32 %v2200, 16
      %v2225 = vrot.slane %v2223, 7
      %v2226 = vshll.u32 %v2200, 16
      %v2228 = vor.u32 %v2225, %v2226
      %v2229 = vrot.slane %v2225, 4
      %v2231 = vshrl.u32 %v2201, 16
      %v2233 = vrot.slane %v2231, 7
      %v2234 = vshll.u32 %v2201, 16
      %v2236 = vor.u32 %v2233, %v2234
      %v2237 = vrot.slane %v2233, 4
      %v2239 = vshrl.u32 %v2202, 16
      %v2241 = vrot.slane %v2239, 7
      %v2242 = vshll.u32 %v2202, 16
      %v2244 = vor.u32 %v2241, %v2242
      %v2245 = vrot.slane %v2241, 4
      %v2247 = vshrl.u32 %v2203, 16
      %v2249 = vrot.slane %v2247, 7
      %v2250 = vshll.u32 %v2203, 16
      %v2252 = vor.u32 %v2249, %v2250
      %v2253 = vrot.slane %v2249, 4
      %v2255 = vshrl.u32 %v2204, 16
      %v2257 = vrot.slane %v2255, 7
      %v2258 = vshll.u32 %v2204, 16
      %v2260 = vor.u32 %v2257, %v2258
      %v2261 = vrot.slane %v2257, 4
      %v2263 = vshrl.u32 %v2205, 16
      %v2265 = vrot.slane %v2263, 7
      %v2266 = vshll.u32 %v2205, 16
      %v2268 = vor.u32 %v2265, %v2266
      %v2269 = vrot.slane %v2265, 4
      %s2286 = scalar_lea.vmem [#allocation3], 8
      %v2287 = vld [vmem:[%s2286] sm:$0xf]
      %v2288 = vsel %vm482, %v2212, %v2287
      %2289 = vst [vmem:[%s2286] sm:$0xf] %v2288
      %v2290 = vld [vmem:[%s2286 + $0x4] sm:$0x1]
      %v2291 = vsel %vm488, %v2213, %v2290
      %2292 = vst [vmem:[%s2286 + $0x4] sm:$0x1] %v2291
      %v2293 = vld [vmem:[%s2286 + $0x8] sm:$0xf]
      %v2294 = vsel %vm482, %v2220, %v2293
      %2295 = vst [vmem:[%s2286 + $0x8] sm:$0xf] %v2294
      %v2296 = vld [vmem:[%s2286 + $0xc] sm:$0x1]
      %v2297 = vsel %vm488, %v2221, %v2296
      %2298 = vst [vmem:[%s2286 + $0xc] sm:$0x1] %v2297
      %v2299 = vld [vmem:[%s2286 + $0x10] sm:$0xf]
      %v2300 = vsel %vm482, %v2228, %v2299
      %2301 = vst [vmem:[%s2286 + $0x10] sm:$0xf] %v2300
      %v2302 = vld [vmem:[%s2286 + $0x14] sm:$0x1]
      %v2303 = vsel %vm488, %v2229, %v2302
      %2304 = vst [vmem:[%s2286 + $0x14] sm:$0x1] %v2303
      %v2305 = vld [vmem:[%s2286 + $0x18] sm:$0xf]
      %v2306 = vsel %vm482, %v2236, %v2305
      %2307 = vst [vmem:[%s2286 + $0x18] sm:$0xf] %v2306
      %v2308 = vld [vmem:[%s2286 + $0x1c] sm:$0x1]
      %v2309 = vsel %vm488, %v2237, %v2308
      %2310 = vst [vmem:[%s2286 + $0x1c] sm:$0x1] %v2309
      %v2311 = vld [vmem:[%s2286 + $0x20] sm:$0xf]
      %v2312 = vsel %vm482, %v2244, %v2311
      %2313 = vst [vmem:[%s2286 + $0x20] sm:$0xf] %v2312
      %v2314 = vld [vmem:[%s2286 + $0x24] sm:$0x1]
      %v2315 = vsel %vm488, %v2245, %v2314
      %2316 = vst [vmem:[%s2286 + $0x24] sm:$0x1] %v2315
      %v2317 = vld [vmem:[%s2286 + $0x28] sm:$0xf]
      %v2318 = vsel %vm482, %v2252, %v2317
      %2319 = vst [vmem:[%s2286 + $0x28] sm:$0xf] %v2318
      %v2320 = vld [vmem:[%s2286 + $0x2c] sm:$0x1]
      %v2321 = vsel %vm488, %v2253, %v2320
      %2322 = vst [vmem:[%s2286 + $0x2c] sm:$0x1] %v2321
      %v2323 = vld [vmem:[%s2286 + $0x30] sm:$0xf]
      %v2324 = vsel %vm482, %v2260, %v2323
      %2325 = vst [vmem:[%s2286 + $0x30] sm:$0xf] %v2324
      %v2326 = vld [vmem:[%s2286 + $0x34] sm:$0x1]
      %v2327 = vsel %vm488, %v2261, %v2326
      %2328 = vst [vmem:[%s2286 + $0x34] sm:$0x1] %v2327
      %v2329 = vld [vmem:[%s2286 + $0x38] sm:$0xf]
      %v2330 = vsel %vm482, %v2268, %v2329
      %2331 = vst [vmem:[%s2286 + $0x38] sm:$0xf] %v2330
      %v2332 = vld [vmem:[%s2286 + $0x3c] sm:$0x1]
      %v2333 = vsel %vm488, %v2269, %v2332
      %2334 = vst [vmem:[%s2286 + $0x3c] sm:$0x1] %v2333
      %v2335 = vld [vmem:[#allocation3] sm:$0xf]
      %v2336 = vld [vmem:[#allocation3 + $0x8] sm:$0xf]
      %v2337 = vld [vmem:[#allocation3 + $0x10] sm:$0xf]
      %v2338 = vld [vmem:[#allocation3 + $0x18] sm:$0xf]
      %v2339 = vld [vmem:[#allocation3 + $0x20] sm:$0xf]
      %v2340 = vld [vmem:[#allocation3 + $0x28] sm:$0xf]
      %v2341 = vld [vmem:[#allocation3 + $0x30] sm:$0xf]
      %v2342 = vld [vmem:[#allocation3 + $0x38] sm:$0xf]
      %v2343 = vld [vmem:[%s3] sm:$0xf]
      %v2344 = vld [vmem:[%s3 + $0x4] sm:$0xf]
      %v2345 = vld [vmem:[%s3 + $0x8] sm:$0xf]
      %v2346 = vld [vmem:[%s3 + $0xc] sm:$0xf]
      %v2347 = vld [vmem:[%s3 + $0x10] sm:$0xf]
      %v2348 = vld [vmem:[%s3 + $0x14] sm:$0xf]
      %v2349 = vld [vmem:[%s3 + $0x18] sm:$0xf]
      %v2350 = vld [vmem:[%s3 + $0x1c] sm:$0xf]
      %v2351 = vld [vmem:[%s3 + $0x20] sm:$0xf]
      %v2352 = vld [vmem:[%s3 + $0x24] sm:$0xf]
      %v2353 = vld [vmem:[%s3 + $0x28] sm:$0xf]
      %v2354 = vld [vmem:[%s3 + $0x2c] sm:$0xf]
      %v2355 = vld [vmem:[%s3 + $0x30] sm:$0xf]
      %v2356 = vld [vmem:[%s3 + $0x34] sm:$0xf]
      %v2357 = vld [vmem:[%s3 + $0x38] sm:$0xf]
      %v2358 = vld [vmem:[%s3 + $0x3c] sm:$0xf]
      %v2359 = vld [vmem:[#allocation3 + $0x4] sm:$0x1]
      %v2360 = vld [vmem:[#allocation3 + $0xc] sm:$0x1]
      %v2361 = vld [vmem:[#allocation3 + $0x14] sm:$0x1]
      %v2362 = vld [vmem:[#allocation3 + $0x1c] sm:$0x1]
      %v2363 = vld [vmem:[#allocation3 + $0x24] sm:$0x1]
      %v2364 = vld [vmem:[#allocation3 + $0x2c] sm:$0x1]
      %v2365 = vld [vmem:[#allocation3 + $0x34] sm:$0x1]
      %v2366 = vld [vmem:[#allocation3 + $0x3c] sm:$0x1]
      %v2368 = vshrl.u32 %v2335, 16
      %v2370 = vrot.slane %v2368, 4
      %v2371 = vshll.u32 %v2335, 16
      %v2373 = vrot.slane %v2371, 5
      %v2374 = vor.u32 %v2370, %v2373
      %v2375 = vrot.slane %v2374, 4
      %v2377 = vshll.u32 %v2359, 16
      %v2379 = vrot.slane %v2377, 5
      %v2380 = vsel %vm568, %v2375, %v2379
      %v2382 = vshrl.u32 %v2336, 16
      %v2384 = vrot.slane %v2382, 4
      %v2385 = vshll.u32 %v2336, 16
      %v2387 = vrot.slane %v2385, 5
      %v2388 = vor.u32 %v2384, %v2387
      %v2389 = vrot.slane %v2388, 4
      %v2391 = vshll.u32 %v2360, 16
      %v2393 = vrot.slane %v2391, 5
      %v2394 = vsel %vm568, %v2389, %v2393
      %v2396 = vshrl.u32 %v2337, 16
      %v2398 = vrot.slane %v2396, 4
      %v2399 = vshll.u32 %v2337, 16
      %v2401 = vrot.slane %v2399, 5
      %v2402 = vor.u32 %v2398, %v2401
      %v2403 = vrot.slane %v2402, 4
      %v2405 = vshll.u32 %v2361, 16
      %v2407 = vrot.slane %v2405, 5
      %v2408 = vsel %vm568, %v2403, %v2407
      %v2410 = vshrl.u32 %v2338, 16
      %v2412 = vrot.slane %v2410, 4
      %v2413 = vshll.u32 %v2338, 16
      %v2415 = vrot.slane %v2413, 5
      %v2416 = vor.u32 %v2412, %v2415
      %v2417 = vrot.slane %v2416, 4
      %v2419 = vshll.u32 %v2362, 16
      %v2421 = vrot.slane %v2419, 5
      %v2422 = vsel %vm568, %v2417, %v2421
      %v2424 = vshrl.u32 %v2339, 16
      %v2426 = vrot.slane %v2424, 4
      %v2427 = vshll.u32 %v2339, 16
      %v2429 = vrot.slane %v2427, 5
      %v2430 = vor.u32 %v2426, %v2429
      %v2431 = vrot.slane %v2430, 4
      %v2433 = vshll.u32 %v2363, 16
      %v2435 = vrot.slane %v2433, 5
      %v2436 = vsel %vm568, %v2431, %v2435
      %v2438 = vshrl.u32 %v2340, 16
      %v2440 = vrot.slane %v2438, 4
      %v2441 = vshll.u32 %v2340, 16
      %v2443 = vrot.slane %v2441, 5
      %v2444 = vor.u32 %v2440, %v2443
      %v2445 = vrot.slane %v2444, 4
      %v2447 = vshll.u32 %v2364, 16
      %v2449 = vrot.slane %v2447, 5
      %v2450 = vsel %vm568, %v2445, %v2449
      %v2452 = vshrl.u32 %v2341, 16
      %v2454 = vrot.slane %v2452, 4
      %v2455 = vshll.u32 %v2341, 16
      %v2457 = vrot.slane %v2455, 5
      %v2458 = vor.u32 %v2454, %v2457
      %v2459 = vrot.slane %v2458, 4
      %v2461 = vshll.u32 %v2365, 16
      %v2463 = vrot.slane %v2461, 5
      %v2464 = vsel %vm568, %v2459, %v2463
      %v2466 = vshrl.u32 %v2342, 16
      %v2468 = vrot.slane %v2466, 4
      %v2469 = vshll.u32 %v2342, 16
      %v2471 = vrot.slane %v2469, 5
      %v2472 = vor.u32 %v2468, %v2471
      %v2473 = vrot.slane %v2472, 4
      %v2475 = vshll.u32 %v2366, 16
      %v2477 = vrot.slane %v2475, 5
      %v2478 = vsel %vm568, %v2473, %v2477
      %s2479 = scalar_lea.vmem %s3, 64
      %v2480 = vld [vmem:[%s2479] sm:$0xf]
      %v2481 = vld [vmem:[%s2479 + $0x4] sm:$0xf]
      %v2482 = vld [vmem:[%s2479 + $0x8] sm:$0xf]
      %v2483 = vld [vmem:[%s2479 + $0xc] sm:$0xf]
      %v2484 = vld [vmem:[%s2479 + $0x10] sm:$0xf]
      %v2485 = vld [vmem:[%s2479 + $0x14] sm:$0xf]
      %v2486 = vld [vmem:[%s2479 + $0x18] sm:$0xf]
      %v2487 = vld [vmem:[%s2479 + $0x1c] sm:$0xf]
      %v2488 = vld [vmem:[%s2479 + $0x20] sm:$0xf]
      %v2489 = vld [vmem:[%s2479 + $0x24] sm:$0xf]
      %v2490 = vld [vmem:[%s2479 + $0x28] sm:$0xf]
      %v2491 = vld [vmem:[%s2479 + $0x2c] sm:$0xf]
      %v2492 = vld [vmem:[%s2479 + $0x30] sm:$0xf]
      %v2493 = vld [vmem:[%s2479 + $0x34] sm:$0xf]
      %v2494 = vld [vmem:[%s2479 + $0x38] sm:$0xf]
      %v2495 = vld [vmem:[%s2479 + $0x3c] sm:$0xf]
      %v2496 = vunpack.c.l.b16 %v2380
      %v2497 = vunpack.c.l.b16 %v2394
      %v2498 = vunpack.c.l.b16 %v2408
      %v2499 = vunpack.c.l.b16 %v2422
      %v2500 = vunpack.c.l.b16 %v2436
      %v2501 = vunpack.c.l.b16 %v2450
      %v2502 = vunpack.c.l.b16 %v2464
      %v2503 = vunpack.c.l.b16 %v2478
      %v2504 = vpack.c.b16 %v2497, %v2496
      %v2505 = vpack.c.b16 %v2499, %v2498
      %v2506 = vpack.c.b16 %v2501, %v2500
      %v2507 = vpack.c.b16 %v2503, %v2502
      %v2528 = vunpack.c.l.b16 %v2480
      %v2529 = vunpack.c.l.b16 %v2481
      %v2530 = vunpack.c.l.b16 %v2482
      %v2531 = vunpack.c.l.b16 %v2483
      %v2532 = vunpack.c.l.b16 %v2484
      %v2533 = vunpack.c.l.b16 %v2485
      %v2534 = vunpack.c.l.b16 %v2486
      %v2535 = vunpack.c.l.b16 %v2487
      %v2536 = vunpack.c.l.b16 %v2488
      %v2537 = vunpack.c.l.b16 %v2489
      %v2538 = vunpack.c.l.b16 %v2490
      %v2539 = vunpack.c.l.b16 %v2491
      %v2540 = vunpack.c.l.b16 %v2492
      %v2541 = vunpack.c.l.b16 %v2493
      %v2542 = vunpack.c.l.b16 %v2494
      %v2543 = vunpack.c.l.b16 %v2495
      %v2544 = vpack.c.b16 %v2529, %v2528
      %v2545 = vpack.c.b16 %v2531, %v2530
      %v2546 = vpack.c.b16 %v2533, %v2532
      %v2547 = vpack.c.b16 %v2535, %v2534
      %v2548 = vpack.c.b16 %v2537, %v2536
      %v2549 = vpack.c.b16 %v2539, %v2538
      %v2550 = vpack.c.b16 %v2541, %v2540
      %v2551 = vpack.c.b16 %v2543, %v2542
      %2560 = vmatpush.bf16.msra.mxu0 %v2551
      %2561 = vmatpush.bf16.msra.mxu0 %v2550
      %2562 = vmatpush.bf16.msra.mxu0 %v2549
      %2563 = vmatpush.bf16.msra.mxu0 %v2548
      %2564 = vmatpush.bf16.msra.mxu0 %v2547
      %2565 = vmatpush.bf16.msra.mxu0 %v2546
      %2566 = vmatpush.bf16.msra.mxu0 %v2545
      %2567 = vmatpush.bf16.msra.mxu0 %v2544
      %2568 = vmatmul.bf16.gmra.mxu0 %v2504
      %v2569 = vpop.f32.mrf.mxu0
      %v2570 = vadd.f32 0.0, %v2569
      %v2571 = vpop.f32.mrf.mxu0
      %v2572 = vadd.f32 0.0, %v2571
      %2573 = vmatmul.bf16.gmra.mxu0 %v2505
      %v2574 = vpop.f32.mrf.mxu0
      %v2575 = vadd.f32 0.0, %v2574
      %v2576 = vpop.f32.mrf.mxu0
      %v2577 = vadd.f32 0.0, %v2576
      %2578 = vmatmul.bf16.gmra.mxu0 %v2506
      %v2579 = vpop.f32.mrf.mxu0
      %v2580 = vadd.f32 0.0, %v2579
      %v2581 = vpop.f32.mrf.mxu0
      %v2582 = vadd.f32 0.0, %v2581
      %2583 = vmatmul.bf16.gmra.mxu0 %v2507
      %v2584 = vpop.f32.mrf.mxu0
      %v2585 = vadd.f32 0.0, %v2584
      %v2586 = vpop.f32.mrf.mxu0
      %v2587 = vadd.f32 0.0, %v2586
      %2588 = vdwg.mxu0
      %v2597 = vunpack.c.l.b16 %v2335
      %v2598 = vunpack.c.l.b16 %v2336
      %v2599 = vunpack.c.l.b16 %v2337
      %v2600 = vunpack.c.l.b16 %v2338
      %v2601 = vunpack.c.l.b16 %v2339
      %v2602 = vunpack.c.l.b16 %v2340
      %v2603 = vunpack.c.l.b16 %v2341
      %v2604 = vunpack.c.l.b16 %v2342
      %v2605 = vpack.c.b16 %v2598, %v2597
      %v2606 = vpack.c.b16 %v2600, %v2599
      %v2607 = vpack.c.b16 %v2602, %v2601
      %v2608 = vpack.c.b16 %v2604, %v2603
      %v2629 = vunpack.c.l.b16 %v2343
      %v2630 = vunpack.c.l.b16 %v2344
      %v2631 = vunpack.c.l.b16 %v2345
      %v2632 = vunpack.c.l.b16 %v2346
      %v2633 = vunpack.c.l.b16 %v2347
      %v2634 = vunpack.c.l.b16 %v2348
      %v2635 = vunpack.c.l.b16 %v2349
      %v2636 = vunpack.c.l.b16 %v2350
      %v2637 = vunpack.c.l.b16 %v2351
      %v2638 = vunpack.c.l.b16 %v2352
      %v2639 = vunpack.c.l.b16 %v2353
      %v2640 = vunpack.c.l.b16 %v2354
      %v2641 = vunpack.c.l.b16 %v2355
      %v2642 = vunpack.c.l.b16 %v2356
      %v2643 = vunpack.c.l.b16 %v2357
      %v2644 = vunpack.c.l.b16 %v2358
      %v2645 = vpack.c.b16 %v2630, %v2629
      %v2646 = vpack.c.b16 %v2632, %v2631
      %v2647 = vpack.c.b16 %v2634, %v2633
      %v2648 = vpack.c.b16 %v2636, %v2635
      %v2649 = vpack.c.b16 %v2638, %v2637
      %v2650 = vpack.c.b16 %v2640, %v2639
      %v2651 = vpack.c.b16 %v2642, %v2641
      %v2652 = vpack.c.b16 %v2644, %v2643
      %2661 = vmatpush.bf16.msra.mxu0 %v2652
      %2662 = vmatpush.bf16.msra.mxu0 %v2651
      %2663 = vmatpush.bf16.msra.mxu0 %v2650
      %2664 = vmatpush.bf16.msra.mxu0 %v2649
      %2665 = vmatpush.bf16.msra.mxu0 %v2648
      %2666 = vmatpush.bf16.msra.mxu0 %v2647
      %2667 = vmatpush.bf16.msra.mxu0 %v2646
      %2668 = vmatpush.bf16.msra.mxu0 %v2645
      %2669 = vmatmul.bf16.gmra.mxu0 %v2605
      %v2670 = vpop.f32.mrf.mxu0
      %v2671 = vadd.f32 %v2570, %v2670
      %v2672 = vpop.f32.mrf.mxu0
      %v2673 = vadd.f32 %v2572, %v2672
      %2674 = vmatmul.bf16.gmra.mxu0 %v2606
      %v2675 = vpop.f32.mrf.mxu0
      %v2676 = vadd.f32 %v2575, %v2675
      %v2677 = vpop.f32.mrf.mxu0
      %v2678 = vadd.f32 %v2577, %v2677
      %2679 = vmatmul.bf16.gmra.mxu0 %v2607
      %v2680 = vpop.f32.mrf.mxu0
      %v2681 = vadd.f32 %v2580, %v2680
      %v2682 = vpop.f32.mrf.mxu0
      %v2683 = vadd.f32 %v2582, %v2682
      %2684 = vmatmul.bf16.gmra.mxu0 %v2608
      %v2685 = vpop.f32.mrf.mxu0
      %v2686 = vadd.f32 %v2585, %v2685
      %v2687 = vpop.f32.mrf.mxu0
      %v2688 = vadd.f32 %v2587, %v2687
      %2689 = vdwg.mxu0
      %v2690 = vld [vmem:[#allocation3] sm:$0xe]
      %v2691 = vld [vmem:[#allocation3 + $0x8] sm:$0xe]
      %v2692 = vld [vmem:[#allocation3 + $0x10] sm:$0xe]
      %v2693 = vld [vmem:[#allocation3 + $0x18] sm:$0xe]
      %v2694 = vld [vmem:[#allocation3 + $0x20] sm:$0xe]
      %v2695 = vld [vmem:[#allocation3 + $0x28] sm:$0xe]
      %v2696 = vld [vmem:[#allocation3 + $0x30] sm:$0xe]
      %v2697 = vld [vmem:[#allocation3 + $0x38] sm:$0xe]
      %v2714 = vrot.slane %v2690, 5
      %v2715 = vrot.slane %v2714, 4
      %v2716 = vrot.slane %v2359, 5
      %v2717 = vsel %vm918, %v2715, %v2716
      %v2718 = vrot.slane %v2691, 5
      %v2719 = vrot.slane %v2718, 4
      %v2720 = vrot.slane %v2360, 5
      %v2721 = vsel %vm918, %v2719, %v2720
      %v2722 = vrot.slane %v2692, 5
      %v2723 = vrot.slane %v2722, 4
      %v2724 = vrot.slane %v2361, 5
      %v2725 = vsel %vm918, %v2723, %v2724
      %v2726 = vrot.slane %v2693, 5
      %v2727 = vrot.slane %v2726, 4
      %v2728 = vrot.slane %v2362, 5
      %v2729 = vsel %vm918, %v2727, %v2728
      %v2730 = vrot.slane %v2694, 5
      %v2731 = vrot.slane %v2730, 4
      %v2732 = vrot.slane %v2363, 5
      %v2733 = vsel %vm918, %v2731, %v2732
      %v2734 = vrot.slane %v2695, 5
      %v2735 = vrot.slane %v2734, 4
      %v2736 = vrot.slane %v2364, 5
      %v2737 = vsel %vm918, %v2735, %v2736
      %v2738 = vrot.slane %v2696, 5
      %v2739 = vrot.slane %v2738, 4
      %v2740 = vrot.slane %v2365, 5
      %v2741 = vsel %vm918, %v2739, %v2740
      %v2742 = vrot.slane %v2697, 5
      %v2743 = vrot.slane %v2742, 4
      %v2744 = vrot.slane %v2366, 5
      %v2745 = vsel %vm918, %v2743, %v2744
      %s2746 = scalar_lea.vmem %s3, 128
      %v2747 = vld [vmem:[%s2746] sm:$0xf]
      %v2748 = vld [vmem:[%s2746 + $0x4] sm:$0xf]
      %v2749 = vld [vmem:[%s2746 + $0x8] sm:$0xf]
      %v2750 = vld [vmem:[%s2746 + $0xc] sm:$0xf]
      %v2751 = vld [vmem:[%s2746 + $0x10] sm:$0xf]
      %v2752 = vld [vmem:[%s2746 + $0x14] sm:$0xf]
      %v2753 = vld [vmem:[%s2746 + $0x18] sm:$0xf]
      %v2754 = vld [vmem:[%s2746 + $0x1c] sm:$0xf]
      %v2755 = vld [vmem:[%s2746 + $0x20] sm:$0xf]
      %v2756 = vld [vmem:[%s2746 + $0x24] sm:$0xf]
      %v2757 = vld [vmem:[%s2746 + $0x28] sm:$0xf]
      %v2758 = vld [vmem:[%s2746 + $0x2c] sm:$0xf]
      %v2759 = vld [vmem:[%s2746 + $0x30] sm:$0xf]
      %v2760 = vld [vmem:[%s2746 + $0x34] sm:$0xf]
      %v2761 = vld [vmem:[%s2746 + $0x38] sm:$0xf]
      %v2762 = vld [vmem:[%s2746 + $0x3c] sm:$0xf]
      %v2763 = vunpack.c.l.b16 %v2717
      %v2764 = vunpack.c.l.b16 %v2721
      %v2765 = vunpack.c.l.b16 %v2725
      %v2766 = vunpack.c.l.b16 %v2729
      %v2767 = vunpack.c.l.b16 %v2733
      %v2768 = vunpack.c.l.b16 %v2737
      %v2769 = vunpack.c.l.b16 %v2741
      %v2770 = vunpack.c.l.b16 %v2745
      %v2771 = vpack.c.b16 %v2764, %v2763
      %v2772 = vpack.c.b16 %v2766, %v2765
      %v2773 = vpack.c.b16 %v2768, %v2767
      %v2774 = vpack.c.b16 %v2770, %v2769
      %v2795 = vunpack.c.l.b16 %v2747
      %v2796 = vunpack.c.l.b16 %v2748
      %v2797 = vunpack.c.l.b16 %v2749
      %v2798 = vunpack.c.l.b16 %v2750
      %v2799 = vunpack.c.l.b16 %v2751
      %v2800 = vunpack.c.l.b16 %v2752
      %v2801 = vunpack.c.l.b16 %v2753
      %v2802 = vunpack.c.l.b16 %v2754
      %v2803 = vunpack.c.l.b16 %v2755
      %v2804 = vunpack.c.l.b16 %v2756
      %v2805 = vunpack.c.l.b16 %v2757
      %v2806 = vunpack.c.l.b16 %v2758
      %v2807 = vunpack.c.l.b16 %v2759
      %v2808 = vunpack.c.l.b16 %v2760
      %v2809 = vunpack.c.l.b16 %v2761
      %v2810 = vunpack.c.l.b16 %v2762
      %v2811 = vpack.c.b16 %v2796, %v2795
      %v2812 = vpack.c.b16 %v2798, %v2797
      %v2813 = vpack.c.b16 %v2800, %v2799
      %v2814 = vpack.c.b16 %v2802, %v2801
      %v2815 = vpack.c.b16 %v2804, %v2803
      %v2816 = vpack.c.b16 %v2806, %v2805
      %v2817 = vpack.c.b16 %v2808, %v2807
      %v2818 = vpack.c.b16 %v2810, %v2809
      %2827 = vmatpush.bf16.msra.mxu0 %v2818
      %2828 = vmatpush.bf16.msra.mxu0 %v2817
      %2829 = vmatpush.bf16.msra.mxu0 %v2816
      %2830 = vmatpush.bf16.msra.mxu0 %v2815
      %2831 = vmatpush.bf16.msra.mxu0 %v2814
      %2832 = vmatpush.bf16.msra.mxu0 %v2813
      %2833 = vmatpush.bf16.msra.mxu0 %v2812
      %2834 = vmatpush.bf16.msra.mxu0 %v2811
      %2835 = vmatmul.bf16.gmra.mxu0 %v2771
      %v2836 = vpop.f32.mrf.mxu0
      %v2837 = vadd.f32 0.0, %v2836
      %v2838 = vpop.f32.mrf.mxu0
      %v2839 = vadd.f32 0.0, %v2838
      %2840 = vmatmul.bf16.gmra.mxu0 %v2772
      %v2841 = vpop.f32.mrf.mxu0
      %v2842 = vadd.f32 0.0, %v2841
      %v2843 = vpop.f32.mrf.mxu0
      %v2844 = vadd.f32 0.0, %v2843
      %2845 = vmatmul.bf16.gmra.mxu0 %v2773
      %v2846 = vpop.f32.mrf.mxu0
      %v2847 = vadd.f32 0.0, %v2846
      %v2848 = vpop.f32.mrf.mxu0
      %v2849 = vadd.f32 0.0, %v2848
      %2850 = vmatmul.bf16.gmra.mxu0 %v2774
      %v2851 = vpop.f32.mrf.mxu0
      %v2852 = vadd.f32 0.0, %v2851
      %v2853 = vpop.f32.mrf.mxu0
      %v2854 = vadd.f32 0.0, %v2853
      %2855 = vdwg.mxu0
      %v2856 = vadd.f32 %v2671, %v2837
      %v2857 = vadd.f32 %v2673, %v2839
      %v2858 = vadd.f32 %v2676, %v2842
      %v2859 = vadd.f32 %v2678, %v2844
      %v2860 = vadd.f32 %v2681, %v2847
      %v2861 = vadd.f32 %v2683, %v2849
      %v2862 = vadd.f32 %v2686, %v2852
      %v2863 = vadd.f32 %v2688, %v2854
      %v2864 = vld [vmem:[%s2286] sm:$0xf]
      %v2865 = vld [vmem:[%s2286 + $0x8] sm:$0xf]
      %v2866 = vld [vmem:[%s2286 + $0x10] sm:$0xf]
      %v2867 = vld [vmem:[%s2286 + $0x18] sm:$0xf]
      %v2868 = vld [vmem:[%s2286 + $0x20] sm:$0xf]
      %v2869 = vld [vmem:[%s2286 + $0x28] sm:$0xf]
      %v2870 = vld [vmem:[%s2286 + $0x30] sm:$0xf]
      %v2871 = vld [vmem:[%s2286 + $0x38] sm:$0xf]
      %s2872 = scalar_lea.vmem %s3, 192
      %v2873 = vld [vmem:[%s2872] sm:$0xf]
      %v2874 = vld [vmem:[%s2872 + $0x4] sm:$0xf]
      %v2875 = vld [vmem:[%s2872 + $0x8] sm:$0xf]
      %v2876 = vld [vmem:[%s2872 + $0xc] sm:$0xf]
      %v2877 = vld [vmem:[%s2872 + $0x10] sm:$0xf]
      %v2878 = vld [vmem:[%s2872 + $0x14] sm:$0xf]
      %v2879 = vld [vmem:[%s2872 + $0x18] sm:$0xf]
      %v2880 = vld [vmem:[%s2872 + $0x1c] sm:$0xf]
      %v2881 = vld [vmem:[%s2872 + $0x20] sm:$0xf]
      %v2882 = vld [vmem:[%s2872 + $0x24] sm:$0xf]
      %v2883 = vld [vmem:[%s2872 + $0x28] sm:$0xf]
      %v2884 = vld [vmem:[%s2872 + $0x2c] sm:$0xf]
      %v2885 = vld [vmem:[%s2872 + $0x30] sm:$0xf]
      %v2886 = vld [vmem:[%s2872 + $0x34] sm:$0xf]
      %v2887 = vld [vmem:[%s2872 + $0x38] sm:$0xf]
      %v2888 = vld [vmem:[%s2872 + $0x3c] sm:$0xf]
      %v2897 = vunpack.c.l.b16 %v2864
      %v2898 = vunpack.c.l.b16 %v2865
      %v2899 = vunpack.c.l.b16 %v2866
      %v2900 = vunpack.c.l.b16 %v2867
      %v2901 = vunpack.c.l.b16 %v2868
      %v2902 = vunpack.c.l.b16 %v2869
      %v2903 = vunpack.c.l.b16 %v2870
      %v2904 = vunpack.c.l.b16 %v2871
      %v2905 = vpack.c.b16 %v2898, %v2897
      %v2906 = vpack.c.b16 %v2900, %v2899
      %v2907 = vpack.c.b16 %v2902, %v2901
      %v2908 = vpack.c.b16 %v2904, %v2903
      %v2929 = vunpack.c.l.b16 %v2873
      %v2930 = vunpack.c.l.b16 %v2874
      %v2931 = vunpack.c.l.b16 %v2875
      %v2932 = vunpack.c.l.b16 %v2876
      %v2933 = vunpack.c.l.b16 %v2877
      %v2934 = vunpack.c.l.b16 %v2878
      %v2935 = vunpack.c.l.b16 %v2879
      %v2936 = vunpack.c.l.b16 %v2880
      %v2937 = vunpack.c.l.b16 %v2881
      %v2938 = vunpack.c.l.b16 %v2882
      %v2939 = vunpack.c.l.b16 %v2883
      %v2940 = vunpack.c.l.b16 %v2884
      %v2941 = vunpack.c.l.b16 %v2885
      %v2942 = vunpack.c.l.b16 %v2886
      %v2943 = vunpack.c.l.b16 %v2887
      %v2944 = vunpack.c.l.b16 %v2888
      %v2945 = vpack.c.b16 %v2930, %v2929
      %v2946 = vpack.c.b16 %v2932, %v2931
      %v2947 = vpack.c.b16 %v2934, %v2933
      %v2948 = vpack.c.b16 %v2936, %v2935
      %v2949 = vpack.c.b16 %v2938, %v2937
      %v2950 = vpack.c.b16 %v2940, %v2939
      %v2951 = vpack.c.b16 %v2942, %v2941
      %v2952 = vpack.c.b16 %v2944, %v2943
      %2961 = vmatpush.bf16.msra.mxu0 %v2952
      %2962 = vmatpush.bf16.msra.mxu0 %v2951
      %2963 = vmatpush.bf16.msra.mxu0 %v2950
      %2964 = vmatpush.bf16.msra.mxu0 %v2949
      %2965 = vmatpush.bf16.msra.mxu0 %v2948
      %2966 = vmatpush.bf16.msra.mxu0 %v2947
      %2967 = vmatpush.bf16.msra.mxu0 %v2946
      %2968 = vmatpush.bf16.msra.mxu0 %v2945
      %2969 = vmatmul.bf16.gmra.mxu0 %v2905
      %v2970 = vpop.f32.mrf.mxu0
      %v2971 = vadd.f32 0.0, %v2970
      %v2972 = vpop.f32.mrf.mxu0
      %v2973 = vadd.f32 0.0, %v2972
      %2974 = vmatmul.bf16.gmra.mxu0 %v2906
      %v2975 = vpop.f32.mrf.mxu0
      %v2976 = vadd.f32 0.0, %v2975
      %v2977 = vpop.f32.mrf.mxu0
      %v2978 = vadd.f32 0.0, %v2977
      %2979 = vmatmul.bf16.gmra.mxu0 %v2907
      %v2980 = vpop.f32.mrf.mxu0
      %v2981 = vadd.f32 0.0, %v2980
      %v2982 = vpop.f32.mrf.mxu0
      %v2983 = vadd.f32 0.0, %v2982
      %2984 = vmatmul.bf16.gmra.mxu0 %v2908
      %v2985 = vpop.f32.mrf.mxu0
      %v2986 = vadd.f32 0.0, %v2985
      %v2987 = vpop.f32.mrf.mxu0
      %v2988 = vadd.f32 0.0, %v2987
      %2989 = vdwg.mxu0
      %v2990 = vadd.f32 %v2856, %v2971
      %v2991 = vadd.f32 %v2857, %v2973
      %v2992 = vadd.f32 %v2858, %v2976
      %v2993 = vadd.f32 %v2859, %v2978
      %v2994 = vadd.f32 %v2860, %v2981
      %v2995 = vadd.f32 %v2861, %v2983
      %v2996 = vadd.f32 %v2862, %v2986
      %v2997 = vadd.f32 %v2863, %v2988
      %v2998 = vld [vmem:[%s2286] sm:$0xf]
      %v2999 = vld [vmem:[%s2286 + $0x4] sm:$0x1]
      %v3000 = vld [vmem:[%s2286 + $0x8] sm:$0xf]
      %v3001 = vld [vmem:[%s2286 + $0xc] sm:$0x1]
      %v3002 = vld [vmem:[%s2286 + $0x10] sm:$0xf]
      %v3003 = vld [vmem:[%s2286 + $0x14] sm:$0x1]
      %v3004 = vld [vmem:[%s2286 + $0x18] sm:$0xf]
      %v3005 = vld [vmem:[%s2286 + $0x1c] sm:$0x1]
      %v3006 = vld [vmem:[%s2286 + $0x20] sm:$0xf]
      %v3007 = vld [vmem:[%s2286 + $0x24] sm:$0x1]
      %v3008 = vld [vmem:[%s2286 + $0x28] sm:$0xf]
      %v3009 = vld [vmem:[%s2286 + $0x2c] sm:$0x1]
      %v3010 = vld [vmem:[%s2286 + $0x30] sm:$0xf]
      %v3011 = vld [vmem:[%s2286 + $0x34] sm:$0x1]
      %v3012 = vld [vmem:[%s2286 + $0x38] sm:$0xf]
      %v3013 = vld [vmem:[%s2286 + $0x3c] sm:$0x1]
      %v3015 = vshrl.u32 %v2998, 16
      %v3017 = vrot.slane %v3015, 4
      %v3018 = vshll.u32 %v2998, 16
      %v3020 = vrot.slane %v3018, 5
      %v3021 = vor.u32 %v3017, %v3020
      %v3022 = vrot.slane %v3021, 4
      %v3024 = vshll.u32 %v2999, 16
      %v3026 = vrot.slane %v3024, 5
      %v3027 = vsel %vm568, %v3022, %v3026
      %v3029 = vshrl.u32 %v3000, 16
      %v3031 = vrot.slane %v3029, 4
      %v3032 = vshll.u32 %v3000, 16
      %v3034 = vrot.slane %v3032, 5
      %v3035 = vor.u32 %v3031, %v3034
      %v3036 = vrot.slane %v3035, 4
      %v3038 = vshll.u32 %v3001, 16
      %v3040 = vrot.slane %v3038, 5
      %v3041 = vsel %vm568, %v3036, %v3040
      %v3043 = vshrl.u32 %v3002, 16
      %v3045 = vrot.slane %v3043, 4
      %v3046 = vshll.u32 %v3002, 16
      %v3048 = vrot.slane %v3046, 5
      %v3049 = vor.u32 %v3045, %v3048
      %v3050 = vrot.slane %v3049, 4
      %v3052 = vshll.u32 %v3003, 16
      %v3054 = vrot.slane %v3052, 5
      %v3055 = vsel %vm568, %v3050, %v3054
      %v3057 = vshrl.u32 %v3004, 16
      %v3059 = vrot.slane %v3057, 4
      %v3060 = vshll.u32 %v3004, 16
      %v3062 = vrot.slane %v3060, 5
      %v3063 = vor.u32 %v3059, %v3062
      %v3064 = vrot.slane %v3063, 4
      %v3066 = vshll.u32 %v3005, 16
      %v3068 = vrot.slane %v3066, 5
      %v3069 = vsel %vm568, %v3064, %v3068
      %v3071 = vshrl.u32 %v3006, 16
      %v3073 = vrot.slane %v3071, 4
      %v3074 = vshll.u32 %v3006, 16
      %v3076 = vrot.slane %v3074, 5
      %v3077 = vor.u32 %v3073, %v3076
      %v3078 = vrot.slane %v3077, 4
      %v3080 = vshll.u32 %v3007, 16
      %v3082 = vrot.slane %v3080, 5
      %v3083 = vsel %vm568, %v3078, %v3082
      %v3085 = vshrl.u32 %v3008, 16
      %v3087 = vrot.slane %v3085, 4
      %v3088 = vshll.u32 %v3008, 16
      %v3090 = vrot.slane %v3088, 5
      %v3091 = vor.u32 %v3087, %v3090
      %v3092 = vrot.slane %v3091, 4
      %v3094 = vshll.u32 %v3009, 16
      %v3096 = vrot.slane %v3094, 5
      %v3097 = vsel %vm568, %v3092, %v3096
      %v3099 = vshrl.u32 %v3010, 16
      %v3101 = vrot.slane %v3099, 4
      %v3102 = vshll.u32 %v3010, 16
      %v3104 = vrot.slane %v3102, 5
      %v3105 = vor.u32 %v3101, %v3104
      %v3106 = vrot.slane %v3105, 4
      %v3108 = vshll.u32 %v3011, 16
      %v3110 = vrot.slane %v3108, 5
      %v3111 = vsel %vm568, %v3106, %v3110
      %v3113 = vshrl.u32 %v3012, 16
      %v3115 = vrot.slane %v3113, 4
      %v3116 = vshll.u32 %v3012, 16
      %v3118 = vrot.slane %v3116, 5
      %v3119 = vor.u32 %v3115, %v3118
      %v3120 = vrot.slane %v3119, 4
      %v3122 = vshll.u32 %v3013, 16
      %v3124 = vrot.slane %v3122, 5
      %v3125 = vsel %vm568, %v3120, %v3124
      %s3126 = scalar_lea.vmem %s3, 256
      %v3127 = vld [vmem:[%s3126] sm:$0xf]
      %v3128 = vld [vmem:[%s3126 + $0x4] sm:$0xf]
      %v3129 = vld [vmem:[%s3126 + $0x8] sm:$0xf]
      %v3130 = vld [vmem:[%s3126 + $0xc] sm:$0xf]
      %v3131 = vld [vmem:[%s3126 + $0x10] sm:$0xf]
      %v3132 = vld [vmem:[%s3126 + $0x14] sm:$0xf]
      %v3133 = vld [vmem:[%s3126 + $0x18] sm:$0xf]
      %v3134 = vld [vmem:[%s3126 + $0x1c] sm:$0xf]
      %v3135 = vld [vmem:[%s3126 + $0x20] sm:$0xf]
      %v3136 = vld [vmem:[%s3126 + $0x24] sm:$0xf]
      %v3137 = vld [vmem:[%s3126 + $0x28] sm:$0xf]
      %v3138 = vld [vmem:[%s3126 + $0x2c] sm:$0xf]
      %v3139 = vld [vmem:[%s3126 + $0x30] sm:$0xf]
      %v3140 = vld [vmem:[%s3126 + $0x34] sm:$0xf]
      %v3141 = vld [vmem:[%s3126 + $0x38] sm:$0xf]
      %v3142 = vld [vmem:[%s3126 + $0x3c] sm:$0xf]
      %v3143 = vunpack.c.l.b16 %v3027
      %v3144 = vunpack.c.l.b16 %v3041
      %v3145 = vunpack.c.l.b16 %v3055
      %v3146 = vunpack.c.l.b16 %v3069
      %v3147 = vunpack.c.l.b16 %v3083
      %v3148 = vunpack.c.l.b16 %v3097
      %v3149 = vunpack.c.l.b16 %v3111
      %v3150 = vunpack.c.l.b16 %v3125
      %v3151 = vpack.c.b16 %v3144, %v3143
      %v3152 = vpack.c.b16 %v3146, %v3145
      %v3153 = vpack.c.b16 %v3148, %v3147
      %v3154 = vpack.c.b16 %v3150, %v3149
      %v3175 = vunpack.c.l.b16 %v3127
      %v3176 = vunpack.c.l.b16 %v3128
      %v3177 = vunpack.c.l.b16 %v3129
      %v3178 = vunpack.c.l.b16 %v3130
      %v3179 = vunpack.c.l.b16 %v3131
      %v3180 = vunpack.c.l.b16 %v3132
      %v3181 = vunpack.c.l.b16 %v3133
      %v3182 = vunpack.c.l.b16 %v3134
      %v3183 = vunpack.c.l.b16 %v3135
      %v3184 = vunpack.c.l.b16 %v3136
      %v3185 = vunpack.c.l.b16 %v3137
      %v3186 = vunpack.c.l.b16 %v3138
      %v3187 = vunpack.c.l.b16 %v3139
      %v3188 = vunpack.c.l.b16 %v3140
      %v3189 = vunpack.c.l.b16 %v3141
      %v3190 = vunpack.c.l.b16 %v3142
      %v3191 = vpack.c.b16 %v3176, %v3175
      %v3192 = vpack.c.b16 %v3178, %v3177
      %v3193 = vpack.c.b16 %v3180, %v3179
      %v3194 = vpack.c.b16 %v3182, %v3181
      %v3195 = vpack.c.b16 %v3184, %v3183
      %v3196 = vpack.c.b16 %v3186, %v3185
      %v3197 = vpack.c.b16 %v3188, %v3187
      %v3198 = vpack.c.b16 %v3190, %v3189
      %3207 = vmatpush.bf16.msra.mxu0 %v3198
      %3208 = vmatpush.bf16.msra.mxu0 %v3197
      %3209 = vmatpush.bf16.msra.mxu0 %v3196
      %3210 = vmatpush.bf16.msra.mxu0 %v3195
      %3211 = vmatpush.bf16.msra.mxu0 %v3194
      %3212 = vmatpush.bf16.msra.mxu0 %v3193
      %3213 = vmatpush.bf16.msra.mxu0 %v3192
      %3214 = vmatpush.bf16.msra.mxu0 %v3191
      %3215 = vmatmul.bf16.gmra.mxu0 %v3151
      %v3216 = vpop.f32.mrf.mxu0
      %v3217 = vadd.f32 0.0, %v3216
      %v3218 = vpop.f32.mrf.mxu0
      %v3219 = vadd.f32 0.0, %v3218
      %3220 = vmatmul.bf16.gmra.mxu0 %v3152
      %v3221 = vpop.f32.mrf.mxu0
      %v3222 = vadd.f32 0.0, %v3221
      %v3223 = vpop.f32.mrf.mxu0
      %v3224 = vadd.f32 0.0, %v3223
      %3225 = vmatmul.bf16.gmra.mxu0 %v3153
      %v3226 = vpop.f32.mrf.mxu0
      %v3227 = vadd.f32 0.0, %v3226
      %v3228 = vpop.f32.mrf.mxu0
      %v3229 = vadd.f32 0.0, %v3228
      %3230 = vmatmul.bf16.gmra.mxu0 %v3154
      %v3231 = vpop.f32.mrf.mxu0
      %v3232 = vadd.f32 0.0, %v3231
      %v3233 = vpop.f32.mrf.mxu0
      %v3234 = vadd.f32 0.0, %v3233
      %3235 = vdwg.mxu0
      %v3236 = vadd.f32 %v2990, %v3217
      %v3237 = vadd.f32 %v2991, %v3219
      %v3238 = vadd.f32 %v2992, %v3222
      %v3239 = vadd.f32 %v2993, %v3224
      %v3240 = vadd.f32 %v2994, %v3227
      %v3241 = vadd.f32 %v2995, %v3229
      %v3242 = vadd.f32 %v2996, %v3232
      %v3243 = vadd.f32 %v2997, %v3234
      %v3244 = vld [vmem:[%s2286] sm:$0xe]
      %v3245 = vld [vmem:[%s2286 + $0x8] sm:$0xe]
      %v3246 = vld [vmem:[%s2286 + $0x10] sm:$0xe]
      %v3247 = vld [vmem:[%s2286 + $0x18] sm:$0xe]
      %v3248 = vld [vmem:[%s2286 + $0x20] sm:$0xe]
      %v3249 = vld [vmem:[%s2286 + $0x28] sm:$0xe]
      %v3250 = vld [vmem:[%s2286 + $0x30] sm:$0xe]
      %v3251 = vld [vmem:[%s2286 + $0x38] sm:$0xe]
      %v3268 = vrot.slane %v3244, 5
      %v3269 = vrot.slane %v3268, 4
      %v3270 = vrot.slane %v2999, 5
      %v3271 = vsel %vm918, %v3269, %v3270
      %v3272 = vrot.slane %v3245, 5
      %v3273 = vrot.slane %v3272, 4
      %v3274 = vrot.slane %v3001, 5
      %v3275 = vsel %vm918, %v3273, %v3274
      %v3276 = vrot.slane %v3246, 5
      %v3277 = vrot.slane %v3276, 4
      %v3278 = vrot.slane %v3003, 5
      %v3279 = vsel %vm918, %v3277, %v3278
      %v3280 = vrot.slane %v3247, 5
      %v3281 = vrot.slane %v3280, 4
      %v3282 = vrot.slane %v3005, 5
      %v3283 = vsel %vm918, %v3281, %v3282
      %v3284 = vrot.slane %v3248, 5
      %v3285 = vrot.slane %v3284, 4
      %v3286 = vrot.slane %v3007, 5
      %v3287 = vsel %vm918, %v3285, %v3286
      %v3288 = vrot.slane %v3249, 5
      %v3289 = vrot.slane %v3288, 4
      %v3290 = vrot.slane %v3009, 5
      %v3291 = vsel %vm918, %v3289, %v3290
      %v3292 = vrot.slane %v3250, 5
      %v3293 = vrot.slane %v3292, 4
      %v3294 = vrot.slane %v3011, 5
      %v3295 = vsel %vm918, %v3293, %v3294
      %v3296 = vrot.slane %v3251, 5
      %v3297 = vrot.slane %v3296, 4
      %v3298 = vrot.slane %v3013, 5
      %v3299 = vsel %vm918, %v3297, %v3298
      %s3300 = scalar_lea.vmem %s3, 320
      %v3301 = vld [vmem:[%s3300] sm:$0xf]
      %v3302 = vld [vmem:[%s3300 + $0x4] sm:$0xf]
      %v3303 = vld [vmem:[%s3300 + $0x8] sm:$0xf]
      %v3304 = vld [vmem:[%s3300 + $0xc] sm:$0xf]
      %v3305 = vld [vmem:[%s3300 + $0x10] sm:$0xf]
      %v3306 = vld [vmem:[%s3300 + $0x14] sm:$0xf]
      %v3307 = vld [vmem:[%s3300 + $0x18] sm:$0xf]
      %v3308 = vld [vmem:[%s3300 + $0x1c] sm:$0xf]
      %v3309 = vld [vmem:[%s3300 + $0x20] sm:$0xf]
      %v3310 = vld [vmem:[%s3300 + $0x24] sm:$0xf]
      %v3311 = vld [vmem:[%s3300 + $0x28] sm:$0xf]
      %v3312 = vld [vmem:[%s3300 + $0x2c] sm:$0xf]
      %v3313 = vld [vmem:[%s3300 + $0x30] sm:$0xf]
      %v3314 = vld [vmem:[%s3300 + $0x34] sm:$0xf]
      %v3315 = vld [vmem:[%s3300 + $0x38] sm:$0xf]
      %v3316 = vld [vmem:[%s3300 + $0x3c] sm:$0xf]
      %v3317 = vunpack.c.l.b16 %v3271
      %v3318 = vunpack.c.l.b16 %v3275
      %v3319 = vunpack.c.l.b16 %v3279
      %v3320 = vunpack.c.l.b16 %v3283
      %v3321 = vunpack.c.l.b16 %v3287
      %v3322 = vunpack.c.l.b16 %v3291
      %v3323 = vunpack.c.l.b16 %v3295
      %v3324 = vunpack.c.l.b16 %v3299
      %v3325 = vpack.c.b16 %v3318, %v3317
      %v3326 = vpack.c.b16 %v3320, %v3319
      %v3327 = vpack.c.b16 %v3322, %v3321
      %v3328 = vpack.c.b16 %v3324, %v3323
      %v3349 = vunpack.c.l.b16 %v3301
      %v3350 = vunpack.c.l.b16 %v3302
      %v3351 = vunpack.c.l.b16 %v3303
      %v3352 = vunpack.c.l.b16 %v3304
      %v3353 = vunpack.c.l.b16 %v3305
      %v3354 = vunpack.c.l.b16 %v3306
      %v3355 = vunpack.c.l.b16 %v3307
      %v3356 = vunpack.c.l.b16 %v3308
      %v3357 = vunpack.c.l.b16 %v3309
      %v3358 = vunpack.c.l.b16 %v3310
      %v3359 = vunpack.c.l.b16 %v3311
      %v3360 = vunpack.c.l.b16 %v3312
      %v3361 = vunpack.c.l.b16 %v3313
      %v3362 = vunpack.c.l.b16 %v3314
      %v3363 = vunpack.c.l.b16 %v3315
      %v3364 = vunpack.c.l.b16 %v3316
      %v3365 = vpack.c.b16 %v3350, %v3349
      %v3366 = vpack.c.b16 %v3352, %v3351
      %v3367 = vpack.c.b16 %v3354, %v3353
      %v3368 = vpack.c.b16 %v3356, %v3355
      %v3369 = vpack.c.b16 %v3358, %v3357
      %v3370 = vpack.c.b16 %v3360, %v3359
      %v3371 = vpack.c.b16 %v3362, %v3361
      %v3372 = vpack.c.b16 %v3364, %v3363
      %3381 = vmatpush.bf16.msra.mxu0 %v3372
      %3382 = vmatpush.bf16.msra.mxu0 %v3371
      %3383 = vmatpush.bf16.msra.mxu0 %v3370
      %3384 = vmatpush.bf16.msra.mxu0 %v3369
      %3385 = vmatpush.bf16.msra.mxu0 %v3368
      %3386 = vmatpush.bf16.msra.mxu0 %v3367
      %3387 = vmatpush.bf16.msra.mxu0 %v3366
      %3388 = vmatpush.bf16.msra.mxu0 %v3365
      %3389 = vmatmul.bf16.gmra.mxu0 %v3325
      %v3390 = vpop.f32.mrf.mxu0
      %v3391 = vadd.f32 0.0, %v3390
      %v3392 = vpop.f32.mrf.mxu0
      %v3393 = vadd.f32 0.0, %v3392
      %3394 = vmatmul.bf16.gmra.mxu0 %v3326
      %v3395 = vpop.f32.mrf.mxu0
      %v3396 = vadd.f32 0.0, %v3395
      %v3397 = vpop.f32.mrf.mxu0
      %v3398 = vadd.f32 0.0, %v3397
      %3399 = vmatmul.bf16.gmra.mxu0 %v3327
      %v3400 = vpop.f32.mrf.mxu0
      %v3401 = vadd.f32 0.0, %v3400
      %v3402 = vpop.f32.mrf.mxu0
      %v3403 = vadd.f32 0.0, %v3402
      %3404 = vmatmul.bf16.gmra.mxu0 %v3328
      %v3405 = vpop.f32.mrf.mxu0
      %v3406 = vadd.f32 0.0, %v3405
      %v3407 = vpop.f32.mrf.mxu0
      %v3408 = vadd.f32 0.0, %v3407
      %3409 = vdwg.mxu0
      %v3410 = vadd.f32 %v3236, %v3391
      %v3411 = vadd.f32 %v3237, %v3393
      %v3412 = vadd.f32 %v3238, %v3396
      %v3413 = vadd.f32 %v3239, %v3398
      %v3414 = vadd.f32 %v3240, %v3401
      %v3415 = vadd.f32 %v3241, %v3403
      %v3416 = vadd.f32 %v3242, %v3406
      %v3417 = vadd.f32 %v3243, %v3408
      %s3418 = scalar_lea.vmem [#allocation3], 16
      %v3419 = vld [vmem:[%s3418] sm:$0xf]
      %v3420 = vld [vmem:[%s3418 + $0x8] sm:$0xf]
      %v3421 = vld [vmem:[%s3418 + $0x10] sm:$0xf]
      %v3422 = vld [vmem:[%s3418 + $0x18] sm:$0xf]
      %v3423 = vld [vmem:[%s3418 + $0x20] sm:$0xf]
      %v3424 = vld [vmem:[%s3418 + $0x28] sm:$0xf]
      %v3425 = vld [vmem:[%s3418 + $0x30] sm:$0xf]
      %v3426 = vld [vmem:[%s3418 + $0x38] sm:$0xf]
      %s3427 = scalar_lea.vmem %s3, 384
      %v3428 = vld [vmem:[%s3427] sm:$0xf]
      %v3429 = vld [vmem:[%s3427 + $0x4] sm:$0xf]
      %v3430 = vld [vmem:[%s3427 + $0x8] sm:$0xf]
      %v3431 = vld [vmem:[%s3427 + $0xc] sm:$0xf]
      %v3432 = vld [vmem:[%s3427 + $0x10] sm:$0xf]
      %v3433 = vld [vmem:[%s3427 + $0x14] sm:$0xf]
      %v3434 = vld [vmem:[%s3427 + $0x18] sm:$0xf]
      %v3435 = vld [vmem:[%s3427 + $0x1c] sm:$0xf]
      %v3436 = vld [vmem:[%s3427 + $0x20] sm:$0xf]
      %v3437 = vld [vmem:[%s3427 + $0x24] sm:$0xf]
      %v3438 = vld [vmem:[%s3427 + $0x28] sm:$0xf]
      %v3439 = vld [vmem:[%s3427 + $0x2c] sm:$0xf]
      %v3440 = vld [vmem:[%s3427 + $0x30] sm:$0xf]
      %v3441 = vld [vmem:[%s3427 + $0x34] sm:$0xf]
      %v3442 = vld [vmem:[%s3427 + $0x38] sm:$0xf]
      %v3443 = vld [vmem:[%s3427 + $0x3c] sm:$0xf]
      %v3452 = vunpack.c.l.b16 %v3419
      %v3453 = vunpack.c.l.b16 %v3420
      %v3454 = vunpack.c.l.b16 %v3421
      %v3455 = vunpack.c.l.b16 %v3422
      %v3456 = vunpack.c.l.b16 %v3423
      %v3457 = vunpack.c.l.b16 %v3424
      %v3458 = vunpack.c.l.b16 %v3425
      %v3459 = vunpack.c.l.b16 %v3426
      %v3460 = vpack.c.b16 %v3453, %v3452
      %v3461 = vpack.c.b16 %v3455, %v3454
      %v3462 = vpack.c.b16 %v3457, %v3456
      %v3463 = vpack.c.b16 %v3459, %v3458
      %v3484 = vunpack.c.l.b16 %v3428
      %v3485 = vunpack.c.l.b16 %v3429
      %v3486 = vunpack.c.l.b16 %v3430
      %v3487 = vunpack.c.l.b16 %v3431
      %v3488 = vunpack.c.l.b16 %v3432
      %v3489 = vunpack.c.l.b16 %v3433
      %v3490 = vunpack.c.l.b16 %v3434
      %v3491 = vunpack.c.l.b16 %v3435
      %v3492 = vunpack.c.l.b16 %v3436
      %v3493 = vunpack.c.l.b16 %v3437
      %v3494 = vunpack.c.l.b16 %v3438
      %v3495 = vunpack.c.l.b16 %v3439
      %v3496 = vunpack.c.l.b16 %v3440
      %v3497 = vunpack.c.l.b16 %v3441
      %v3498 = vunpack.c.l.b16 %v3442
      %v3499 = vunpack.c.l.b16 %v3443
      %v3500 = vpack.c.b16 %v3485, %v3484
      %v3501 = vpack.c.b16 %v3487, %v3486
      %v3502 = vpack.c.b16 %v3489, %v3488
      %v3503 = vpack.c.b16 %v3491, %v3490
      %v3504 = vpack.c.b16 %v3493, %v3492
      %v3505 = vpack.c.b16 %v3495, %v3494
      %v3506 = vpack.c.b16 %v3497, %v3496
      %v3507 = vpack.c.b16 %v3499, %v3498
      %3516 = vmatpush.bf16.msra.mxu0 %v3507
      %3517 = vmatpush.bf16.msra.mxu0 %v3506
      %3518 = vmatpush.bf16.msra.mxu0 %v3505
      %3519 = vmatpush.bf16.msra.mxu0 %v3504
      %3520 = vmatpush.bf16.msra.mxu0 %v3503
      %3521 = vmatpush.bf16.msra.mxu0 %v3502
      %3522 = vmatpush.bf16.msra.mxu0 %v3501
      %3523 = vmatpush.bf16.msra.mxu0 %v3500
      %3524 = vmatmul.bf16.gmra.mxu0 %v3460
      %v3525 = vpop.f32.mrf.mxu0
      %v3526 = vadd.f32 0.0, %v3525
      %v3527 = vpop.f32.mrf.mxu0
      %v3528 = vadd.f32 0.0, %v3527
      %3529 = vmatmul.bf16.gmra.mxu0 %v3461
      %v3530 = vpop.f32.mrf.mxu0
      %v3531 = vadd.f32 0.0, %v3530
      %v3532 = vpop.f32.mrf.mxu0
      %v3533 = vadd.f32 0.0, %v3532
      %3534 = vmatmul.bf16.gmra.mxu0 %v3462
      %v3535 = vpop.f32.mrf.mxu0
      %v3536 = vadd.f32 0.0, %v3535
      %v3537 = vpop.f32.mrf.mxu0
      %v3538 = vadd.f32 0.0, %v3537
      %3539 = vmatmul.bf16.gmra.mxu0 %v3463
      %v3540 = vpop.f32.mrf.mxu0
      %v3541 = vadd.f32 0.0, %v3540
      %v3542 = vpop.f32.mrf.mxu0
      %v3543 = vadd.f32 0.0, %v3542
      %3544 = vdwg.mxu0
      %v3545 = vadd.f32 %v3410, %v3526
      %v3546 = vadd.f32 %v3411, %v3528
      %v3547 = vadd.f32 %v3412, %v3531
      %v3548 = vadd.f32 %v3413, %v3533
      %v3549 = vadd.f32 %v3414, %v3536
      %v3550 = vadd.f32 %v3415, %v3538
      %v3551 = vadd.f32 %v3416, %v3541
      %v3552 = vadd.f32 %v3417, %v3543
      %v3553 = vld [vmem:[%s3418] sm:$0xf]
      %v3554 = vld [vmem:[%s3418 + $0x4] sm:$0x1]
      %v3555 = vld [vmem:[%s3418 + $0x8] sm:$0xf]
      %v3556 = vld [vmem:[%s3418 + $0xc] sm:$0x1]
      %v3557 = vld [vmem:[%s3418 + $0x10] sm:$0xf]
      %v3558 = vld [vmem:[%s3418 + $0x14] sm:$0x1]
      %v3559 = vld [vmem:[%s3418 + $0x18] sm:$0xf]
      %v3560 = vld [vmem:[%s3418 + $0x1c] sm:$0x1]
      %v3561 = vld [vmem:[%s3418 + $0x20] sm:$0xf]
      %v3562 = vld [vmem:[%s3418 + $0x24] sm:$0x1]
      %v3563 = vld [vmem:[%s3418 + $0x28] sm:$0xf]
      %v3564 = vld [vmem:[%s3418 + $0x2c] sm:$0x1]
      %v3565 = vld [vmem:[%s3418 + $0x30] sm:$0xf]
      %v3566 = vld [vmem:[%s3418 + $0x34] sm:$0x1]
      %v3567 = vld [vmem:[%s3418 + $0x38] sm:$0xf]
      %v3568 = vld [vmem:[%s3418 + $0x3c] sm:$0x1]
      %v3570 = vshrl.u32 %v3553, 16
      %v3572 = vrot.slane %v3570, 4
      %v3573 = vshll.u32 %v3553, 16
      %v3575 = vrot.slane %v3573, 5
      %v3576 = vor.u32 %v3572, %v3575
      %v3577 = vrot.slane %v3576, 4
      %v3579 = vshll.u32 %v3554, 16
      %v3581 = vrot.slane %v3579, 5
      %v3582 = vsel %vm568, %v3577, %v3581
      %v3584 = vshrl.u32 %v3555, 16
      %v3586 = vrot.slane %v3584, 4
      %v3587 = vshll.u32 %v3555, 16
      %v3589 = vrot.slane %v3587, 5
      %v3590 = vor.u32 %v3586, %v3589
      %v3591 = vrot.slane %v3590, 4
      %v3593 = vshll.u32 %v3556, 16
      %v3595 = vrot.slane %v3593, 5
      %v3596 = vsel %vm568, %v3591, %v3595
      %v3598 = vshrl.u32 %v3557, 16
      %v3600 = vrot.slane %v3598, 4
      %v3601 = vshll.u32 %v3557, 16
      %v3603 = vrot.slane %v3601, 5
      %v3604 = vor.u32 %v3600, %v3603
      %v3605 = vrot.slane %v3604, 4
      %v3607 = vshll.u32 %v3558, 16
      %v3609 = vrot.slane %v3607, 5
      %v3610 = vsel %vm568, %v3605, %v3609
      %v3612 = vshrl.u32 %v3559, 16
      %v3614 = vrot.slane %v3612, 4
      %v3615 = vshll.u32 %v3559, 16
      %v3617 = vrot.slane %v3615, 5
      %v3618 = vor.u32 %v3614, %v3617
      %v3619 = vrot.slane %v3618, 4
      %v3621 = vshll.u32 %v3560, 16
      %v3623 = vrot.slane %v3621, 5
      %v3624 = vsel %vm568, %v3619, %v3623
      %v3626 = vshrl.u32 %v3561, 16
      %v3628 = vrot.slane %v3626, 4
      %v3629 = vshll.u32 %v3561, 16
      %v3631 = vrot.slane %v3629, 5
      %v3632 = vor.u32 %v3628, %v3631
      %v3633 = vrot.slane %v3632, 4
      %v3635 = vshll.u32 %v3562, 16
      %v3637 = vrot.slane %v3635, 5
      %v3638 = vsel %vm568, %v3633, %v3637
      %v3640 = vshrl.u32 %v3563, 16
      %v3642 = vrot.slane %v3640, 4
      %v3643 = vshll.u32 %v3563, 16
      %v3645 = vrot.slane %v3643, 5
      %v3646 = vor.u32 %v3642, %v3645
      %v3647 = vrot.slane %v3646, 4
      %v3649 = vshll.u32 %v3564, 16
      %v3651 = vrot.slane %v3649, 5
      %v3652 = vsel %vm568, %v3647, %v3651
      %v3654 = vshrl.u32 %v3565, 16
      %v3656 = vrot.slane %v3654, 4
      %v3657 = vshll.u32 %v3565, 16
      %v3659 = vrot.slane %v3657, 5
      %v3660 = vor.u32 %v3656, %v3659
      %v3661 = vrot.slane %v3660, 4
      %v3663 = vshll.u32 %v3566, 16
      %v3665 = vrot.slane %v3663, 5
      %v3666 = vsel %vm568, %v3661, %v3665
      %v3668 = vshrl.u32 %v3567, 16
      %v3670 = vrot.slane %v3668, 4
      %v3671 = vshll.u32 %v3567, 16
      %v3673 = vrot.slane %v3671, 5
      %v3674 = vor.u32 %v3670, %v3673
      %v3675 = vrot.slane %v3674, 4
      %v3677 = vshll.u32 %v3568, 16
      %v3679 = vrot.slane %v3677, 5
      %v3680 = vsel %vm568, %v3675, %v3679
      %s3681 = scalar_lea.vmem %s3, 448
      %v3682 = vld [vmem:[%s3681] sm:$0xf]
      %v3683 = vld [vmem:[%s3681 + $0x4] sm:$0xf]
      %v3684 = vld [vmem:[%s3681 + $0x8] sm:$0xf]
      %v3685 = vld [vmem:[%s3681 + $0xc] sm:$0xf]
      %v3686 = vld [vmem:[%s3681 + $0x10] sm:$0xf]
      %v3687 = vld [vmem:[%s3681 + $0x14] sm:$0xf]
      %v3688 = vld [vmem:[%s3681 + $0x18] sm:$0xf]
      %v3689 = vld [vmem:[%s3681 + $0x1c] sm:$0xf]
      %v3690 = vld [vmem:[%s3681 + $0x20] sm:$0xf]
      %v3691 = vld [vmem:[%s3681 + $0x24] sm:$0xf]
      %v3692 = vld [vmem:[%s3681 + $0x28] sm:$0xf]
      %v3693 = vld [vmem:[%s3681 + $0x2c] sm:$0xf]
      %v3694 = vld [vmem:[%s3681 + $0x30] sm:$0xf]
      %v3695 = vld [vmem:[%s3681 + $0x34] sm:$0xf]
      %v3696 = vld [vmem:[%s3681 + $0x38] sm:$0xf]
      %v3697 = vld [vmem:[%s3681 + $0x3c] sm:$0xf]
      %v3698 = vunpack.c.l.b16 %v3582
      %v3699 = vunpack.c.l.b16 %v3596
      %v3700 = vunpack.c.l.b16 %v3610
      %v3701 = vunpack.c.l.b16 %v3624
      %v3702 = vunpack.c.l.b16 %v3638
      %v3703 = vunpack.c.l.b16 %v3652
      %v3704 = vunpack.c.l.b16 %v3666
      %v3705 = vunpack.c.l.b16 %v3680
      %v3706 = vpack.c.b16 %v3699, %v3698
      %v3707 = vpack.c.b16 %v3701, %v3700
      %v3708 = vpack.c.b16 %v3703, %v3702
      %v3709 = vpack.c.b16 %v3705, %v3704
      %v3730 = vunpack.c.l.b16 %v3682
      %v3731 = vunpack.c.l.b16 %v3683
      %v3732 = vunpack.c.l.b16 %v3684
      %v3733 = vunpack.c.l.b16 %v3685
      %v3734 = vunpack.c.l.b16 %v3686
      %v3735 = vunpack.c.l.b16 %v3687
      %v3736 = vunpack.c.l.b16 %v3688
      %v3737 = vunpack.c.l.b16 %v3689
      %v3738 = vunpack.c.l.b16 %v3690
      %v3739 = vunpack.c.l.b16 %v3691
      %v3740 = vunpack.c.l.b16 %v3692
      %v3741 = vunpack.c.l.b16 %v3693
      %v3742 = vunpack.c.l.b16 %v3694
      %v3743 = vunpack.c.l.b16 %v3695
      %v3744 = vunpack.c.l.b16 %v3696
      %v3745 = vunpack.c.l.b16 %v3697
      %v3746 = vpack.c.b16 %v3731, %v3730
      %v3747 = vpack.c.b16 %v3733, %v3732
      %v3748 = vpack.c.b16 %v3735, %v3734
      %v3749 = vpack.c.b16 %v3737, %v3736
      %v3750 = vpack.c.b16 %v3739, %v3738
      %v3751 = vpack.c.b16 %v3741, %v3740
      %v3752 = vpack.c.b16 %v3743, %v3742
      %v3753 = vpack.c.b16 %v3745, %v3744
      %3762 = vmatpush.bf16.msra.mxu0 %v3753
      %3763 = vmatpush.bf16.msra.mxu0 %v3752
      %3764 = vmatpush.bf16.msra.mxu0 %v3751
      %3765 = vmatpush.bf16.msra.mxu0 %v3750
      %3766 = vmatpush.bf16.msra.mxu0 %v3749
      %3767 = vmatpush.bf16.msra.mxu0 %v3748
      %3768 = vmatpush.bf16.msra.mxu0 %v3747
      %3769 = vmatpush.bf16.msra.mxu0 %v3746
      %3770 = vmatmul.bf16.gmra.mxu0 %v3706
      %v3771 = vpop.f32.mrf.mxu0
      %v3772 = vadd.f32 0.0, %v3771
      %v3773 = vpop.f32.mrf.mxu0
      %v3774 = vadd.f32 0.0, %v3773
      %3775 = vmatmul.bf16.gmra.mxu0 %v3707
      %v3776 = vpop.f32.mrf.mxu0
      %v3777 = vadd.f32 0.0, %v3776
      %v3778 = vpop.f32.mrf.mxu0
      %v3779 = vadd.f32 0.0, %v3778
      %3780 = vmatmul.bf16.gmra.mxu0 %v3708
      %v3781 = vpop.f32.mrf.mxu0
      %v3782 = vadd.f32 0.0, %v3781
      %v3783 = vpop.f32.mrf.mxu0
      %v3784 = vadd.f32 0.0, %v3783
      %3785 = vmatmul.bf16.gmra.mxu0 %v3709
      %v3786 = vpop.f32.mrf.mxu0
      %v3787 = vadd.f32 0.0, %v3786
      %v3788 = vpop.f32.mrf.mxu0
      %v3789 = vadd.f32 0.0, %v3788
      %3790 = vdwg.mxu0
      %v3791 = vadd.f32 %v3545, %v3772
      %v3792 = vadd.f32 %v3546, %v3774
      %v3793 = vadd.f32 %v3547, %v3777
      %v3794 = vadd.f32 %v3548, %v3779
      %v3795 = vadd.f32 %v3549, %v3782
      %v3796 = vadd.f32 %v3550, %v3784
      %v3797 = vadd.f32 %v3551, %v3787
      %v3798 = vadd.f32 %v3552, %v3789
      %v3799 = vld [vmem:[%s3418] sm:$0xe]
      %v3800 = vld [vmem:[%s3418 + $0x8] sm:$0xe]
      %v3801 = vld [vmem:[%s3418 + $0x10] sm:$0xe]
      %v3802 = vld [vmem:[%s3418 + $0x18] sm:$0xe]
      %v3803 = vld [vmem:[%s3418 + $0x20] sm:$0xe]
      %v3804 = vld [vmem:[%s3418 + $0x28] sm:$0xe]
      %v3805 = vld [vmem:[%s3418 + $0x30] sm:$0xe]
      %v3806 = vld [vmem:[%s3418 + $0x38] sm:$0xe]
      %v3823 = vrot.slane %v3799, 5
      %v3824 = vrot.slane %v3823, 4
      %v3825 = vrot.slane %v3554, 5
      %v3826 = vsel %vm918, %v3824, %v3825
      %v3827 = vrot.slane %v3800, 5
      %v3828 = vrot.slane %v3827, 4
      %v3829 = vrot.slane %v3556, 5
      %v3830 = vsel %vm918, %v3828, %v3829
      %v3831 = vrot.slane %v3801, 5
      %v3832 = vrot.slane %v3831, 4
      %v3833 = vrot.slane %v3558, 5
      %v3834 = vsel %vm918, %v3832, %v3833
      %v3835 = vrot.slane %v3802, 5
      %v3836 = vrot.slane %v3835, 4
      %v3837 = vrot.slane %v3560, 5
      %v3838 = vsel %vm918, %v3836, %v3837
      %v3839 = vrot.slane %v3803, 5
      %v3840 = vrot.slane %v3839, 4
      %v3841 = vrot.slane %v3562, 5
      %v3842 = vsel %vm918, %v3840, %v3841
      %v3843 = vrot.slane %v3804, 5
      %v3844 = vrot.slane %v3843, 4
      %v3845 = vrot.slane %v3564, 5
      %v3846 = vsel %vm918, %v3844, %v3845
      %v3847 = vrot.slane %v3805, 5
      %v3848 = vrot.slane %v3847, 4
      %v3849 = vrot.slane %v3566, 5
      %v3850 = vsel %vm918, %v3848, %v3849
      %v3851 = vrot.slane %v3806, 5
      %v3852 = vrot.slane %v3851, 4
      %v3853 = vrot.slane %v3568, 5
      %v3854 = vsel %vm918, %v3852, %v3853
      %s3855 = scalar_lea.vmem %s3, 512
      %v3856 = vld [vmem:[%s3855] sm:$0xf]
      %v3857 = vld [vmem:[%s3855 + $0x4] sm:$0xf]
      %v3858 = vld [vmem:[%s3855 + $0x8] sm:$0xf]
      %v3859 = vld [vmem:[%s3855 + $0xc] sm:$0xf]
      %v3860 = vld [vmem:[%s3855 + $0x10] sm:$0xf]
      %v3861 = vld [vmem:[%s3855 + $0x14] sm:$0xf]
      %v3862 = vld [vmem:[%s3855 + $0x18] sm:$0xf]
      %v3863 = vld [vmem:[%s3855 + $0x1c] sm:$0xf]
      %v3864 = vld [vmem:[%s3855 + $0x20] sm:$0xf]
      %v3865 = vld [vmem:[%s3855 + $0x24] sm:$0xf]
      %v3866 = vld [vmem:[%s3855 + $0x28] sm:$0xf]
      %v3867 = vld [vmem:[%s3855 + $0x2c] sm:$0xf]
      %v3868 = vld [vmem:[%s3855 + $0x30] sm:$0xf]
      %v3869 = vld [vmem:[%s3855 + $0x34] sm:$0xf]
      %v3870 = vld [vmem:[%s3855 + $0x38] sm:$0xf]
      %v3871 = vld [vmem:[%s3855 + $0x3c] sm:$0xf]
      %v3872 = vunpack.c.l.b16 %v3826
      %v3873 = vunpack.c.l.b16 %v3830
      %v3874 = vunpack.c.l.b16 %v3834
      %v3875 = vunpack.c.l.b16 %v3838
      %v3876 = vunpack.c.l.b16 %v3842
      %v3877 = vunpack.c.l.b16 %v3846
      %v3878 = vunpack.c.l.b16 %v3850
      %v3879 = vunpack.c.l.b16 %v3854
      %v3880 = vpack.c.b16 %v3873, %v3872
      %v3881 = vpack.c.b16 %v3875, %v3874
      %v3882 = vpack.c.b16 %v3877, %v3876
      %v3883 = vpack.c.b16 %v3879, %v3878
      %v3904 = vunpack.c.l.b16 %v3856
      %v3905 = vunpack.c.l.b16 %v3857
      %v3906 = vunpack.c.l.b16 %v3858
      %v3907 = vunpack.c.l.b16 %v3859
      %v3908 = vunpack.c.l.b16 %v3860
      %v3909 = vunpack.c.l.b16 %v3861
      %v3910 = vunpack.c.l.b16 %v3862
      %v3911 = vunpack.c.l.b16 %v3863
      %v3912 = vunpack.c.l.b16 %v3864
      %v3913 = vunpack.c.l.b16 %v3865
      %v3914 = vunpack.c.l.b16 %v3866
      %v3915 = vunpack.c.l.b16 %v3867
      %v3916 = vunpack.c.l.b16 %v3868
      %v3917 = vunpack.c.l.b16 %v3869
      %v3918 = vunpack.c.l.b16 %v3870
      %v3919 = vunpack.c.l.b16 %v3871
      %v3920 = vpack.c.b16 %v3905, %v3904
      %v3921 = vpack.c.b16 %v3907, %v3906
      %v3922 = vpack.c.b16 %v3909, %v3908
      %v3923 = vpack.c.b16 %v3911, %v3910
      %v3924 = vpack.c.b16 %v3913, %v3912
      %v3925 = vpack.c.b16 %v3915, %v3914
      %v3926 = vpack.c.b16 %v3917, %v3916
      %v3927 = vpack.c.b16 %v3919, %v3918
      %3936 = vmatpush.bf16.msra.mxu0 %v3927
      %3937 = vmatpush.bf16.msra.mxu0 %v3926
      %3938 = vmatpush.bf16.msra.mxu0 %v3925
      %3939 = vmatpush.bf16.msra.mxu0 %v3924
      %3940 = vmatpush.bf16.msra.mxu0 %v3923
      %3941 = vmatpush.bf16.msra.mxu0 %v3922
      %3942 = vmatpush.bf16.msra.mxu0 %v3921
      %3943 = vmatpush.bf16.msra.mxu0 %v3920
      %3944 = vmatmul.bf16.gmra.mxu0 %v3880
      %v3945 = vpop.f32.mrf.mxu0
      %v3946 = vadd.f32 0.0, %v3945
      %v3947 = vpop.f32.mrf.mxu0
      %v3948 = vadd.f32 0.0, %v3947
      %3949 = vmatmul.bf16.gmra.mxu0 %v3881
      %v3950 = vpop.f32.mrf.mxu0
      %v3951 = vadd.f32 0.0, %v3950
      %v3952 = vpop.f32.mrf.mxu0
      %v3953 = vadd.f32 0.0, %v3952
      %3954 = vmatmul.bf16.gmra.mxu0 %v3882
      %v3955 = vpop.f32.mrf.mxu0
      %v3956 = vadd.f32 0.0, %v3955
      %v3957 = vpop.f32.mrf.mxu0
      %v3958 = vadd.f32 0.0, %v3957
      %3959 = vmatmul.bf16.gmra.mxu0 %v3883
      %v3960 = vpop.f32.mrf.mxu0
      %v3961 = vadd.f32 0.0, %v3960
      %v3962 = vpop.f32.mrf.mxu0
      %v3963 = vadd.f32 0.0, %v3962
      %3964 = vdwg.mxu0
      %v3965 = vadd.f32 %v3791, %v3946
      %v3966 = vadd.f32 %v3792, %v3948
      %v3967 = vadd.f32 %v3793, %v3951
      %v3968 = vadd.f32 %v3794, %v3953
      %v3969 = vadd.f32 %v3795, %v3956
      %v3970 = vadd.f32 %v3796, %v3958
      %v3971 = vadd.f32 %v3797, %v3961
      %v3972 = vadd.f32 %v3798, %v3963
      %v3973 = vld [vmem:[%s4] sm:$0x1]
      %v3975 = vperm.slane %v3973, 0
      %v3977 = vadd.f32 %v3965, %v3975
      %v3978 = vadd.f32 %v3966, %v3975
      %v3979 = vadd.f32 %v3967, %v3975
      %v3980 = vadd.f32 %v3968, %v3975
      %v3981 = vadd.f32 %v3969, %v3975
      %v3982 = vadd.f32 %v3970, %v3975
      %v3983 = vadd.f32 %v3971, %v3975
      %v3984 = vadd.f32 %v3972, %v3975
      %v3985 = vmax.f32 %v3977, 0.0
      %v3986 = vmax.f32 %v3978, 0.0
      %v3987 = vmax.f32 %v3979, 0.0
      %v3988 = vmax.f32 %v3980, 0.0
      %v3989 = vmax.f32 %v3981, 0.0
      %v3990 = vmax.f32 %v3982, 0.0
      %v3991 = vmax.f32 %v3983, 0.0
      %v3992 = vmax.f32 %v3984, 0.0
      %v3993 = vpack.c.bf16 %v3985, %v3985
      %v3994 = vpack.c.bf16 %v3986, %v3986
      %v3995 = vpack.c.bf16 %v3987, %v3987
      %v3996 = vpack.c.bf16 %v3988, %v3988
      %v3997 = vpack.c.bf16 %v3989, %v3989
      %v3998 = vpack.c.bf16 %v3990, %v3990
      %v3999 = vpack.c.bf16 %v3991, %v3991
      %v4000 = vpack.c.bf16 %v3992, %v3992
      %4001 = vst [vmem:[%s224] sm:$0xf] %v3993
      %4002 = vst [vmem:[%s224 + $0x4] sm:$0xf] %v3994
      %4003 = vst [vmem:[%s224 + $0x8] sm:$0xf] %v3995
      %4004 = vst [vmem:[%s224 + $0xc] sm:$0xf] %v3996
      %4005 = vst [vmem:[%s224 + $0x10] sm:$0xf] %v3997
      %4006 = vst [vmem:[%s224 + $0x14] sm:$0xf] %v3998
      %4007 = vst [vmem:[%s224 + $0x18] sm:$0xf] %v3999
      %4008 = vst [vmem:[%s224 + $0x1c] sm:$0xf] %v4000
      %p4009 = scmp.lt.s32.totalorder %s16, 1
      %s4010 = scalar_select %p4009, %s16, 1
      %s4011 = smul.addr %s4010, 8
      %s4012 = smul.addr %s4011, 4
      %s4013 = scalar_lea.vmem %s5, %s4012
      // Predicated region
      $region45: #{down_forward.1} parent=39 // pred_check
        %p4014 = pneg %p144
      $region46: #{down_forward.1} parent=39 // pred_check_branch
        %4016 = sbr.rel (%p4014) target = $region48
      $region47: #{down_forward.1} parent=39 // pred_region
        _
      $region48: #{down_forward.1} parent=39 // pred_fallthru
        _
    $region40: #{down_forward.1} parent=5 // pred_fallthru
      _
    %p4017 = scmp.le.s32.totalorder 2, %s11
    // Predicated region
    $region49: #{down_forward.1} parent=5 // pred_check
      %p4018 = pneg %p4017
    $region50: #{down_forward.1} parent=5 // pred_check_branch
      %4020 = sbr.rel (%p4018) target = $region52
    $region51: #{down_forward.1} parent=5 // pred_region
      %s4021 = ssub.s32 %s11, 2
      // Predicated region
      $region53: #{down_forward.1} parent=51 // pred_check
        %p4022 = pneg %p150
      $region54: #{down_forward.1} parent=51 // pred_check_branch
        %4024 = sbr.rel (%p4022) target = $region56
      $region55: #{down_forward.1} parent=51 // pred_region
        %p4025 = scmp.lt.s32.totalorder %s17, 1
        %s4026 = scalar_select %p4025, %s17, 1
        %s4027 = smul.addr %s4026, 8
        %s4028 = smul.addr %s4027, 4
        %s4029 = scalar_lea.vmem %s5, %s4028
      $region56: #{down_forward.1} parent=51 // pred_fallthru
        _
    $region52: #{down_forward.1} parent=5 // pred_fallthru
      _
  $region6: #{down_forward.1} parent=0 // loop_footer
    %s15 = sadd.s32 1, %s11
  $region7: #{down_forward.1} parent=0 // loop_footer_branch
    %10 = sbr.rel target = $region3
  $region8: #{down_forward.1} parent=0 // loop_exit
    _

</llo_original>
